<compile_context>
chip_gen: v7x
topology: tpu7x:2x2x1
jax: 0.10.0
libtpu: 0.0.40
codegen_flags: <defaults>
</compile_context>

<pallas_src>
import functools

import jax
import jax.numpy as jnp
from jax import lax
from jax.experimental import pallas as pl
from jax.experimental.pallas import tpu as pltpu

EPS = 1e-5            # PyTorch BatchNorm1d default eps
SE_BOTTLENECK = 128   # SEModule default bottleneck


def _bn_train(h, gamma, beta):
    """BatchNorm1d (training mode), fused: one stats pass + one FMA apply pass."""
    mu = jnp.mean(h, axis=0, keepdims=True)
    ex2 = jnp.mean(h * h, axis=0, keepdims=True)
    var = ex2 - mu * mu                                # biased batch variance
    scl = gamma * lax.rsqrt(var + EPS)                 # rsqrt -> EUP slot
    return h * scl + (beta - mu * scl)


def _shift_time(u, sh):
    """y[:, t, :] = u[:, t + sh, :] with zero fill outside [0, T).  `sh` is a static
    python int, so this lowers to a static slice + sublane concatenate with zeros."""
    B, T, w = u.shape
    if sh == 0:
        return u
    if sh > 0:
        z = jnp.zeros((B, sh, w), u.dtype)
        return jnp.concatenate([u[:, sh:T, :], z], axis=1)
    z = jnp.zeros((B, -sh, w), u.dtype)
    return jnp.concatenate([z, u[:, 0:T + sh, :]], axis=1)


def _forward_math(x, w1, b1, g1, be1, wc, bc, gc, bec,
                  w3, b3, g3, be3, ws1, bs1, ws2, bs2,
                  *, width, scale, dilation, kernel_size):
    """Full Bottle2neck forward in (B, T, C) layout.  Used both inside the Pallas
    kernel and as the plain-XLA reference (purely functional)."""
    B, T, C = x.shape
    WS = width * scale
    nums = scale - 1
    d = dilation
    half = kernel_size // 2
    BT = B * T
    cdt = w1.dtype                      # MXU operand dtype (bfloat16); accum is f32
    planes = w3.shape[1]

    # conv1 (1x1) -> bn1 -> relu
    h = jnp.dot(x.reshape(BT, C).astype(cdt), w1,
                preferred_element_type=jnp.float32) + b1
    h = jnp.maximum(_bn_train(h, g1, be1), 0.0)
    h3 = h.reshape(B, T, WS)

    # Res2Net branch loop with incremental conv3 accumulation (no output concat).
    o_acc = jnp.zeros((BT, planes), jnp.float32)
    sp = None
    for i in range(nums):
        spx_i = h3[:, :, i * width:(i + 1) * width]
        sp = spx_i if i == 0 else sp + spx_i
        # dilated K-tap conv: ONE matmul (BT,w)@(w,K*w), then K static time-shifted adds
        u = jnp.dot(sp.reshape(BT, width).astype(cdt), wc[i],
                    preferred_element_type=jnp.float32)
        u = u.reshape(B, T, kernel_size * width)
        y3 = jnp.zeros((B, T, width), jnp.float32)
        for k in range(kernel_size):
            y3 = y3 + _shift_time(u[:, :, k * width:(k + 1) * width],
                                  (k - half) * d)
        y = y3.reshape(BT, width) + bc[i:i + 1, :]
        y = jnp.maximum(y, 0.0)                       # relu BEFORE bn (as in reference)
        y = _bn_train(y, gc[i:i + 1, :], bec[i:i + 1, :])
        # incremental conv3: this branch's slab of the (WS, planes) weight
        o_acc = o_acc + jnp.dot(y.astype(cdt), w3[i * width:(i + 1) * width, :],
                                preferred_element_type=jnp.float32)
        sp = y.reshape(B, T, width)
    # last split passed through unchanged, contributes the final weight slab
    last = h3[:, :, nums * width:WS].reshape(BT, width)
    o_acc = o_acc + jnp.dot(last.astype(cdt), w3[nums * width:WS, :],
                            preferred_element_type=jnp.float32)

    # conv3 bias -> relu -> bn3
    o = jnp.maximum(o_acc + b3, 0.0)
    o = _bn_train(o, g3, be3)
    o3 = o.reshape(B, T, planes)

    # SE module: avg-pool over time -> 1x1 conv -> relu -> 1x1 conv -> sigmoid -> scale
    s = jnp.mean(o3, axis=1)                          # (B, planes)
    s1 = jnp.maximum(jnp.dot(s.astype(cdt), ws1,
                             preferred_element_type=jnp.float32) + bs1, 0.0)
    s2 = jax.nn.sigmoid(jnp.dot(s1.astype(cdt), ws2,
                                preferred_element_type=jnp.float32) + bs2)
    o3 = o3 * s2[:, None, :]

    return o3 + x                                     # residual add


def bottle2neck_kernel(x_ref, w1_ref, b1_ref, g1_ref, be1_ref,
                       wc_ref, bc_ref, gc_ref, bec_ref,
                       w3_ref, b3_ref, g3_ref, be3_ref,
                       ws1_ref, bs1_ref, ws2_ref, bs2_ref,
                       out_ref, *, width, scale, dilation, kernel_size):
    out_ref[...] = _forward_math(
        x_ref[...], w1_ref[...], b1_ref[...], g1_ref[...], be1_ref[...],
        wc_ref[...], bc_ref[...], gc_ref[...], bec_ref[...],
        w3_ref[...], b3_ref[...], g3_ref[...], be3_ref[...],
        ws1_ref[...], bs1_ref[...], ws2_ref[...], bs2_ref[...],
        width=width, scale=scale, dilation=dilation, kernel_size=kernel_size)


def bottle2neck_forward(x_nct, params, *, width, scale, dilation, kernel_size):
    """Single-invocation kernel (no grid): training-mode BN batch statistics couple
    the whole (batch, time) slab, so all activations + weights stay VMEM-resident."""
    # TODO(synk): at real ECAPA shapes keep the surrounding model channels-last (BTC)
    # so these two wrapper transposes (extra HBM round-trips) disappear entirely.
    x_btc = jnp.transpose(x_nct, (0, 2, 1)).astype(jnp.float32)
    B, T, C = x_btc.shape
    kern = functools.partial(bottle2neck_kernel, width=width, scale=scale,
                             dilation=dilation, kernel_size=kernel_size)
    n_in = 1 + len(params)
    out = pl.pallas_call(
        kern,
        out_shape=jax.ShapeDtypeStruct((B, T, C), jnp.float32),
        in_specs=[pl.BlockSpec(memory_space=pltpu.MemorySpace.VMEM)] * n_in,
        out_specs=pl.BlockSpec(memory_space=pltpu.MemorySpace.VMEM),
        compiler_params=pltpu.CompilerParams(vmem_limit_bytes=48 * 1024 * 1024),
    )(x_btc, *params)
    return jnp.transpose(out, (0, 2, 1))


def init_params(key, inplanes, planes, kernel_size, dilation, scale):
    """Deterministic synthetic parameters with the same logical shapes as the PyTorch
    module.  BN gammas=1 / betas=0 (PyTorch init); conv weights ~ N(0, 0.2^2).
    Branch conv weights are stacked per branch as (nums, width, kernel_size*width)
    with tap order [t-d, t, t+d] along the output axis, so each branch conv is one
    matmul followed by shifted adds."""
    assert kernel_size % 2 == 1, "only odd kernel_size gives 'same' output length"
    width = planes // scale
    WS = width * scale
    nums = scale - 1
    ks = list(jax.random.split(key, 10))

    def nrm(k, shape, s=0.2):
        return s * jax.random.normal(k, shape, jnp.float32)

    w1 = nrm(ks[0], (inplanes, WS))                  # conv1: Cin -> width*scale (1x1)
    b1 = nrm(ks[1], (1, WS))
    g1 = jnp.ones((1, WS), jnp.float32)
    be1 = jnp.zeros((1, WS), jnp.float32)

    wc = nrm(ks[2], (nums, width, kernel_size * width))   # tap-stacked dilated convs
    bc = nrm(ks[3], (nums, width))
    gc = jnp.ones((nums, width), jnp.float32)
    bec = jnp.zeros((nums, width), jnp.float32)

    w3 = nrm(ks[4], (WS, planes))                    # conv3: width*scale -> planes (1x1)
    b3 = nrm(ks[5], (1, planes))
    g3 = jnp.ones((1, planes), jnp.float32)
    be3 = jnp.zeros((1, planes), jnp.float32)

    ws1 = nrm(ks[6], (planes, SE_BOTTLENECK))        # SE: planes -> 128
    bs1 = nrm(ks[7], (1, SE_BOTTLENECK))
    ws2 = nrm(ks[8], (SE_BOTTLENECK, planes))        # SE: 128 -> planes
    bs2 = nrm(ks[9], (1, planes))

    return (w1, b1, g1, be1, wc, bc, gc, bec, w3, b3, g3, be3,
            ws1, bs1, ws2, bs2)


def cast_matmul_weights(params):
    """Cast MXU-operand weights to bfloat16 (f32 accumulation stays in the dots);
    biases and BN affine parameters remain f32."""
    (w1, b1, g1, be1, wc, bc, gc, bec, w3, b3, g3, be3, ws1, bs1, ws2, bs2) = params
    bf = lambda a: a.astype(jnp.bfloat16)
    return (bf(w1), b1, g1, be1, bf(wc), bc, gc, bec, bf(w3), b3, g3, be3,
            bf(ws1), bs1, bf(ws2), bs2)


if __name__ == "__main__":
    # Small shapes consistent with the module: (batch, channels, time) NCT like PyTorch.
    B, C, T = 2, 32, 16
    kernel_size, dilation, scale = 3, 2, 8         # module defaults
    width = C // scale                             # inplanes == planes == C (residual add)

    key = jax.random.PRNGKey(0)
    kx, kp = jax.random.split(key)
    x = jax.random.normal(kx, (B, C, T), jnp.float32)
    params = cast_matmul_weights(
        init_params(kp, C, C, kernel_size, dilation, scale))

    out = bottle2neck_forward(x, params, width=width, scale=scale,
                              dilation=dilation, kernel_size=kernel_size)
    out = jax.block_until_ready(out)

    # sanity check against the same math run as plain XLA (same bf16 weights)
    x_btc = jnp.transpose(x, (0, 2, 1))
    ref = jnp.transpose(
        _forward_math(x_btc, *params, width=width, scale=scale,
                      dilation=dilation, kernel_size=kernel_size),
        (0, 2, 1))
    ref = jax.block_until_ready(ref)
    assert out.shape == (B, C, T)
    max_err = float(jnp.max(jnp.abs(out - ref)))
    assert max_err < 5e-3, f"mismatch vs reference: {max_err}"
    print("KERNEL_OK")
</pallas_src>

<mosaic_0001>
module attributes {stable_mosaic.version = 11 : i64} {
  func.func @bottle2neck_kernel(%arg0: memref<2x16x32xf32, #tpu.memory_space<vmem>>, %arg1: memref<32x32xbf16, #tpu.memory_space<vmem>>, %arg2: memref<1x32xf32, #tpu.memory_space<vmem>>, %arg3: memref<1x32xf32, #tpu.memory_space<vmem>>, %arg4: memref<1x32xf32, #tpu.memory_space<vmem>>, %arg5: memref<7x4x12xbf16, #tpu.memory_space<vmem>>, %arg6: memref<7x4xf32, #tpu.memory_space<vmem>>, %arg7: memref<7x4xf32, #tpu.memory_space<vmem>>, %arg8: memref<7x4xf32, #tpu.memory_space<vmem>>, %arg9: memref<32x32xbf16, #tpu.memory_space<vmem>>, %arg10: memref<1x32xf32, #tpu.memory_space<vmem>>, %arg11: memref<1x32xf32, #tpu.memory_space<vmem>>, %arg12: memref<1x32xf32, #tpu.memory_space<vmem>>, %arg13: memref<32x128xbf16, #tpu.memory_space<vmem>>, %arg14: memref<1x128xf32, #tpu.memory_space<vmem>>, %arg15: memref<128x32xbf16, #tpu.memory_space<vmem>>, %arg16: memref<1x32xf32, #tpu.memory_space<vmem>>, %arg17: memref<2x16x32xf32, #tpu.memory_space<vmem>>) attributes {dimension_semantics = [], scalar_prefetch = 0 : i64, scratch_operands = 0 : i64, tpu.core_type = #tpu.core_type<tc>} {
    %c0 = arith.constant 0 : index
    %c0_0 = arith.constant 0 : index
    %c0_1 = arith.constant 0 : index
    %0 = vector.load %arg0[%c0, %c0_0, %c0_1] : memref<2x16x32xf32, #tpu.memory_space<vmem>>, vector<2x16x32xf32>
    %c0_2 = arith.constant 0 : index
    %c0_3 = arith.constant 0 : index
    %1 = vector.load %arg1[%c0_2, %c0_3] : memref<32x32xbf16, #tpu.memory_space<vmem>>, vector<32x32xbf16>
    %c0_4 = arith.constant 0 : index
    %c0_5 = arith.constant 0 : index
    %2 = vector.load %arg2[%c0_4, %c0_5] : memref<1x32xf32, #tpu.memory_space<vmem>>, vector<1x32xf32>
    %c0_6 = arith.constant 0 : index
    %c0_7 = arith.constant 0 : index
    %3 = vector.load %arg3[%c0_6, %c0_7] : memref<1x32xf32, #tpu.memory_space<vmem>>, vector<1x32xf32>
    %c0_8 = arith.constant 0 : index
    %c0_9 = arith.constant 0 : index
    %4 = vector.load %arg4[%c0_8, %c0_9] : memref<1x32xf32, #tpu.memory_space<vmem>>, vector<1x32xf32>
    %c0_10 = arith.constant 0 : index
    %c0_11 = arith.constant 0 : index
    %c0_12 = arith.constant 0 : index
    %5 = vector.load %arg5[%c0_10, %c0_11, %c0_12] : memref<7x4x12xbf16, #tpu.memory_space<vmem>>, vector<7x4x12xbf16>
    %c0_13 = arith.constant 0 : index
    %c0_14 = arith.constant 0 : index
    %6 = vector.load %arg6[%c0_13, %c0_14] : memref<7x4xf32, #tpu.memory_space<vmem>>, vector<7x4xf32>
    %c0_15 = arith.constant 0 : index
    %c0_16 = arith.constant 0 : index
    %7 = vector.load %arg7[%c0_15, %c0_16] : memref<7x4xf32, #tpu.memory_space<vmem>>, vector<7x4xf32>
    %c0_17 = arith.constant 0 : index
    %c0_18 = arith.constant 0 : index
    %8 = vector.load %arg8[%c0_17, %c0_18] : memref<7x4xf32, #tpu.memory_space<vmem>>, vector<7x4xf32>
    %c0_19 = arith.constant 0 : index
    %c0_20 = arith.constant 0 : index
    %9 = vector.load %arg9[%c0_19, %c0_20] : memref<32x32xbf16, #tpu.memory_space<vmem>>, vector<32x32xbf16>
    %c0_21 = arith.constant 0 : index
    %c0_22 = arith.constant 0 : index
    %10 = vector.load %arg10[%c0_21, %c0_22] : memref<1x32xf32, #tpu.memory_space<vmem>>, vector<1x32xf32>
    %c0_23 = arith.constant 0 : index
    %c0_24 = arith.constant 0 : index
    %11 = vector.load %arg11[%c0_23, %c0_24] : memref<1x32xf32, #tpu.memory_space<vmem>>, vector<1x32xf32>
    %c0_25 = arith.constant 0 : index
    %c0_26 = arith.constant 0 : index
    %12 = vector.load %arg12[%c0_25, %c0_26] : memref<1x32xf32, #tpu.memory_space<vmem>>, vector<1x32xf32>
    %c0_27 = arith.constant 0 : index
    %c0_28 = arith.constant 0 : index
    %13 = vector.load %arg13[%c0_27, %c0_28] : memref<32x128xbf16, #tpu.memory_space<vmem>>, vector<32x128xbf16>
    %c0_29 = arith.constant 0 : index
    %c0_30 = arith.constant 0 : index
    %14 = vector.load %arg14[%c0_29, %c0_30] : memref<1x128xf32, #tpu.memory_space<vmem>>, vector<1x128xf32>
    %c0_31 = arith.constant 0 : index
    %c0_32 = arith.constant 0 : index
    %15 = vector.load %arg15[%c0_31, %c0_32] : memref<128x32xbf16, #tpu.memory_space<vmem>>, vector<128x32xbf16>
    %c0_33 = arith.constant 0 : index
    %c0_34 = arith.constant 0 : index
    %16 = vector.load %arg16[%c0_33, %c0_34] : memref<1x32xf32, #tpu.memory_space<vmem>>, vector<1x32xf32>
    %17 = vector.shape_cast %0 : vector<2x16x32xf32> to vector<32x32xf32>
    %18 = arith.truncf %17 : vector<32x32xf32> to vector<32x32xbf16>
    %cst = arith.constant dense<0.000000e+00> : vector<32x32xf32>
    %19 = tpu.matmul %18, %1, %cst {dimension_numbers = #tpu.dot_dimension_numbers<[1], [0], [0], [1], [0, 0, 1, 1], [], []>} : vector<32x32xbf16>, vector<32x32xbf16>, vector<32x32xf32> -> vector<32x32xf32>
    %20 = vector.broadcast %2 : vector<1x32xf32> to vector<32x32xf32>
    %21 = arith.addf %19, %20 : vector<32x32xf32>
    %cst_35 = arith.constant dense<0.000000e+00> : vector<32xf32>
    %22 = vector.multi_reduction <add>, %21, %cst_35 [0] : vector<32x32xf32> to vector<32xf32>
    %23 = vector.shape_cast %22 : vector<32xf32> to vector<1x32xf32>
    %cst_36 = arith.constant 3.200000e+01 : f32
    %24 = vector.broadcast %cst_36 : f32 to vector<1x32xf32>
    %25 = arith.divf %23, %24 : vector<1x32xf32>
    %26 = arith.mulf %21, %21 : vector<32x32xf32>
    %cst_37 = arith.constant dense<0.000000e+00> : vector<32xf32>
    %27 = vector.multi_reduction <add>, %26, %cst_37 [0] : vector<32x32xf32> to vector<32xf32>
    %28 = vector.shape_cast %27 : vector<32xf32> to vector<1x32xf32>
    %cst_38 = arith.constant 3.200000e+01 : f32
    %29 = vector.broadcast %cst_38 : f32 to vector<1x32xf32>
    %30 = arith.divf %28, %29 : vector<1x32xf32>
    %31 = arith.mulf %25, %25 : vector<1x32xf32>
    %32 = arith.subf %30, %31 : vector<1x32xf32>
    %cst_39 = arith.constant 9.99999974E-6 : f32
    %33 = vector.broadcast %cst_39 : f32 to vector<1x32xf32>
    %34 = arith.addf %32, %33 : vector<1x32xf32>
    %35 = math.rsqrt %34 : vector<1x32xf32>
    %36 = arith.mulf %3, %35 : vector<1x32xf32>
    %37 = vector.broadcast %36 : vector<1x32xf32> to vector<32x32xf32>
    %38 = arith.mulf %21, %37 : vector<32x32xf32>
    %39 = arith.mulf %25, %36 : vector<1x32xf32>
    %40 = arith.subf %4, %39 : vector<1x32xf32>
    %41 = vector.broadcast %40 : vector<1x32xf32> to vector<32x32xf32>
    %42 = arith.addf %38, %41 : vector<32x32xf32>
    %cst_40 = arith.constant 0.000000e+00 : f32
    %43 = vector.broadcast %cst_40 : f32 to vector<32x32xf32>
    %44 = arith.maximumf %42, %43 : vector<32x32xf32>
    %45 = vector.shape_cast %44 : vector<32x32xf32> to vector<2x16x32xf32>
    %cst_41 = arith.constant 0.000000e+00 : f32
    %46 = vector.broadcast %cst_41 : f32 to vector<32x32xf32>
    %47 = vector.extract_strided_slice %45 {offsets = [0, 0, 0], sizes = [2, 16, 4], strides = [1, 1, 1]} : vector<2x16x32xf32> to vector<2x16x4xf32>
    %48 = vector.shape_cast %47 : vector<2x16x4xf32> to vector<32x4xf32>
    %49 = arith.truncf %48 : vector<32x4xf32> to vector<32x4xbf16>
    %50 = vector.extract_strided_slice %5 {offsets = [0, 0, 0], sizes = [1, 4, 12], strides = [1, 1, 1]} : vector<7x4x12xbf16> to vector<1x4x12xbf16>
    %51 = vector.shape_cast %50 : vector<1x4x12xbf16> to vector<4x12xbf16>
    %cst_42 = arith.constant dense<0.000000e+00> : vector<32x12xf32>
    %52 = tpu.matmul %49, %51, %cst_42 {dimension_numbers = #tpu.dot_dimension_numbers<[1], [0], [0], [1], [0, 0, 1, 1], [], []>} : vector<32x4xbf16>, vector<4x12xbf16>, vector<32x12xf32> -> vector<32x12xf32>
    %53 = vector.shape_cast %52 : vector<32x12xf32> to vector<2x16x12xf32>
    %cst_43 = arith.constant 0.000000e+00 : f32
    %54 = vector.broadcast %cst_43 : f32 to vector<2x16x4xf32>
    %55 = vector.extract_strided_slice %53 {offsets = [0, 0, 0], sizes = [2, 16, 4], strides = [1, 1, 1]} : vector<2x16x12xf32> to vector<2x16x4xf32>
    %cst_44 = arith.constant 0.000000e+00 : f32
    %56 = vector.broadcast %cst_44 : f32 to vector<2x2x4xf32>
    %57 = vector.extract_strided_slice %55 {offsets = [0, 0, 0], sizes = [2, 14, 4], strides = [1, 1, 1]} : vector<2x16x4xf32> to vector<2x14x4xf32>
    %58 = tpu.concatenate %56, %57 in 1 : vector<2x2x4xf32>, vector<2x14x4xf32> -> vector<2x16x4xf32>
    %59 = arith.addf %54, %58 : vector<2x16x4xf32>
    %60 = vector.extract_strided_slice %53 {offsets = [0, 0, 4], sizes = [2, 16, 4], strides = [1, 1, 1]} : vector<2x16x12xf32> to vector<2x16x4xf32>
    %61 = arith.addf %59, %60 : vector<2x16x4xf32>
    %62 = vector.extract_strided_slice %53 {offsets = [0, 0, 8], sizes = [2, 16, 4], strides = [1, 1, 1]} : vector<2x16x12xf32> to vector<2x16x4xf32>
    %cst_45 = arith.constant 0.000000e+00 : f32
    %63 = vector.broadcast %cst_45 : f32 to vector<2x2x4xf32>
    %64 = vector.extract_strided_slice %62 {offsets = [0, 2, 0], sizes = [2, 14, 4], strides = [1, 1, 1]} : vector<2x16x4xf32> to vector<2x14x4xf32>
    %65 = tpu.concatenate %64, %63 in 1 : vector<2x14x4xf32>, vector<2x2x4xf32> -> vector<2x16x4xf32>
    %66 = arith.addf %61, %65 : vector<2x16x4xf32>
    %67 = vector.shape_cast %66 : vector<2x16x4xf32> to vector<32x4xf32>
    %68 = vector.extract_strided_slice %6 {offsets = [0, 0], sizes = [1, 4], strides = [1, 1]} : vector<7x4xf32> to vector<1x4xf32>
    %69 = vector.broadcast %68 : vector<1x4xf32> to vector<32x4xf32>
    %70 = arith.addf %67, %69 : vector<32x4xf32>
    %cst_46 = arith.constant 0.000000e+00 : f32
    %71 = vector.broadcast %cst_46 : f32 to vector<32x4xf32>
    %72 = arith.maximumf %70, %71 : vector<32x4xf32>
    %73 = vector.extract_strided_slice %7 {offsets = [0, 0], sizes = [1, 4], strides = [1, 1]} : vector<7x4xf32> to vector<1x4xf32>
    %74 = vector.extract_strided_slice %8 {offsets = [0, 0], sizes = [1, 4], strides = [1, 1]} : vector<7x4xf32> to vector<1x4xf32>
    %cst_47 = arith.constant dense<0.000000e+00> : vector<4xf32>
    %75 = vector.multi_reduction <add>, %72, %cst_47 [0] : vector<32x4xf32> to vector<4xf32>
    %76 = vector.shape_cast %75 : vector<4xf32> to vector<1x4xf32>
    %cst_48 = arith.constant 3.200000e+01 : f32
    %77 = vector.broadcast %cst_48 : f32 to vector<1x4xf32>
    %78 = arith.divf %76, %77 : vector<1x4xf32>
    %79 = arith.mulf %72, %72 : vector<32x4xf32>
    %cst_49 = arith.constant dense<0.000000e+00> : vector<4xf32>
    %80 = vector.multi_reduction <add>, %79, %cst_49 [0] : vector<32x4xf32> to vector<4xf32>
    %81 = vector.shape_cast %80 : vector<4xf32> to vector<1x4xf32>
    %cst_50 = arith.constant 3.200000e+01 : f32
    %82 = vector.broadcast %cst_50 : f32 to vector<1x4xf32>
    %83 = arith.divf %81, %82 : vector<1x4xf32>
    %84 = arith.mulf %78, %78 : vector<1x4xf32>
    %85 = arith.subf %83, %84 : vector<1x4xf32>
    %cst_51 = arith.constant 9.99999974E-6 : f32
    %86 = vector.broadcast %cst_51 : f32 to vector<1x4xf32>
    %87 = arith.addf %85, %86 : vector<1x4xf32>
    %88 = math.rsqrt %87 : vector<1x4xf32>
    %89 = arith.mulf %73, %88 : vector<1x4xf32>
    %90 = vector.broadcast %89 : vector<1x4xf32> to vector<32x4xf32>
    %91 = arith.mulf %72, %90 : vector<32x4xf32>
    %92 = arith.mulf %78, %89 : vector<1x4xf32>
    %93 = arith.subf %74, %92 : vector<1x4xf32>
    %94 = vector.broadcast %93 : vector<1x4xf32> to vector<32x4xf32>
    %95 = arith.addf %91, %94 : vector<32x4xf32>
    %96 = arith.truncf %95 : vector<32x4xf32> to vector<32x4xbf16>
    %97 = vector.extract_strided_slice %9 {offsets = [0, 0], sizes = [4, 32], strides = [1, 1]} : vector<32x32xbf16> to vector<4x32xbf16>
    %cst_52 = arith.constant dense<0.000000e+00> : vector<32x32xf32>
    %98 = tpu.matmul %96, %97, %cst_52 {dimension_numbers = #tpu.dot_dimension_numbers<[1], [0], [0], [1], [0, 0, 1, 1], [], []>} : vector<32x4xbf16>, vector<4x32xbf16>, vector<32x32xf32> -> vector<32x32xf32>
    %99 = arith.addf %46, %98 : vector<32x32xf32>
    %100 = vector.shape_cast %95 : vector<32x4xf32> to vector<2x16x4xf32>
    %101 = vector.extract_strided_slice %45 {offsets = [0, 0, 4], sizes = [2, 16, 4], strides = [1, 1, 1]} : vector<2x16x32xf32> to vector<2x16x4xf32>
    %102 = arith.addf %100, %101 : vector<2x16x4xf32>
    %103 = vector.shape_cast %102 : vector<2x16x4xf32> to vector<32x4xf32>
    %104 = arith.truncf %103 : vector<32x4xf32> to vector<32x4xbf16>
    %105 = vector.extract_strided_slice %5 {offsets = [1, 0, 0], sizes = [1, 4, 12], strides = [1, 1, 1]} : vector<7x4x12xbf16> to vector<1x4x12xbf16>
    %106 = vector.shape_cast %105 : vector<1x4x12xbf16> to vector<4x12xbf16>
    %cst_53 = arith.constant dense<0.000000e+00> : vector<32x12xf32>
    %107 = tpu.matmul %104, %106, %cst_53 {dimension_numbers = #tpu.dot_dimension_numbers<[1], [0], [0], [1], [0, 0, 1, 1], [], []>} : vector<32x4xbf16>, vector<4x12xbf16>, vector<32x12xf32> -> vector<32x12xf32>
    %108 = vector.shape_cast %107 : vector<32x12xf32> to vector<2x16x12xf32>
    %cst_54 = arith.constant 0.000000e+00 : f32
    %109 = vector.broadcast %cst_54 : f32 to vector<2x16x4xf32>
    %110 = vector.extract_strided_slice %108 {offsets = [0, 0, 0], sizes = [2, 16, 4], strides = [1, 1, 1]} : vector<2x16x12xf32> to vector<2x16x4xf32>
    %cst_55 = arith.constant 0.000000e+00 : f32
    %111 = vector.broadcast %cst_55 : f32 to vector<2x2x4xf32>
    %112 = vector.extract_strided_slice %110 {offsets = [0, 0, 0], sizes = [2, 14, 4], strides = [1, 1, 1]} : vector<2x16x4xf32> to vector<2x14x4xf32>
    %113 = tpu.concatenate %111, %112 in 1 : vector<2x2x4xf32>, vector<2x14x4xf32> -> vector<2x16x4xf32>
    %114 = arith.addf %109, %113 : vector<2x16x4xf32>
    %115 = vector.extract_strided_slice %108 {offsets = [0, 0, 4], sizes = [2, 16, 4], strides = [1, 1, 1]} : vector<2x16x12xf32> to vector<2x16x4xf32>
    %116 = arith.addf %114, %115 : vector<2x16x4xf32>
    %117 = vector.extract_strided_slice %108 {offsets = [0, 0, 8], sizes = [2, 16, 4], strides = [1, 1, 1]} : vector<2x16x12xf32> to vector<2x16x4xf32>
    %cst_56 = arith.constant 0.000000e+00 : f32
    %118 = vector.broadcast %cst_56 : f32 to vector<2x2x4xf32>
    %119 = vector.extract_strided_slice %117 {offsets = [0, 2, 0], sizes = [2, 14, 4], strides = [1, 1, 1]} : vector<2x16x4xf32> to vector<2x14x4xf32>
    %120 = tpu.concatenate %119, %118 in 1 : vector<2x14x4xf32>, vector<2x2x4xf32> -> vector<2x16x4xf32>
    %121 = arith.addf %116, %120 : vector<2x16x4xf32>
    %122 = vector.shape_cast %121 : vector<2x16x4xf32> to vector<32x4xf32>
    %123 = vector.extract_strided_slice %6 {offsets = [1, 0], sizes = [1, 4], strides = [1, 1]} : vector<7x4xf32> to vector<1x4xf32>
    %124 = vector.broadcast %123 : vector<1x4xf32> to vector<32x4xf32>
    %125 = arith.addf %122, %124 : vector<32x4xf32>
    %cst_57 = arith.constant 0.000000e+00 : f32
    %126 = vector.broadcast %cst_57 : f32 to vector<32x4xf32>
    %127 = arith.maximumf %125, %126 : vector<32x4xf32>
    %128 = vector.extract_strided_slice %7 {offsets = [1, 0], sizes = [1, 4], strides = [1, 1]} : vector<7x4xf32> to vector<1x4xf32>
    %129 = vector.extract_strided_slice %8 {offsets = [1, 0], sizes = [1, 4], strides = [1, 1]} : vector<7x4xf32> to vector<1x4xf32>
    %cst_58 = arith.constant dense<0.000000e+00> : vector<4xf32>
    %130 = vector.multi_reduction <add>, %127, %cst_58 [0] : vector<32x4xf32> to vector<4xf32>
    %131 = vector.shape_cast %130 : vector<4xf32> to vector<1x4xf32>
    %cst_59 = arith.constant 3.200000e+01 : f32
    %132 = vector.broadcast %cst_59 : f32 to vector<1x4xf32>
    %133 = arith.divf %131, %132 : vector<1x4xf32>
    %134 = arith.mulf %127, %127 : vector<32x4xf32>
    %cst_60 = arith.constant dense<0.000000e+00> : vector<4xf32>
    %135 = vector.multi_reduction <add>, %134, %cst_60 [0] : vector<32x4xf32> to vector<4xf32>
    %136 = vector.shape_cast %135 : vector<4xf32> to vector<1x4xf32>
    %cst_61 = arith.constant 3.200000e+01 : f32
    %137 = vector.broadcast %cst_61 : f32 to vector<1x4xf32>
    %138 = arith.divf %136, %137 : vector<1x4xf32>
    %139 = arith.mulf %133, %133 : vector<1x4xf32>
    %140 = arith.subf %138, %139 : vector<1x4xf32>
    %cst_62 = arith.constant 9.99999974E-6 : f32
    %141 = vector.broadcast %cst_62 : f32 to vector<1x4xf32>
    %142 = arith.addf %140, %141 : vector<1x4xf32>
    %143 = math.rsqrt %142 : vector<1x4xf32>
    %144 = arith.mulf %128, %143 : vector<1x4xf32>
    %145 = vector.broadcast %144 : vector<1x4xf32> to vector<32x4xf32>
    %146 = arith.mulf %127, %145 : vector<32x4xf32>
    %147 = arith.mulf %133, %144 : vector<1x4xf32>
    %148 = arith.subf %129, %147 : vector<1x4xf32>
    %149 = vector.broadcast %148 : vector<1x4xf32> to vector<32x4xf32>
    %150 = arith.addf %146, %149 : vector<32x4xf32>
    %151 = arith.truncf %150 : vector<32x4xf32> to vector<32x4xbf16>
    %152 = vector.extract_strided_slice %9 {offsets = [4, 0], sizes = [4, 32], strides = [1, 1]} : vector<32x32xbf16> to vector<4x32xbf16>
    %cst_63 = arith.constant dense<0.000000e+00> : vector<32x32xf32>
    %153 = tpu.matmul %151, %152, %cst_63 {dimension_numbers = #tpu.dot_dimension_numbers<[1], [0], [0], [1], [0, 0, 1, 1], [], []>} : vector<32x4xbf16>, vector<4x32xbf16>, vector<32x32xf32> -> vector<32x32xf32>
    %154 = arith.addf %99, %153 : vector<32x32xf32>
    %155 = vector.shape_cast %150 : vector<32x4xf32> to vector<2x16x4xf32>
    %156 = vector.extract_strided_slice %45 {offsets = [0, 0, 8], sizes = [2, 16, 4], strides = [1, 1, 1]} : vector<2x16x32xf32> to vector<2x16x4xf32>
    %157 = arith.addf %155, %156 : vector<2x16x4xf32>
    %158 = vector.shape_cast %157 : vector<2x16x4xf32> to vector<32x4xf32>
    %159 = arith.truncf %158 : vector<32x4xf32> to vector<32x4xbf16>
    %160 = vector.extract_strided_slice %5 {offsets = [2, 0, 0], sizes = [1, 4, 12], strides = [1, 1, 1]} : vector<7x4x12xbf16> to vector<1x4x12xbf16>
    %161 = vector.shape_cast %160 : vector<1x4x12xbf16> to vector<4x12xbf16>
    %cst_64 = arith.constant dense<0.000000e+00> : vector<32x12xf32>
    %162 = tpu.matmul %159, %161, %cst_64 {dimension_numbers = #tpu.dot_dimension_numbers<[1], [0], [0], [1], [0, 0, 1, 1], [], []>} : vector<32x4xbf16>, vector<4x12xbf16>, vector<32x12xf32> -> vector<32x12xf32>
    %163 = vector.shape_cast %162 : vector<32x12xf32> to vector<2x16x12xf32>
    %cst_65 = arith.constant 0.000000e+00 : f32
    %164 = vector.broadcast %cst_65 : f32 to vector<2x16x4xf32>
    %165 = vector.extract_strided_slice %163 {offsets = [0, 0, 0], sizes = [2, 16, 4], strides = [1, 1, 1]} : vector<2x16x12xf32> to vector<2x16x4xf32>
    %cst_66 = arith.constant 0.000000e+00 : f32
    %166 = vector.broadcast %cst_66 : f32 to vector<2x2x4xf32>
    %167 = vector.extract_strided_slice %165 {offsets = [0, 0, 0], sizes = [2, 14, 4], strides = [1, 1, 1]} : vector<2x16x4xf32> to vector<2x14x4xf32>
    %168 = tpu.concatenate %166, %167 in 1 : vector<2x2x4xf32>, vector<2x14x4xf32> -> vector<2x16x4xf32>
    %169 = arith.addf %164, %168 : vector<2x16x4xf32>
    %170 = vector.extract_strided_slice %163 {offsets = [0, 0, 4], sizes = [2, 16, 4], strides = [1, 1, 1]} : vector<2x16x12xf32> to vector<2x16x4xf32>
    %171 = arith.addf %169, %170 : vector<2x16x4xf32>
    %172 = vector.extract_strided_slice %163 {offsets = [0, 0, 8], sizes = [2, 16, 4], strides = [1, 1, 1]} : vector<2x16x12xf32> to vector<2x16x4xf32>
    %cst_67 = arith.constant 0.000000e+00 : f32
    %173 = vector.broadcast %cst_67 : f32 to vector<2x2x4xf32>
    %174 = vector.extract_strided_slice %172 {offsets = [0, 2, 0], sizes = [2, 14, 4], strides = [1, 1, 1]} : vector<2x16x4xf32> to vector<2x14x4xf32>
    %175 = tpu.concatenate %174, %173 in 1 : vector<2x14x4xf32>, vector<2x2x4xf32> -> vector<2x16x4xf32>
    %176 = arith.addf %171, %175 : vector<2x16x4xf32>
    %177 = vector.shape_cast %176 : vector<2x16x4xf32> to vector<32x4xf32>
    %178 = vector.extract_strided_slice %6 {offsets = [2, 0], sizes = [1, 4], strides = [1, 1]} : vector<7x4xf32> to vector<1x4xf32>
    %179 = vector.broadcast %178 : vector<1x4xf32> to vector<32x4xf32>
    %180 = arith.addf %177, %179 : vector<32x4xf32>
    %cst_68 = arith.constant 0.000000e+00 : f32
    %181 = vector.broadcast %cst_68 : f32 to vector<32x4xf32>
    %182 = arith.maximumf %180, %181 : vector<32x4xf32>
    %183 = vector.extract_strided_slice %7 {offsets = [2, 0], sizes = [1, 4], strides = [1, 1]} : vector<7x4xf32> to vector<1x4xf32>
    %184 = vector.extract_strided_slice %8 {offsets = [2, 0], sizes = [1, 4], strides = [1, 1]} : vector<7x4xf32> to vector<1x4xf32>
    %cst_69 = arith.constant dense<0.000000e+00> : vector<4xf32>
    %185 = vector.multi_reduction <add>, %182, %cst_69 [0] : vector<32x4xf32> to vector<4xf32>
    %186 = vector.shape_cast %185 : vector<4xf32> to vector<1x4xf32>
    %cst_70 = arith.constant 3.200000e+01 : f32
    %187 = vector.broadcast %cst_70 : f32 to vector<1x4xf32>
    %188 = arith.divf %186, %187 : vector<1x4xf32>
    %189 = arith.mulf %182, %182 : vector<32x4xf32>
    %cst_71 = arith.constant dense<0.000000e+00> : vector<4xf32>
    %190 = vector.multi_reduction <add>, %189, %cst_71 [0] : vector<32x4xf32> to vector<4xf32>
    %191 = vector.shape_cast %190 : vector<4xf32> to vector<1x4xf32>
    %cst_72 = arith.constant 3.200000e+01 : f32
    %192 = vector.broadcast %cst_72 : f32 to vector<1x4xf32>
    %193 = arith.divf %191, %192 : vector<1x4xf32>
    %194 = arith.mulf %188, %188 : vector<1x4xf32>
    %195 = arith.subf %193, %194 : vector<1x4xf32>
    %cst_73 = arith.constant 9.99999974E-6 : f32
    %196 = vector.broadcast %cst_73 : f32 to vector<1x4xf32>
    %197 = arith.addf %195, %196 : vector<1x4xf32>
    %198 = math.rsqrt %197 : vector<1x4xf32>
    %199 = arith.mulf %183, %198 : vector<1x4xf32>
    %200 = vector.broadcast %199 : vector<1x4xf32> to vector<32x4xf32>
    %201 = arith.mulf %182, %200 : vector<32x4xf32>
    %202 = arith.mulf %188, %199 : vector<1x4xf32>
    %203 = arith.subf %184, %202 : vector<1x4xf32>
    %204 = vector.broadcast %203 : vector<1x4xf32> to vector<32x4xf32>
    %205 = arith.addf %201, %204 : vector<32x4xf32>
    %206 = arith.truncf %205 : vector<32x4xf32> to vector<32x4xbf16>
    %207 = vector.extract_strided_slice %9 {offsets = [8, 0], sizes = [4, 32], strides = [1, 1]} : vector<32x32xbf16> to vector<4x32xbf16>
    %cst_74 = arith.constant dense<0.000000e+00> : vector<32x32xf32>
    %208 = tpu.matmul %206, %207, %cst_74 {dimension_numbers = #tpu.dot_dimension_numbers<[1], [0], [0], [1], [0, 0, 1, 1], [], []>} : vector<32x4xbf16>, vector<4x32xbf16>, vector<32x32xf32> -> vector<32x32xf32>
    %209 = arith.addf %154, %208 : vector<32x32xf32>
    %210 = vector.shape_cast %205 : vector<32x4xf32> to vector<2x16x4xf32>
    %211 = vector.extract_strided_slice %45 {offsets = [0, 0, 12], sizes = [2, 16, 4], strides = [1, 1, 1]} : vector<2x16x32xf32> to vector<2x16x4xf32>
    %212 = arith.addf %210, %211 : vector<2x16x4xf32>
    %213 = vector.shape_cast %212 : vector<2x16x4xf32> to vector<32x4xf32>
    %214 = arith.truncf %213 : vector<32x4xf32> to vector<32x4xbf16>
    %215 = vector.extract_strided_slice %5 {offsets = [3, 0, 0], sizes = [1, 4, 12], strides = [1, 1, 1]} : vector<7x4x12xbf16> to vector<1x4x12xbf16>
    %216 = vector.shape_cast %215 : vector<1x4x12xbf16> to vector<4x12xbf16>
    %cst_75 = arith.constant dense<0.000000e+00> : vector<32x12xf32>
    %217 = tpu.matmul %214, %216, %cst_75 {dimension_numbers = #tpu.dot_dimension_numbers<[1], [0], [0], [1], [0, 0, 1, 1], [], []>} : vector<32x4xbf16>, vector<4x12xbf16>, vector<32x12xf32> -> vector<32x12xf32>
    %218 = vector.shape_cast %217 : vector<32x12xf32> to vector<2x16x12xf32>
    %cst_76 = arith.constant 0.000000e+00 : f32
    %219 = vector.broadcast %cst_76 : f32 to vector<2x16x4xf32>
    %220 = vector.extract_strided_slice %218 {offsets = [0, 0, 0], sizes = [2, 16, 4], strides = [1, 1, 1]} : vector<2x16x12xf32> to vector<2x16x4xf32>
    %cst_77 = arith.constant 0.000000e+00 : f32
    %221 = vector.broadcast %cst_77 : f32 to vector<2x2x4xf32>
    %222 = vector.extract_strided_slice %220 {offsets = [0, 0, 0], sizes = [2, 14, 4], strides = [1, 1, 1]} : vector<2x16x4xf32> to vector<2x14x4xf32>
    %223 = tpu.concatenate %221, %222 in 1 : vector<2x2x4xf32>, vector<2x14x4xf32> -> vector<2x16x4xf32>
    %224 = arith.addf %219, %223 : vector<2x16x4xf32>
    %225 = vector.extract_strided_slice %218 {offsets = [0, 0, 4], sizes = [2, 16, 4], strides = [1, 1, 1]} : vector<2x16x12xf32> to vector<2x16x4xf32>
    %226 = arith.addf %224, %225 : vector<2x16x4xf32>
    %227 = vector.extract_strided_slice %218 {offsets = [0, 0, 8], sizes = [2, 16, 4], strides = [1, 1, 1]} : vector<2x16x12xf32> to vector<2x16x4xf32>
    %cst_78 = arith.constant 0.000000e+00 : f32
    %228 = vector.broadcast %cst_78 : f32 to vector<2x2x4xf32>
    %229 = vector.extract_strided_slice %227 {offsets = [0, 2, 0], sizes = [2, 14, 4], strides = [1, 1, 1]} : vector<2x16x4xf32> to vector<2x14x4xf32>
    %230 = tpu.concatenate %229, %228 in 1 : vector<2x14x4xf32>, vector<2x2x4xf32> -> vector<2x16x4xf32>
    %231 = arith.addf %226, %230 : vector<2x16x4xf32>
    %232 = vector.shape_cast %231 : vector<2x16x4xf32> to vector<32x4xf32>
    %233 = vector.extract_strided_slice %6 {offsets = [3, 0], sizes = [1, 4], strides = [1, 1]} : vector<7x4xf32> to vector<1x4xf32>
    %234 = vector.broadcast %233 : vector<1x4xf32> to vector<32x4xf32>
    %235 = arith.addf %232, %234 : vector<32x4xf32>
    %cst_79 = arith.constant 0.000000e+00 : f32
    %236 = vector.broadcast %cst_79 : f32 to vector<32x4xf32>
    %237 = arith.maximumf %235, %236 : vector<32x4xf32>
    %238 = vector.extract_strided_slice %7 {offsets = [3, 0], sizes = [1, 4], strides = [1, 1]} : vector<7x4xf32> to vector<1x4xf32>
    %239 = vector.extract_strided_slice %8 {offsets = [3, 0], sizes = [1, 4], strides = [1, 1]} : vector<7x4xf32> to vector<1x4xf32>
    %cst_80 = arith.constant dense<0.000000e+00> : vector<4xf32>
    %240 = vector.multi_reduction <add>, %237, %cst_80 [0] : vector<32x4xf32> to vector<4xf32>
    %241 = vector.shape_cast %240 : vector<4xf32> to vector<1x4xf32>
    %cst_81 = arith.constant 3.200000e+01 : f32
    %242 = vector.broadcast %cst_81 : f32 to vector<1x4xf32>
    %243 = arith.divf %241, %242 : vector<1x4xf32>
    %244 = arith.mulf %237, %237 : vector<32x4xf32>
    %cst_82 = arith.constant dense<0.000000e+00> : vector<4xf32>
    %245 = vector.multi_reduction <add>, %244, %cst_82 [0] : vector<32x4xf32> to vector<4xf32>
    %246 = vector.shape_cast %245 : vector<4xf32> to vector<1x4xf32>
    %cst_83 = arith.constant 3.200000e+01 : f32
    %247 = vector.broadcast %cst_83 : f32 to vector<1x4xf32>
    %248 = arith.divf %246, %247 : vector<1x4xf32>
    %249 = arith.mulf %243, %243 : vector<1x4xf32>
    %250 = arith.subf %248, %249 : vector<1x4xf32>
    %cst_84 = arith.constant 9.99999974E-6 : f32
    %251 = vector.broadcast %cst_84 : f32 to vector<1x4xf32>
    %252 = arith.addf %250, %251 : vector<1x4xf32>
    %253 = math.rsqrt %252 : vector<1x4xf32>
    %254 = arith.mulf %238, %253 : vector<1x4xf32>
    %255 = vector.broadcast %254 : vector<1x4xf32> to vector<32x4xf32>
    %256 = arith.mulf %237, %255 : vector<32x4xf32>
    %257 = arith.mulf %243, %254 : vector<1x4xf32>
    %258 = arith.subf %239, %257 : vector<1x4xf32>
    %259 = vector.broadcast %258 : vector<1x4xf32> to vector<32x4xf32>
    %260 = arith.addf %256, %259 : vector<32x4xf32>
    %261 = arith.truncf %260 : vector<32x4xf32> to vector<32x4xbf16>
    %262 = vector.extract_strided_slice %9 {offsets = [12, 0], sizes = [4, 32], strides = [1, 1]} : vector<32x32xbf16> to vector<4x32xbf16>
    %cst_85 = arith.constant dense<0.000000e+00> : vector<32x32xf32>
    %263 = tpu.matmul %261, %262, %cst_85 {dimension_numbers = #tpu.dot_dimension_numbers<[1], [0], [0], [1], [0, 0, 1, 1], [], []>} : vector<32x4xbf16>, vector<4x32xbf16>, vector<32x32xf32> -> vector<32x32xf32>
    %264 = arith.addf %209, %263 : vector<32x32xf32>
    %265 = vector.shape_cast %260 : vector<32x4xf32> to vector<2x16x4xf32>
    %266 = vector.extract_strided_slice %45 {offsets = [0, 0, 16], sizes = [2, 16, 4], strides = [1, 1, 1]} : vector<2x16x32xf32> to vector<2x16x4xf32>
    %267 = arith.addf %265, %266 : vector<2x16x4xf32>
    %268 = vector.shape_cast %267 : vector<2x16x4xf32> to vector<32x4xf32>
    %269 = arith.truncf %268 : vector<32x4xf32> to vector<32x4xbf16>
    %270 = vector.extract_strided_slice %5 {offsets = [4, 0, 0], sizes = [1, 4, 12], strides = [1, 1, 1]} : vector<7x4x12xbf16> to vector<1x4x12xbf16>
    %271 = vector.shape_cast %270 : vector<1x4x12xbf16> to vector<4x12xbf16>
    %cst_86 = arith.constant dense<0.000000e+00> : vector<32x12xf32>
    %272 = tpu.matmul %269, %271, %cst_86 {dimension_numbers = #tpu.dot_dimension_numbers<[1], [0], [0], [1], [0, 0, 1, 1], [], []>} : vector<32x4xbf16>, vector<4x12xbf16>, vector<32x12xf32> -> vector<32x12xf32>
    %273 = vector.shape_cast %272 : vector<32x12xf32> to vector<2x16x12xf32>
    %cst_87 = arith.constant 0.000000e+00 : f32
    %274 = vector.broadcast %cst_87 : f32 to vector<2x16x4xf32>
    %275 = vector.extract_strided_slice %273 {offsets = [0, 0, 0], sizes = [2, 16, 4], strides = [1, 1, 1]} : vector<2x16x12xf32> to vector<2x16x4xf32>
    %cst_88 = arith.constant 0.000000e+00 : f32
    %276 = vector.broadcast %cst_88 : f32 to vector<2x2x4xf32>
    %277 = vector.extract_strided_slice %275 {offsets = [0, 0, 0], sizes = [2, 14, 4], strides = [1, 1, 1]} : vector<2x16x4xf32> to vector<2x14x4xf32>
    %278 = tpu.concatenate %276, %277 in 1 : vector<2x2x4xf32>, vector<2x14x4xf32> -> vector<2x16x4xf32>
    %279 = arith.addf %274, %278 : vector<2x16x4xf32>
    %280 = vector.extract_strided_slice %273 {offsets = [0, 0, 4], sizes = [2, 16, 4], strides = [1, 1, 1]} : vector<2x16x12xf32> to vector<2x16x4xf32>
    %281 = arith.addf %279, %280 : vector<2x16x4xf32>
    %282 = vector.extract_strided_slice %273 {offsets = [0, 0, 8], sizes = [2, 16, 4], strides = [1, 1, 1]} : vector<2x16x12xf32> to vector<2x16x4xf32>
    %cst_89 = arith.constant 0.000000e+00 : f32
    %283 = vector.broadcast %cst_89 : f32 to vector<2x2x4xf32>
    %284 = vector.extract_strided_slice %282 {offsets = [0, 2, 0], sizes = [2, 14, 4], strides = [1, 1, 1]} : vector<2x16x4xf32> to vector<2x14x4xf32>
    %285 = tpu.concatenate %284, %283 in 1 : vector<2x14x4xf32>, vector<2x2x4xf32> -> vector<2x16x4xf32>
    %286 = arith.addf %281, %285 : vector<2x16x4xf32>
    %287 = vector.shape_cast %286 : vector<2x16x4xf32> to vector<32x4xf32>
    %288 = vector.extract_strided_slice %6 {offsets = [4, 0], sizes = [1, 4], strides = [1, 1]} : vector<7x4xf32> to vector<1x4xf32>
    %289 = vector.broadcast %288 : vector<1x4xf32> to vector<32x4xf32>
    %290 = arith.addf %287, %289 : vector<32x4xf32>
    %cst_90 = arith.constant 0.000000e+00 : f32
    %291 = vector.broadcast %cst_90 : f32 to vector<32x4xf32>
    %292 = arith.maximumf %290, %291 : vector<32x4xf32>
    %293 = vector.extract_strided_slice %7 {offsets = [4, 0], sizes = [1, 4], strides = [1, 1]} : vector<7x4xf32> to vector<1x4xf32>
    %294 = vector.extract_strided_slice %8 {offsets = [4, 0], sizes = [1, 4], strides = [1, 1]} : vector<7x4xf32> to vector<1x4xf32>
    %cst_91 = arith.constant dense<0.000000e+00> : vector<4xf32>
    %295 = vector.multi_reduction <add>, %292, %cst_91 [0] : vector<32x4xf32> to vector<4xf32>
    %296 = vector.shape_cast %295 : vector<4xf32> to vector<1x4xf32>
    %cst_92 = arith.constant 3.200000e+01 : f32
    %297 = vector.broadcast %cst_92 : f32 to vector<1x4xf32>
    %298 = arith.divf %296, %297 : vector<1x4xf32>
    %299 = arith.mulf %292, %292 : vector<32x4xf32>
    %cst_93 = arith.constant dense<0.000000e+00> : vector<4xf32>
    %300 = vector.multi_reduction <add>, %299, %cst_93 [0] : vector<32x4xf32> to vector<4xf32>
    %301 = vector.shape_cast %300 : vector<4xf32> to vector<1x4xf32>
    %cst_94 = arith.constant 3.200000e+01 : f32
    %302 = vector.broadcast %cst_94 : f32 to vector<1x4xf32>
    %303 = arith.divf %301, %302 : vector<1x4xf32>
    %304 = arith.mulf %298, %298 : vector<1x4xf32>
    %305 = arith.subf %303, %304 : vector<1x4xf32>
    %cst_95 = arith.constant 9.99999974E-6 : f32
    %306 = vector.broadcast %cst_95 : f32 to vector<1x4xf32>
    %307 = arith.addf %305, %306 : vector<1x4xf32>
    %308 = math.rsqrt %307 : vector<1x4xf32>
    %309 = arith.mulf %293, %308 : vector<1x4xf32>
    %310 = vector.broadcast %309 : vector<1x4xf32> to vector<32x4xf32>
    %311 = arith.mulf %292, %310 : vector<32x4xf32>
    %312 = arith.mulf %298, %309 : vector<1x4xf32>
    %313 = arith.subf %294, %312 : vector<1x4xf32>
    %314 = vector.broadcast %313 : vector<1x4xf32> to vector<32x4xf32>
    %315 = arith.addf %311, %314 : vector<32x4xf32>
    %316 = arith.truncf %315 : vector<32x4xf32> to vector<32x4xbf16>
    %317 = vector.extract_strided_slice %9 {offsets = [16, 0], sizes = [4, 32], strides = [1, 1]} : vector<32x32xbf16> to vector<4x32xbf16>
    %cst_96 = arith.constant dense<0.000000e+00> : vector<32x32xf32>
    %318 = tpu.matmul %316, %317, %cst_96 {dimension_numbers = #tpu.dot_dimension_numbers<[1], [0], [0], [1], [0, 0, 1, 1], [], []>} : vector<32x4xbf16>, vector<4x32xbf16>, vector<32x32xf32> -> vector<32x32xf32>
    %319 = arith.addf %264, %318 : vector<32x32xf32>
    %320 = vector.shape_cast %315 : vector<32x4xf32> to vector<2x16x4xf32>
    %321 = vector.extract_strided_slice %45 {offsets = [0, 0, 20], sizes = [2, 16, 4], strides = [1, 1, 1]} : vector<2x16x32xf32> to vector<2x16x4xf32>
    %322 = arith.addf %320, %321 : vector<2x16x4xf32>
    %323 = vector.shape_cast %322 : vector<2x16x4xf32> to vector<32x4xf32>
    %324 = arith.truncf %323 : vector<32x4xf32> to vector<32x4xbf16>
    %325 = vector.extract_strided_slice %5 {offsets = [5, 0, 0], sizes = [1, 4, 12], strides = [1, 1, 1]} : vector<7x4x12xbf16> to vector<1x4x12xbf16>
    %326 = vector.shape_cast %325 : vector<1x4x12xbf16> to vector<4x12xbf16>
    %cst_97 = arith.constant dense<0.000000e+00> : vector<32x12xf32>
    %327 = tpu.matmul %324, %326, %cst_97 {dimension_numbers = #tpu.dot_dimension_numbers<[1], [0], [0], [1], [0, 0, 1, 1], [], []>} : vector<32x4xbf16>, vector<4x12xbf16>, vector<32x12xf32> -> vector<32x12xf32>
    %328 = vector.shape_cast %327 : vector<32x12xf32> to vector<2x16x12xf32>
    %cst_98 = arith.constant 0.000000e+00 : f32
    %329 = vector.broadcast %cst_98 : f32 to vector<2x16x4xf32>
    %330 = vector.extract_strided_slice %328 {offsets = [0, 0, 0], sizes = [2, 16, 4], strides = [1, 1, 1]} : vector<2x16x12xf32> to vector<2x16x4xf32>
    %cst_99 = arith.constant 0.000000e+00 : f32
    %331 = vector.broadcast %cst_99 : f32 to vector<2x2x4xf32>
    %332 = vector.extract_strided_slice %330 {offsets = [0, 0, 0], sizes = [2, 14, 4], strides = [1, 1, 1]} : vector<2x16x4xf32> to vector<2x14x4xf32>
    %333 = tpu.concatenate %331, %332 in 1 : vector<2x2x4xf32>, vector<2x14x4xf32> -> vector<2x16x4xf32>
    %334 = arith.addf %329, %333 : vector<2x16x4xf32>
    %335 = vector.extract_strided_slice %328 {offsets = [0, 0, 4], sizes = [2, 16, 4], strides = [1, 1, 1]} : vector<2x16x12xf32> to vector<2x16x4xf32>
    %336 = arith.addf %334, %335 : vector<2x16x4xf32>
    %337 = vector.extract_strided_slice %328 {offsets = [0, 0, 8], sizes = [2, 16, 4], strides = [1, 1, 1]} : vector<2x16x12xf32> to vector<2x16x4xf32>
    %cst_100 = arith.constant 0.000000e+00 : f32
    %338 = vector.broadcast %cst_100 : f32 to vector<2x2x4xf32>
    %339 = vector.extract_strided_slice %337 {offsets = [0, 2, 0], sizes = [2, 14, 4], strides = [1, 1, 1]} : vector<2x16x4xf32> to vector<2x14x4xf32>
    %340 = tpu.concatenate %339, %338 in 1 : vector<2x14x4xf32>, vector<2x2x4xf32> -> vector<2x16x4xf32>
    %341 = arith.addf %336, %340 : vector<2x16x4xf32>
    %342 = vector.shape_cast %341 : vector<2x16x4xf32> to vector<32x4xf32>
    %343 = vector.extract_strided_slice %6 {offsets = [5, 0], sizes = [1, 4], strides = [1, 1]} : vector<7x4xf32> to vector<1x4xf32>
    %344 = vector.broadcast %343 : vector<1x4xf32> to vector<32x4xf32>
    %345 = arith.addf %342, %344 : vector<32x4xf32>
    %cst_101 = arith.constant 0.000000e+00 : f32
    %346 = vector.broadcast %cst_101 : f32 to vector<32x4xf32>
    %347 = arith.maximumf %345, %346 : vector<32x4xf32>
    %348 = vector.extract_strided_slice %7 {offsets = [5, 0], sizes = [1, 4], strides = [1, 1]} : vector<7x4xf32> to vector<1x4xf32>
    %349 = vector.extract_strided_slice %8 {offsets = [5, 0], sizes = [1, 4], strides = [1, 1]} : vector<7x4xf32> to vector<1x4xf32>
    %cst_102 = arith.constant dense<0.000000e+00> : vector<4xf32>
    %350 = vector.multi_reduction <add>, %347, %cst_102 [0] : vector<32x4xf32> to vector<4xf32>
    %351 = vector.shape_cast %350 : vector<4xf32> to vector<1x4xf32>
    %cst_103 = arith.constant 3.200000e+01 : f32
    %352 = vector.broadcast %cst_103 : f32 to vector<1x4xf32>
    %353 = arith.divf %351, %352 : vector<1x4xf32>
    %354 = arith.mulf %347, %347 : vector<32x4xf32>
    %cst_104 = arith.constant dense<0.000000e+00> : vector<4xf32>
    %355 = vector.multi_reduction <add>, %354, %cst_104 [0] : vector<32x4xf32> to vector<4xf32>
    %356 = vector.shape_cast %355 : vector<4xf32> to vector<1x4xf32>
    %cst_105 = arith.constant 3.200000e+01 : f32
    %357 = vector.broadcast %cst_105 : f32 to vector<1x4xf32>
    %358 = arith.divf %356, %357 : vector<1x4xf32>
    %359 = arith.mulf %353, %353 : vector<1x4xf32>
    %360 = arith.subf %358, %359 : vector<1x4xf32>
    %cst_106 = arith.constant 9.99999974E-6 : f32
    %361 = vector.broadcast %cst_106 : f32 to vector<1x4xf32>
    %362 = arith.addf %360, %361 : vector<1x4xf32>
    %363 = math.rsqrt %362 : vector<1x4xf32>
    %364 = arith.mulf %348, %363 : vector<1x4xf32>
    %365 = vector.broadcast %364 : vector<1x4xf32> to vector<32x4xf32>
    %366 = arith.mulf %347, %365 : vector<32x4xf32>
    %367 = arith.mulf %353, %364 : vector<1x4xf32>
    %368 = arith.subf %349, %367 : vector<1x4xf32>
    %369 = vector.broadcast %368 : vector<1x4xf32> to vector<32x4xf32>
    %370 = arith.addf %366, %369 : vector<32x4xf32>
    %371 = arith.truncf %370 : vector<32x4xf32> to vector<32x4xbf16>
    %372 = vector.extract_strided_slice %9 {offsets = [20, 0], sizes = [4, 32], strides = [1, 1]} : vector<32x32xbf16> to vector<4x32xbf16>
    %cst_107 = arith.constant dense<0.000000e+00> : vector<32x32xf32>
    %373 = tpu.matmul %371, %372, %cst_107 {dimension_numbers = #tpu.dot_dimension_numbers<[1], [0], [0], [1], [0, 0, 1, 1], [], []>} : vector<32x4xbf16>, vector<4x32xbf16>, vector<32x32xf32> -> vector<32x32xf32>
    %374 = arith.addf %319, %373 : vector<32x32xf32>
    %375 = vector.shape_cast %370 : vector<32x4xf32> to vector<2x16x4xf32>
    %376 = vector.extract_strided_slice %45 {offsets = [0, 0, 24], sizes = [2, 16, 4], strides = [1, 1, 1]} : vector<2x16x32xf32> to vector<2x16x4xf32>
    %377 = arith.addf %375, %376 : vector<2x16x4xf32>
    %378 = vector.shape_cast %377 : vector<2x16x4xf32> to vector<32x4xf32>
    %379 = arith.truncf %378 : vector<32x4xf32> to vector<32x4xbf16>
    %380 = vector.extract_strided_slice %5 {offsets = [6, 0, 0], sizes = [1, 4, 12], strides = [1, 1, 1]} : vector<7x4x12xbf16> to vector<1x4x12xbf16>
    %381 = vector.shape_cast %380 : vector<1x4x12xbf16> to vector<4x12xbf16>
    %cst_108 = arith.constant dense<0.000000e+00> : vector<32x12xf32>
    %382 = tpu.matmul %379, %381, %cst_108 {dimension_numbers = #tpu.dot_dimension_numbers<[1], [0], [0], [1], [0, 0, 1, 1], [], []>} : vector<32x4xbf16>, vector<4x12xbf16>, vector<32x12xf32> -> vector<32x12xf32>
    %383 = vector.shape_cast %382 : vector<32x12xf32> to vector<2x16x12xf32>
    %cst_109 = arith.constant 0.000000e+00 : f32
    %384 = vector.broadcast %cst_109 : f32 to vector<2x16x4xf32>
    %385 = vector.extract_strided_slice %383 {offsets = [0, 0, 0], sizes = [2, 16, 4], strides = [1, 1, 1]} : vector<2x16x12xf32> to vector<2x16x4xf32>
    %cst_110 = arith.constant 0.000000e+00 : f32
    %386 = vector.broadcast %cst_110 : f32 to vector<2x2x4xf32>
    %387 = vector.extract_strided_slice %385 {offsets = [0, 0, 0], sizes = [2, 14, 4], strides = [1, 1, 1]} : vector<2x16x4xf32> to vector<2x14x4xf32>
    %388 = tpu.concatenate %386, %387 in 1 : vector<2x2x4xf32>, vector<2x14x4xf32> -> vector<2x16x4xf32>
    %389 = arith.addf %384, %388 : vector<2x16x4xf32>
    %390 = vector.extract_strided_slice %383 {offsets = [0, 0, 4], sizes = [2, 16, 4], strides = [1, 1, 1]} : vector<2x16x12xf32> to vector<2x16x4xf32>
    %391 = arith.addf %389, %390 : vector<2x16x4xf32>
    %392 = vector.extract_strided_slice %383 {offsets = [0, 0, 8], sizes = [2, 16, 4], strides = [1, 1, 1]} : vector<2x16x12xf32> to vector<2x16x4xf32>
    %cst_111 = arith.constant 0.000000e+00 : f32
    %393 = vector.broadcast %cst_111 : f32 to vector<2x2x4xf32>
    %394 = vector.extract_strided_slice %392 {offsets = [0, 2, 0], sizes = [2, 14, 4], strides = [1, 1, 1]} : vector<2x16x4xf32> to vector<2x14x4xf32>
    %395 = tpu.concatenate %394, %393 in 1 : vector<2x14x4xf32>, vector<2x2x4xf32> -> vector<2x16x4xf32>
    %396 = arith.addf %391, %395 : vector<2x16x4xf32>
    %397 = vector.shape_cast %396 : vector<2x16x4xf32> to vector<32x4xf32>
    %398 = vector.extract_strided_slice %6 {offsets = [6, 0], sizes = [1, 4], strides = [1, 1]} : vector<7x4xf32> to vector<1x4xf32>
    %399 = vector.broadcast %398 : vector<1x4xf32> to vector<32x4xf32>
    %400 = arith.addf %397, %399 : vector<32x4xf32>
    %cst_112 = arith.constant 0.000000e+00 : f32
    %401 = vector.broadcast %cst_112 : f32 to vector<32x4xf32>
    %402 = arith.maximumf %400, %401 : vector<32x4xf32>
    %403 = vector.extract_strided_slice %7 {offsets = [6, 0], sizes = [1, 4], strides = [1, 1]} : vector<7x4xf32> to vector<1x4xf32>
    %404 = vector.extract_strided_slice %8 {offsets = [6, 0], sizes = [1, 4], strides = [1, 1]} : vector<7x4xf32> to vector<1x4xf32>
    %cst_113 = arith.constant dense<0.000000e+00> : vector<4xf32>
    %405 = vector.multi_reduction <add>, %402, %cst_113 [0] : vector<32x4xf32> to vector<4xf32>
    %406 = vector.shape_cast %405 : vector<4xf32> to vector<1x4xf32>
    %cst_114 = arith.constant 3.200000e+01 : f32
    %407 = vector.broadcast %cst_114 : f32 to vector<1x4xf32>
    %408 = arith.divf %406, %407 : vector<1x4xf32>
    %409 = arith.mulf %402, %402 : vector<32x4xf32>
    %cst_115 = arith.constant dense<0.000000e+00> : vector<4xf32>
    %410 = vector.multi_reduction <add>, %409, %cst_115 [0] : vector<32x4xf32> to vector<4xf32>
    %411 = vector.shape_cast %410 : vector<4xf32> to vector<1x4xf32>
    %cst_116 = arith.constant 3.200000e+01 : f32
    %412 = vector.broadcast %cst_116 : f32 to vector<1x4xf32>
    %413 = arith.divf %411, %412 : vector<1x4xf32>
    %414 = arith.mulf %408, %408 : vector<1x4xf32>
    %415 = arith.subf %413, %414 : vector<1x4xf32>
    %cst_117 = arith.constant 9.99999974E-6 : f32
    %416 = vector.broadcast %cst_117 : f32 to vector<1x4xf32>
    %417 = arith.addf %415, %416 : vector<1x4xf32>
    %418 = math.rsqrt %417 : vector<1x4xf32>
    %419 = arith.mulf %403, %418 : vector<1x4xf32>
    %420 = vector.broadcast %419 : vector<1x4xf32> to vector<32x4xf32>
    %421 = arith.mulf %402, %420 : vector<32x4xf32>
    %422 = arith.mulf %408, %419 : vector<1x4xf32>
    %423 = arith.subf %404, %422 : vector<1x4xf32>
    %424 = vector.broadcast %423 : vector<1x4xf32> to vector<32x4xf32>
    %425 = arith.addf %421, %424 : vector<32x4xf32>
    %426 = arith.truncf %425 : vector<32x4xf32> to vector<32x4xbf16>
    %427 = vector.extract_strided_slice %9 {offsets = [24, 0], sizes = [4, 32], strides = [1, 1]} : vector<32x32xbf16> to vector<4x32xbf16>
    %cst_118 = arith.constant dense<0.000000e+00> : vector<32x32xf32>
    %428 = tpu.matmul %426, %427, %cst_118 {dimension_numbers = #tpu.dot_dimension_numbers<[1], [0], [0], [1], [0, 0, 1, 1], [], []>} : vector<32x4xbf16>, vector<4x32xbf16>, vector<32x32xf32> -> vector<32x32xf32>
    %429 = arith.addf %374, %428 : vector<32x32xf32>
    %430 = vector.extract_strided_slice %45 {offsets = [0, 0, 28], sizes = [2, 16, 4], strides = [1, 1, 1]} : vector<2x16x32xf32> to vector<2x16x4xf32>
    %431 = vector.shape_cast %430 : vector<2x16x4xf32> to vector<32x4xf32>
    %432 = arith.truncf %431 : vector<32x4xf32> to vector<32x4xbf16>
    %433 = vector.extract_strided_slice %9 {offsets = [28, 0], sizes = [4, 32], strides = [1, 1]} : vector<32x32xbf16> to vector<4x32xbf16>
    %cst_119 = arith.constant dense<0.000000e+00> : vector<32x32xf32>
    %434 = tpu.matmul %432, %433, %cst_119 {dimension_numbers = #tpu.dot_dimension_numbers<[1], [0], [0], [1], [0, 0, 1, 1], [], []>} : vector<32x4xbf16>, vector<4x32xbf16>, vector<32x32xf32> -> vector<32x32xf32>
    %435 = arith.addf %429, %434 : vector<32x32xf32>
    %436 = vector.broadcast %10 : vector<1x32xf32> to vector<32x32xf32>
    %437 = arith.addf %435, %436 : vector<32x32xf32>
    %cst_120 = arith.constant 0.000000e+00 : f32
    %438 = vector.broadcast %cst_120 : f32 to vector<32x32xf32>
    %439 = arith.maximumf %437, %438 : vector<32x32xf32>
    %cst_121 = arith.constant dense<0.000000e+00> : vector<32xf32>
    %440 = vector.multi_reduction <add>, %439, %cst_121 [0] : vector<32x32xf32> to vector<32xf32>
    %441 = vector.shape_cast %440 : vector<32xf32> to vector<1x32xf32>
    %cst_122 = arith.constant 3.200000e+01 : f32
    %442 = vector.broadcast %cst_122 : f32 to vector<1x32xf32>
    %443 = arith.divf %441, %442 : vector<1x32xf32>
    %444 = arith.mulf %439, %439 : vector<32x32xf32>
    %cst_123 = arith.constant dense<0.000000e+00> : vector<32xf32>
    %445 = vector.multi_reduction <add>, %444, %cst_123 [0] : vector<32x32xf32> to vector<32xf32>
    %446 = vector.shape_cast %445 : vector<32xf32> to vector<1x32xf32>
    %cst_124 = arith.constant 3.200000e+01 : f32
    %447 = vector.broadcast %cst_124 : f32 to vector<1x32xf32>
    %448 = arith.divf %446, %447 : vector<1x32xf32>
    %449 = arith.mulf %443, %443 : vector<1x32xf32>
    %450 = arith.subf %448, %449 : vector<1x32xf32>
    %cst_125 = arith.constant 9.99999974E-6 : f32
    %451 = vector.broadcast %cst_125 : f32 to vector<1x32xf32>
    %452 = arith.addf %450, %451 : vector<1x32xf32>
    %453 = math.rsqrt %452 : vector<1x32xf32>
    %454 = arith.mulf %11, %453 : vector<1x32xf32>
    %455 = vector.broadcast %454 : vector<1x32xf32> to vector<32x32xf32>
    %456 = arith.mulf %439, %455 : vector<32x32xf32>
    %457 = arith.mulf %443, %454 : vector<1x32xf32>
    %458 = arith.subf %12, %457 : vector<1x32xf32>
    %459 = vector.broadcast %458 : vector<1x32xf32> to vector<32x32xf32>
    %460 = arith.addf %456, %459 : vector<32x32xf32>
    %461 = vector.shape_cast %460 : vector<32x32xf32> to vector<2x16x32xf32>
    %cst_126 = arith.constant dense<0.000000e+00> : vector<2x32xf32>
    %462 = vector.multi_reduction <add>, %461, %cst_126 [1] : vector<2x16x32xf32> to vector<2x32xf32>
    %cst_127 = arith.constant 1.600000e+01 : f32
    %463 = vector.broadcast %cst_127 : f32 to vector<2x32xf32>
    %464 = arith.divf %462, %463 : vector<2x32xf32>
    %465 = arith.truncf %464 : vector<2x32xf32> to vector<2x32xbf16>
    %cst_128 = arith.constant dense<0.000000e+00> : vector<2x128xf32>
    %466 = tpu.matmul %465, %13, %cst_128 {dimension_numbers = #tpu.dot_dimension_numbers<[1], [0], [0], [1], [0, 0, 1, 1], [], []>} : vector<2x32xbf16>, vector<32x128xbf16>, vector<2x128xf32> -> vector<2x128xf32>
    %467 = vector.broadcast %14 : vector<1x128xf32> to vector<2x128xf32>
    %468 = arith.addf %466, %467 : vector<2x128xf32>
    %cst_129 = arith.constant 0.000000e+00 : f32
    %469 = vector.broadcast %cst_129 : f32 to vector<2x128xf32>
    %470 = arith.maximumf %468, %469 : vector<2x128xf32>
    %471 = arith.truncf %470 : vector<2x128xf32> to vector<2x128xbf16>
    %cst_130 = arith.constant dense<0.000000e+00> : vector<2x32xf32>
    %472 = tpu.matmul %471, %15, %cst_130 {dimension_numbers = #tpu.dot_dimension_numbers<[1], [0], [0], [1], [0, 0, 1, 1], [], []>} : vector<2x128xbf16>, vector<128x32xbf16>, vector<2x32xf32> -> vector<2x32xf32>
    %473 = vector.broadcast %16 : vector<1x32xf32> to vector<2x32xf32>
    %474 = arith.addf %472, %473 : vector<2x32xf32>
    %475 = arith.negf %474 : vector<2x32xf32>
    %476 = math.exp %475 : vector<2x32xf32>
    %cst_131 = arith.constant 1.000000e+00 : f32
    %477 = vector.broadcast %cst_131 : f32 to vector<2x32xf32>
    %478 = arith.addf %477, %476 : vector<2x32xf32>
    %479 = arith.divf %477, %478 : vector<2x32xf32>
    %480 = vector.shape_cast %479 : vector<2x32xf32> to vector<2x1x32xf32>
    %481 = vector.broadcast %480 : vector<2x1x32xf32> to vector<2x16x32xf32>
    %482 = arith.mulf %461, %481 : vector<2x16x32xf32>
    %483 = arith.addf %482, %0 : vector<2x16x32xf32>
    %c0_132 = arith.constant 0 : index
    %c0_133 = arith.constant 0 : index
    %c0_134 = arith.constant 0 : index
    %484 = vector.load %arg17[%c0_132, %c0_133, %c0_134] : memref<2x16x32xf32, #tpu.memory_space<vmem>>, vector<2x16x32xf32>
    tpu.vector_store %arg17[%c0_132, %c0_133, %c0_134], %483 {strides = array<i32>} : memref<2x16x32xf32, #tpu.memory_space<vmem>>, vector<2x16x32xf32>,
    return
  }
}

</mosaic_0001>

<llo_original>
// kernel: tpu_custom_call.1
$region0: #{tpu_custom_call.1}
  #allocation0 [shape = 'u32[]', space=smem, size = 0x4, offset = 0x4, fixed_abs, tag = 'smem constant byte address 0x4 - core index']
  #allocation1 [shape = 'u32[144,128]{1,0:T(1,128)}', space=vmem, size = 0x12000, scoped, tag = 'internal scratch']
  %s0 = inlined_call_operand.vmem [shape: f32[2,16,32], index: 0, kind: input, shape index: {}]
  %s1 = inlined_call_operand.vmem [shape: bf16[32,32], index: 1, kind: input, shape index: {}]
  %s2 = inlined_call_operand.vmem [shape: f32[1,32], index: 2, kind: input, shape index: {}]
  %s3 = inlined_call_operand.vmem [shape: f32[1,32], index: 3, kind: input, shape index: {}]
  %s4 = inlined_call_operand.vmem [shape: f32[1,32], index: 4, kind: input, shape index: {}]
  %s5 = inlined_call_operand.vmem [shape: bf16[7,4,12], index: 5, kind: input, shape index: {}]
  %s6 = inlined_call_operand.vmem [shape: f32[7,4], index: 6, kind: input, shape index: {}]
  %s7 = inlined_call_operand.vmem [shape: f32[7,4], index: 7, kind: input, shape index: {}]
  %s8 = inlined_call_operand.vmem [shape: f32[7,4], index: 8, kind: input, shape index: {}]
  %s9 = inlined_call_operand.vmem [shape: bf16[32,32], index: 9, kind: input, shape index: {}]
  %s10 = inlined_call_operand.vmem [shape: f32[1,32], index: 10, kind: input, shape index: {}]
  %s11 = inlined_call_operand.vmem [shape: f32[1,32], index: 11, kind: input, shape index: {}]
  %s12 = inlined_call_operand.vmem [shape: f32[1,32], index: 12, kind: input, shape index: {}]
  %s13 = inlined_call_operand.vmem [shape: bf16[32,128], index: 13, kind: input, shape index: {}]
  %s14 = inlined_call_operand.vmem [shape: f32[1,128], index: 14, kind: input, shape index: {}]
  %s15 = inlined_call_operand.vmem [shape: bf16[128,32], index: 15, kind: input, shape index: {}]
  %s16 = inlined_call_operand.vmem [shape: f32[1,32], index: 16, kind: input, shape index: {}]
  %s17 = inlined_call_operand.hbm [shape: f32[2,16,32], index: 17, kind: output, shape index: {}]
  %s18 = sld [smem:[#allocation0]]
  $region78: #{tpu_custom_call.1} parent=0
    _
  %s20 = ssub.s32 1, %s18
  %s21 = scalar_select 0, %s20, %s18
  $region1: #{tpu_custom_call.1} parent=0
    #allocation2 [shape = 'u8[16384]{0}', space=vmem, size = 0x4000, scoped, tag = 'output window, operand 0, single buffered']
    #allocation3 [shape = 's32[1]{0}', space=sflag, size = 0x4, scoped, tag = 'scoped memory for tpu_custom_call.1']
    %22 = vsyncpa [#allocation3], 0
    // Predicated region
    $region2: #{tpu_custom_call.1} parent=1 // pred_check
      _
    $region3: #{tpu_custom_call.1} parent=1 // pred_check_branch
      %24 = sbr.rel (0) target = $region5
    $region4: #{tpu_custom_call.1} parent=1 // pred_region
      _
    $region5: #{tpu_custom_call.1} parent=1 // pred_fallthru
      _
    // Predicated region
    $region6: #{tpu_custom_call.1} parent=1 // pred_check
      _
    $region7: #{tpu_custom_call.1} parent=1 // pred_check_branch
      %26 = sbr.rel (0) target = $region9
    $region8: #{tpu_custom_call.1} parent=1 // pred_region
      _
    $region9: #{tpu_custom_call.1} parent=1 // pred_fallthru
      _
    // Predicated region
    $region10: #{tpu_custom_call.1} parent=1 // pred_check
      _
    $region11: #{tpu_custom_call.1} parent=1 // pred_check_branch
      %28 = sbr.rel (0) target = $region13
    $region12: #{tpu_custom_call.1} parent=1 // pred_region
      _
    $region13: #{tpu_custom_call.1} parent=1 // pred_fallthru
      _
    // Predicated region
    $region14: #{tpu_custom_call.1} parent=1 // pred_check
      _
    $region15: #{tpu_custom_call.1} parent=1 // pred_check_branch
      %30 = sbr.rel (0) target = $region17
    $region16: #{tpu_custom_call.1} parent=1 // pred_region
      _
    $region17: #{tpu_custom_call.1} parent=1 // pred_fallthru
      _
    // Predicated region
    $region18: #{tpu_custom_call.1} parent=1 // pred_check
      _
    $region19: #{tpu_custom_call.1} parent=1 // pred_check_branch
      %32 = sbr.rel (0) target = $region21
    $region20: #{tpu_custom_call.1} parent=1 // pred_region
      _
    $region21: #{tpu_custom_call.1} parent=1 // pred_fallthru
      _
    // Predicated region
    $region22: #{tpu_custom_call.1} parent=1 // pred_check
      _
    $region23: #{tpu_custom_call.1} parent=1 // pred_check_branch
      %34 = sbr.rel (0) target = $region25
    $region24: #{tpu_custom_call.1} parent=1 // pred_region
      _
    $region25: #{tpu_custom_call.1} parent=1 // pred_fallthru
      _
    // Predicated region
    $region26: #{tpu_custom_call.1} parent=1 // pred_check
      _
    $region27: #{tpu_custom_call.1} parent=1 // pred_check_branch
      %36 = sbr.rel (0) target = $region29
    $region28: #{tpu_custom_call.1} parent=1 // pred_region
      _
    $region29: #{tpu_custom_call.1} parent=1 // pred_fallthru
      _
    // Predicated region
    $region30: #{tpu_custom_call.1} parent=1 // pred_check
      _
    $region31: #{tpu_custom_call.1} parent=1 // pred_check_branch
      %38 = sbr.rel (0) target = $region33
    $region32: #{tpu_custom_call.1} parent=1 // pred_region
      _
    $region33: #{tpu_custom_call.1} parent=1 // pred_fallthru
      _
    // Predicated region
    $region34: #{tpu_custom_call.1} parent=1 // pred_check
      _
    $region35: #{tpu_custom_call.1} parent=1 // pred_check_branch
      %40 = sbr.rel (0) target = $region37
    $region36: #{tpu_custom_call.1} parent=1 // pred_region
      _
    $region37: #{tpu_custom_call.1} parent=1 // pred_fallthru
      _
    // Predicated region
    $region38: #{tpu_custom_call.1} parent=1 // pred_check
      _
    $region39: #{tpu_custom_call.1} parent=1 // pred_check_branch
      %42 = sbr.rel (0) target = $region41
    $region40: #{tpu_custom_call.1} parent=1 // pred_region
      _
    $region41: #{tpu_custom_call.1} parent=1 // pred_fallthru
      _
    // Predicated region
    $region42: #{tpu_custom_call.1} parent=1 // pred_check
      _
    $region43: #{tpu_custom_call.1} parent=1 // pred_check_branch
      %44 = sbr.rel (0) target = $region45
    $region44: #{tpu_custom_call.1} parent=1 // pred_region
      _
    $region45: #{tpu_custom_call.1} parent=1 // pred_fallthru
      _
    // Predicated region
    $region46: #{tpu_custom_call.1} parent=1 // pred_check
      _
    $region47: #{tpu_custom_call.1} parent=1 // pred_check_branch
      %46 = sbr.rel (0) target = $region49
    $region48: #{tpu_custom_call.1} parent=1 // pred_region
      _
    $region49: #{tpu_custom_call.1} parent=1 // pred_fallthru
      _
    // Predicated region
    $region50: #{tpu_custom_call.1} parent=1 // pred_check
      _
    $region51: #{tpu_custom_call.1} parent=1 // pred_check_branch
      %48 = sbr.rel (0) target = $region53
    $region52: #{tpu_custom_call.1} parent=1 // pred_region
      _
    $region53: #{tpu_custom_call.1} parent=1 // pred_fallthru
      _
    // Predicated region
    $region54: #{tpu_custom_call.1} parent=1 // pred_check
      _
    $region55: #{tpu_custom_call.1} parent=1 // pred_check_branch
      %50 = sbr.rel (0) target = $region57
    $region56: #{tpu_custom_call.1} parent=1 // pred_region
      _
    $region57: #{tpu_custom_call.1} parent=1 // pred_fallthru
      _
    // Predicated region
    $region58: #{tpu_custom_call.1} parent=1 // pred_check
      _
    $region59: #{tpu_custom_call.1} parent=1 // pred_check_branch
      %52 = sbr.rel (0) target = $region61
    $region60: #{tpu_custom_call.1} parent=1 // pred_region
      _
    $region61: #{tpu_custom_call.1} parent=1 // pred_fallthru
      _
    // Predicated region
    $region62: #{tpu_custom_call.1} parent=1 // pred_check
      _
    $region63: #{tpu_custom_call.1} parent=1 // pred_check_branch
      %54 = sbr.rel (0) target = $region65
    $region64: #{tpu_custom_call.1} parent=1 // pred_region
      _
    $region65: #{tpu_custom_call.1} parent=1 // pred_fallthru
      _
    // Predicated region
    $region66: #{tpu_custom_call.1} parent=1 // pred_check
      _
    $region67: #{tpu_custom_call.1} parent=1 // pred_check_branch
      %56 = sbr.rel (0) target = $region69
    $region68: #{tpu_custom_call.1} parent=1 // pred_region
      _
    $region69: #{tpu_custom_call.1} parent=1 // pred_fallthru
      _
    %v58 = vld [vmem:[%s0] sm:$0xff]
    %v59 = vld [vmem:[%s0 + $0x8] sm:$0xff]
    %v60 = vld [vmem:[%s0 + $0x10] sm:$0xff]
    %v61 = vld [vmem:[%s0 + $0x18] sm:$0xff]
    %v62 = vld [vmem:[%s1] sm:$0xf]
    %v63 = vld [vmem:[%s1 + $0x4] sm:$0xf]
    %v64 = vld [vmem:[%s1 + $0x8] sm:$0xf]
    %v65 = vld [vmem:[%s1 + $0xc] sm:$0xf]
    %v66 = vld [vmem:[%s2] sm:$0x1]
    %v67 = vld [vmem:[%s3] sm:$0x1]
    %v68 = vld [vmem:[%s4] sm:$0x1]
    %v69 = vld [vmem:[%s5] sm:$0x3]
    %v70 = vld [vmem:[%s5 + $0x2] sm:$0x3]
    %v71 = vld [vmem:[%s5 + $0x4] sm:$0x3]
    %v72 = vld [vmem:[%s5 + $0x6] sm:$0x3]
    %v73 = vld [vmem:[%s5 + $0x8] sm:$0x3]
    %v74 = vld [vmem:[%s5 + $0xa] sm:$0x3]
    %v75 = vld [vmem:[%s5 + $0xc] sm:$0x3]
    %v76 = vld [vmem:[%s6] sm:$0x7f]
    %v77 = vld [vmem:[%s7] sm:$0x7f]
    %v78 = vld [vmem:[%s8] sm:$0x7f]
    %v79 = vld [vmem:[%s9] sm:$0xf]
    %v80 = vld [vmem:[%s9 + $0x4] sm:$0xf]
    %v81 = vld [vmem:[%s9 + $0x8] sm:$0xf]
    %v82 = vld [vmem:[%s9 + $0xc] sm:$0xf]
    %v83 = vld [vmem:[%s10] sm:$0x1]
    %v84 = vld [vmem:[%s11] sm:$0x1]
    %v85 = vld [vmem:[%s12] sm:$0x1]
    %v86 = vld [vmem:[%s13] sm:$0xf]
    %v87 = vld [vmem:[%s13 + $0x4] sm:$0xf]
    %v88 = vld [vmem:[%s13 + $0x8] sm:$0xf]
    %v89 = vld [vmem:[%s13 + $0xc] sm:$0xf]
    %v90 = vld [vmem:[%s14] sm:$0x1]
    %v91 = vld [vmem:[%s15] sm:$0xf]
    %v92 = vld [vmem:[%s15 + $0x4] sm:$0xf]
    %v93 = vld [vmem:[%s15 + $0x8] sm:$0xf]
    %v94 = vld [vmem:[%s15 + $0xc] sm:$0xf]
    %v95 = vld [vmem:[%s15 + $0x10] sm:$0xf]
    %v96 = vld [vmem:[%s15 + $0x14] sm:$0xf]
    %v97 = vld [vmem:[%s15 + $0x18] sm:$0xf]
    %v98 = vld [vmem:[%s15 + $0x1c] sm:$0xf]
    %v99 = vld [vmem:[%s15 + $0x20] sm:$0xf]
    %v100 = vld [vmem:[%s15 + $0x24] sm:$0xf]
    %v101 = vld [vmem:[%s15 + $0x28] sm:$0xf]
    %v102 = vld [vmem:[%s15 + $0x2c] sm:$0xf]
    %v103 = vld [vmem:[%s15 + $0x30] sm:$0xf]
    %v104 = vld [vmem:[%s15 + $0x34] sm:$0xf]
    %v105 = vld [vmem:[%s15 + $0x38] sm:$0xf]
    %v106 = vld [vmem:[%s15 + $0x3c] sm:$0xf]
    %v107 = vld [vmem:[%s16] sm:$0x1]
    %v108 = vpack.c.bf16 %v59, %v58
    %v109 = vpack.c.bf16 %v61, %v60
    %v111 = vlaneseq
    %v112 = vshrl.u32 %v111, 7
    %v113 = vsub.s32 0, %v112
    %v114 = vrot.slane %v66, %v113
    %v120 = vunpack.c.l.b16 %v62
    %v121 = vunpack.c.l.b16 %v63
    %v122 = vunpack.c.l.b16 %v64
    %v123 = vunpack.c.l.b16 %v65
    %v124 = vpack.c.b16 %v121, %v120
    %v125 = vpack.c.b16 %v123, %v122
    %vm128 = vcmask 261120
    %v130 = vsel %vm128, %v108, 0
    %v133 = vsel %vm128, %v109, 0
    %135 = vmatprep.subr.bf16.mxu0 0
    %136 = vmatpush1.bf16.msra.mxu0 %v124
    %137 = vmatprep.subr.bf16.mxu0 0
    %138 = vmatpush1.bf16.msra.mxu0 %v125
    %139 = vmatprep.subr.bf16.mxu0 0
    %140 = vmatpush1.bf16.msra.mxu0 0
    %141 = vmatprep.subr.bf16.mxu0 0
    %142 = vmatpush1.bf16.msra.mxu0 0
    %143 = vmatprep.subr.bf16.mxu0 0
    %144 = vmatpush1.bf16.msra.mxu0 0
    %145 = vmatprep.subr.bf16.mxu0 0
    %146 = vmatpush1.bf16.msra.mxu0 0
    %147 = vmatprep.subr.bf16.mxu0 0
    %148 = vmatpush1.bf16.msra.mxu0 0
    %149 = vmatprep.subr.bf16.mxu0 0
    %150 = vmatpush1.bf16.msra.mxu0 0
    %151 = vmatprep.subr.bf16.mxu0 0
    %152 = vmatpush1.bf16.msra.mxu0 0
    %153 = vmatprep.subr.bf16.mxu0 0
    %154 = vmatpush1.bf16.msra.mxu0 0
    %155 = vmatprep.subr.bf16.mxu0 0
    %156 = vmatpush1.bf16.msra.mxu0 0
    %157 = vmatprep.subr.bf16.mxu0 0
    %158 = vmatpush1.bf16.msra.mxu0 0
    %159 = vmatprep.subr.bf16.mxu0 0
    %160 = vmatpush1.bf16.msra.mxu0 0
    %161 = vmatprep.subr.bf16.mxu0 0
    %162 = vmatpush1.bf16.msra.mxu0 0
    %163 = vmatprep.subr.bf16.mxu0 0
    %164 = vmatpush1.bf16.msra.mxu0 0
    %165 = vmatprep.subr.bf16.mxu0 0
    %166 = vmatpush1.bf16.msra.mxu0 0
    %167 = vmatprep.mubr.bf16.mxu0 0
    %168 = vmatmul.mubr.bf16.gmra.mrb[0].mxu0 %v130
    %v169 = vpop.f32.mrb[0].mxu0
    %v170 = vadd.f32 %v114, %v169
    %v171 = vpop.f32.mrb[0].mxu0
    %v172 = vpop.f32.mrb[0].mxu0
    %v173 = vadd.f32 %v114, %v172
    %v174 = vpop.f32.mrb[0].mxu0
    %175 = vmatprep.mubr.bf16.mxu0 0
    %176 = vmatmul.mubr.bf16.gmra.mrb[0].mxu0 %v133
    %v177 = vpop.f32.mrb[0].mxu0
    %v178 = vadd.f32 %v114, %v177
    %v179 = vpop.f32.mrb[0].mxu0
    %v180 = vpop.f32.mrb[0].mxu0
    %v181 = vadd.f32 %v114, %v180
    %v182 = vpop.f32.mrb[0].mxu0
    %183 = vdwg.mxu0
    %v184 = vsel %vm128, %v170, 0.0
    %v185 = vsel %vm128, %v173, 0.0
    %v186 = vadd.f32 %v184, %v185
    %v187 = vsel %vm128, %v178, 0.0
    %v188 = vadd.f32 %v186, %v187
    %v189 = vsel %vm128, %v181, 0.0
    %v190 = vadd.f32 %v188, %v189
    %v191 = vrot.slane %v190, 4
    %v192 = vadd.f32 %v190, %v191
    %v193 = vrot.slane %v192, 2
    %v194 = vadd.f32 %v192, %v193
    %v195 = vrot.slane %v194, 1
    %v196 = vadd.f32 %v194, %v195
    %v197 = vrcp.pop 32.0
    %v198 = vmul.f32 %v196, %v197
    %v199 = vmul.f32 %v170, %v170
    %v200 = vmul.f32 %v173, %v173
    %v201 = vmul.f32 %v178, %v178
    %v202 = vmul.f32 %v181, %v181
    %v203 = vsel %vm128, %v199, 0.0
    %v204 = vsel %vm128, %v200, 0.0
    %v205 = vadd.f32 %v203, %v204
    %v206 = vsel %vm128, %v201, 0.0
    %v207 = vadd.f32 %v205, %v206
    %v208 = vsel %vm128, %v202, 0.0
    %v209 = vadd.f32 %v207, %v208
    %v210 = vrot.slane %v209, 4
    %v211 = vadd.f32 %v209, %v210
    %v212 = vrot.slane %v211, 2
    %v213 = vadd.f32 %v211, %v212
    %v214 = vrot.slane %v213, 1
    %v215 = vadd.f32 %v213, %v214
    %v216 = vmul.f32 %v215, %v197
    %v217 = vmul.f32 %v198, %v198
    %v218 = vsub.f32 %v216, %v217
    %v219 = vadd.f32 %v218, 1e-05
    %v220 = vrsqrt.pop %v219
    %v221 = vmul.f32 %v67, %v220
    %v223 = vlaneseq
    %v224 = vshrl.u32 %v223, 7
    %v225 = vsub.s32 0, %v224
    %v226 = vrot.slane %v221, %v225
    %v228 = vmul.f32 %v170, %v226
    %v229 = vmul.f32 %v173, %v226
    %v230 = vmul.f32 %v178, %v226
    %v231 = vmul.f32 %v181, %v226
    %v232 = vmul.f32 %v198, %v221
    %v233 = vsub.f32 %v68, %v232
    %v235 = vlaneseq
    %v236 = vshrl.u32 %v235, 7
    %v237 = vsub.s32 0, %v236
    %v238 = vrot.slane %v233, %v237
    %v240 = vadd.f32 %v228, %v238
    %v241 = vadd.f32 %v229, %v238
    %v242 = vadd.f32 %v230, %v238
    %v243 = vadd.f32 %v231, %v238
    %v244 = vmax.f32 %v240, 0.0
    %v245 = vmax.f32 %v241, 0.0
    %v246 = vmax.f32 %v242, 0.0
    %v247 = vmax.f32 %v243, 0.0
    %v248 = vpack.c.bf16 %v245, %v244
    %v249 = vpack.c.bf16 %v247, %v246
    %vm250 = vcmask 31744
    %v252 = vsel %vm250, %v248, 0
    %v255 = vsel %vm250, %v249, 0
    %vm257 = vcmask 1041408
    %v259 = vsel %vm257, %v69, 0
    %261 = vmatprep.subr.bf16.mxu0 0
    %262 = vmatpush1.bf16.msra.mxu0 %v259
    %263 = vmatprep.subr.bf16.mxu0 0
    %264 = vmatpush1.bf16.msra.mxu0 0
    %265 = vmatprep.subr.bf16.mxu0 0
    %266 = vmatpush1.bf16.msra.mxu0 0
    %267 = vmatprep.subr.bf16.mxu0 0
    %268 = vmatpush1.bf16.msra.mxu0 0
    %269 = vmatprep.subr.bf16.mxu0 0
    %270 = vmatpush1.bf16.msra.mxu0 0
    %271 = vmatprep.subr.bf16.mxu0 0
    %272 = vmatpush1.bf16.msra.mxu0 0
    %273 = vmatprep.subr.bf16.mxu0 0
    %274 = vmatpush1.bf16.msra.mxu0 0
    %275 = vmatprep.subr.bf16.mxu0 0
    %276 = vmatpush1.bf16.msra.mxu0 0
    %277 = vmatprep.subr.bf16.mxu0 0
    %278 = vmatpush1.bf16.msra.mxu0 0
    %279 = vmatprep.subr.bf16.mxu0 0
    %280 = vmatpush1.bf16.msra.mxu0 0
    %281 = vmatprep.subr.bf16.mxu0 0
    %282 = vmatpush1.bf16.msra.mxu0 0
    %283 = vmatprep.subr.bf16.mxu0 0
    %284 = vmatpush1.bf16.msra.mxu0 0
    %285 = vmatprep.subr.bf16.mxu0 0
    %286 = vmatpush1.bf16.msra.mxu0 0
    %287 = vmatprep.subr.bf16.mxu0 0
    %288 = vmatpush1.bf16.msra.mxu0 0
    %289 = vmatprep.subr.bf16.mxu0 0
    %290 = vmatpush1.bf16.msra.mxu0 0
    %291 = vmatprep.subr.bf16.mxu0 0
    %292 = vmatpush1.bf16.msra.mxu0 0
    %293 = vmatprep.mubr.bf16.mxu0 0
    %294 = vmatmul.mubr.bf16.gmra.mrb[0].mxu0 %v252
    %v295 = vpop.f32.mrb[0].mxu0
    %v296 = vadd.f32 0.0, %v295
    %v297 = vpop.f32.mrb[0].mxu0
    %v298 = vpop.f32.mrb[0].mxu0
    %v299 = vadd.f32 0.0, %v298
    %v300 = vpop.f32.mrb[0].mxu0
    %301 = vmatprep.mubr.bf16.mxu0 0
    %302 = vmatmul.mubr.bf16.gmra.mrb[0].mxu0 %v255
    %v303 = vpop.f32.mrb[0].mxu0
    %v304 = vadd.f32 0.0, %v303
    %v305 = vpop.f32.mrb[0].mxu0
    %v306 = vpop.f32.mrb[0].mxu0
    %v307 = vadd.f32 0.0, %v306
    %v308 = vpop.f32.mrb[0].mxu0
    %309 = vdwg.mxu0
    %v314 = vrot.slane %v296, 6
    %v315 = vrot.slane %v299, 6
    %v316 = vsel %vm257, %v314, %v315
    %v317 = vrot.slane %v304, 6
    %v318 = vrot.slane %v307, 6
    %v319 = vsel %vm257, %v317, %v318
    %v324 = vsel %vm257, 0.0, %v314
    %v325 = vsel %vm257, 0.0, %v317
    %v326 = vadd.f32 %v324, 0.0
    %v327 = vadd.f32 %v316, 0.0
    %v328 = vadd.f32 %v325, 0.0
    %v329 = vadd.f32 %v319, 0.0
    %330 = vrot.lane.b32.xlu0 %v296, 124
    %v331 = vpop.permute.xlu0 %330
    %332 = vrot.lane.b32.xlu0 %v299, 124
    %v333 = vpop.permute.xlu0 %332
    %334 = vrot.lane.b32.xlu0 %v304, 124
    %v335 = vpop.permute.xlu0 %334
    %336 = vrot.lane.b32.xlu0 %v307, 124
    %v337 = vpop.permute.xlu0 %336
    %v342 = vadd.f32 %v326, %v331
    %v343 = vadd.f32 %v327, %v333
    %v344 = vadd.f32 %v328, %v335
    %v345 = vadd.f32 %v329, %v337
    %vm346 = vcmask 1045504
    %v347 = vrot.slane %v296, 2
    %v348 = vrot.slane %v299, 2
    %v349 = vsel %vm346, %v347, %v348
    %v350 = vrot.slane %v304, 2
    %v351 = vrot.slane %v307, 2
    %v352 = vsel %vm346, %v350, %v351
    %v355 = vsel %vm346, %v348, 0.0
    %v356 = vsel %vm346, %v351, 0.0
    %359 = vrot.lane.b32.xlu0 %v349, 120
    %v360 = vpop.permute.xlu0 %359
    %361 = vrot.lane.b32.xlu0 %v355, 120
    %v362 = vpop.permute.xlu0 %361
    %363 = vrot.lane.b32.xlu0 %v352, 120
    %v364 = vpop.permute.xlu0 %363
    %365 = vrot.lane.b32.xlu0 %v356, 120
    %v366 = vpop.permute.xlu0 %365
    %v371 = vadd.f32 %v342, %v360
    %v372 = vadd.f32 %v343, %v362
    %v373 = vadd.f32 %v344, %v364
    %v374 = vadd.f32 %v345, %v366
    %v375 = vlaneseq
    %v376 = vshrl.u32 %v375, 7
    %v377 = vsub.s32 0, %v376
    %v378 = vrot.slane %v76, %v377
    %v379 = vadd.f32 %v371, %v378
    %v380 = vadd.f32 %v372, %v378
    %v381 = vadd.f32 %v373, %v378
    %v382 = vadd.f32 %v374, %v378
    %v383 = vmax.f32 %v379, 0.0
    %v384 = vmax.f32 %v380, 0.0
    %v385 = vmax.f32 %v381, 0.0
    %v386 = vmax.f32 %v382, 0.0
    %v387 = vsel %vm250, %v383, 0.0
    %v388 = vsel %vm250, %v384, 0.0
    %v389 = vadd.f32 %v387, %v388
    %v390 = vsel %vm250, %v385, 0.0
    %v391 = vadd.f32 %v389, %v390
    %v392 = vsel %vm250, %v386, 0.0
    %v393 = vadd.f32 %v391, %v392
    %v394 = vrot.slane %v393, 4
    %v395 = vadd.f32 %v393, %v394
    %v396 = vrot.slane %v395, 2
    %v397 = vadd.f32 %v395, %v396
    %v398 = vrot.slane %v397, 1
    %v399 = vadd.f32 %v397, %v398
    %v400 = vmul.f32 %v399, %v197
    %v401 = vmul.f32 %v383, %v383
    %v402 = vmul.f32 %v384, %v384
    %v403 = vmul.f32 %v385, %v385
    %v404 = vmul.f32 %v386, %v386
    %v405 = vsel %vm250, %v401, 0.0
    %v406 = vsel %vm250, %v402, 0.0
    %v407 = vadd.f32 %v405, %v406
    %v408 = vsel %vm250, %v403, 0.0
    %v409 = vadd.f32 %v407, %v408
    %v410 = vsel %vm250, %v404, 0.0
    %v411 = vadd.f32 %v409, %v410
    %v412 = vrot.slane %v411, 4
    %v413 = vadd.f32 %v411, %v412
    %v414 = vrot.slane %v413, 2
    %v415 = vadd.f32 %v413, %v414
    %v416 = vrot.slane %v415, 1
    %v417 = vadd.f32 %v415, %v416
    %v418 = vmul.f32 %v417, %v197
    %v419 = vmul.f32 %v400, %v400
    %v420 = vsub.f32 %v418, %v419
    %v421 = vadd.f32 %v420, 1e-05
    %v422 = vrsqrt.pop %v421
    %v423 = vmul.f32 %v77, %v422
    %v424 = vlaneseq
    %v425 = vshrl.u32 %v424, 7
    %v426 = vsub.s32 0, %v425
    %v427 = vrot.slane %v423, %v426
    %v428 = vmul.f32 %v383, %v427
    %v429 = vmul.f32 %v384, %v427
    %v430 = vmul.f32 %v385, %v427
    %v431 = vmul.f32 %v386, %v427
    %v432 = vmul.f32 %v400, %v423
    %v433 = vsub.f32 %v78, %v432
    %v434 = vlaneseq
    %v435 = vshrl.u32 %v434, 7
    %v436 = vsub.s32 0, %v435
    %v437 = vrot.slane %v433, %v436
    %v438 = vadd.f32 %v428, %v437
    %v439 = vadd.f32 %v429, %v437
    %v440 = vadd.f32 %v430, %v437
    %v441 = vadd.f32 %v431, %v437
    %v442 = vpack.c.bf16 %v439, %v438
    %v443 = vpack.c.bf16 %v441, %v440
    %448 = vrot.lane.b32.xlu0 %v244, 124
    %v449 = vpop.permute.xlu0 %448
    %450 = vrot.lane.b32.xlu0 %v245, 124
    %v451 = vpop.permute.xlu0 %450
    %452 = vrot.lane.b32.xlu0 %v246, 124
    %v453 = vpop.permute.xlu0 %452
    %454 = vrot.lane.b32.xlu0 %v247, 124
    %v455 = vpop.permute.xlu0 %454
    %v460 = vadd.f32 %v438, %v449
    %v461 = vadd.f32 %v439, %v451
    %v462 = vadd.f32 %v440, %v453
    %v463 = vadd.f32 %v441, %v455
    %v464 = vpack.c.bf16 %v461, %v460
    %v465 = vpack.c.bf16 %v463, %v462
    %v467 = vsel %vm250, %v464, 0
    %v470 = vsel %vm250, %v465, 0
    %v473 = vsel %vm257, %v70, 0
    %475 = vmatprep.subr.bf16.mxu0 0
    %476 = vmatpush1.bf16.msra.mxu0 %v473
    %477 = vmatprep.subr.bf16.mxu0 0
    %478 = vmatpush1.bf16.msra.mxu0 0
    %479 = vmatprep.subr.bf16.mxu0 0
    %480 = vmatpush1.bf16.msra.mxu0 0
    %481 = vmatprep.subr.bf16.mxu0 0
    %482 = vmatpush1.bf16.msra.mxu0 0
    %483 = vmatprep.subr.bf16.mxu0 0
    %484 = vmatpush1.bf16.msra.mxu0 0
    %485 = vmatprep.subr.bf16.mxu0 0
    %486 = vmatpush1.bf16.msra.mxu0 0
    %487 = vmatprep.subr.bf16.mxu0 0
    %488 = vmatpush1.bf16.msra.mxu0 0
    %489 = vmatprep.subr.bf16.mxu0 0
    %490 = vmatpush1.bf16.msra.mxu0 0
    %491 = vmatprep.subr.bf16.mxu0 0
    %492 = vmatpush1.bf16.msra.mxu0 0
    %493 = vmatprep.subr.bf16.mxu0 0
    %494 = vmatpush1.bf16.msra.mxu0 0
    %495 = vmatprep.subr.bf16.mxu0 0
    %496 = vmatpush1.bf16.msra.mxu0 0
    %497 = vmatprep.subr.bf16.mxu0 0
    %498 = vmatpush1.bf16.msra.mxu0 0
    %499 = vmatprep.subr.bf16.mxu0 0
    %500 = vmatpush1.bf16.msra.mxu0 0
    %501 = vmatprep.subr.bf16.mxu0 0
    %502 = vmatpush1.bf16.msra.mxu0 0
    %503 = vmatprep.subr.bf16.mxu0 0
    %504 = vmatpush1.bf16.msra.mxu0 0
    %505 = vmatprep.subr.bf16.mxu0 0
    %506 = vmatpush1.bf16.msra.mxu0 0
    %507 = vmatprep.mubr.bf16.mxu0 0
    %508 = vmatmul.mubr.bf16.gmra.mrb[0].mxu0 %v467
    %v509 = vpop.f32.mrb[0].mxu0
    %v510 = vadd.f32 0.0, %v509
    %v511 = vpop.f32.mrb[0].mxu0
    %v512 = vpop.f32.mrb[0].mxu0
    %v513 = vadd.f32 0.0, %v512
    %v514 = vpop.f32.mrb[0].mxu0
    %515 = vmatprep.mubr.bf16.mxu0 0
    %516 = vmatmul.mubr.bf16.gmra.mrb[0].mxu0 %v470
    %v517 = vpop.f32.mrb[0].mxu0
    %v518 = vadd.f32 0.0, %v517
    %v519 = vpop.f32.mrb[0].mxu0
    %v520 = vpop.f32.mrb[0].mxu0
    %v521 = vadd.f32 0.0, %v520
    %v522 = vpop.f32.mrb[0].mxu0
    %523 = vdwg.mxu0
    %v528 = vrot.slane %v510, 6
    %v529 = vrot.slane %v513, 6
    %v530 = vsel %vm257, %v528, %v529
    %v531 = vrot.slane %v518, 6
    %v532 = vrot.slane %v521, 6
    %v533 = vsel %vm257, %v531, %v532
    %v538 = vsel %vm257, 0.0, %v528
    %v539 = vsel %vm257, 0.0, %v531
    %v540 = vadd.f32 %v538, 0.0
    %v541 = vadd.f32 %v530, 0.0
    %v542 = vadd.f32 %v539, 0.0
    %v543 = vadd.f32 %v533, 0.0
    %544 = vrot.lane.b32.xlu0 %v510, 124
    %v545 = vpop.permute.xlu0 %544
    %546 = vrot.lane.b32.xlu0 %v513, 124
    %v547 = vpop.permute.xlu0 %546
    %548 = vrot.lane.b32.xlu0 %v518, 124
    %v549 = vpop.permute.xlu0 %548
    %550 = vrot.lane.b32.xlu0 %v521, 124
    %v551 = vpop.permute.xlu0 %550
    %v556 = vadd.f32 %v540, %v545
    %v557 = vadd.f32 %v541, %v547
    %v558 = vadd.f32 %v542, %v549
    %v559 = vadd.f32 %v543, %v551
    %v560 = vrot.slane %v510, 2
    %v561 = vrot.slane %v513, 2
    %v562 = vsel %vm346, %v560, %v561
    %v563 = vrot.slane %v518, 2
    %v564 = vrot.slane %v521, 2
    %v565 = vsel %vm346, %v563, %v564
    %v568 = vsel %vm346, %v561, 0.0
    %v569 = vsel %vm346, %v564, 0.0
    %572 = vrot.lane.b32.xlu0 %v562, 120
    %v573 = vpop.permute.xlu0 %572
    %574 = vrot.lane.b32.xlu0 %v568, 120
    %v575 = vpop.permute.xlu0 %574
    %576 = vrot.lane.b32.xlu0 %v565, 120
    %v577 = vpop.permute.xlu0 %576
    %578 = vrot.lane.b32.xlu0 %v569, 120
    %v579 = vpop.permute.xlu0 %578
    %v584 = vadd.f32 %v556, %v573
    %v585 = vadd.f32 %v557, %v575
    %v586 = vadd.f32 %v558, %v577
    %v587 = vadd.f32 %v559, %v579
    %v588 = vlaneseq
    %v589 = vshrl.u32 %v588, 7
    %v590 = vsub.s32 1, %v589
    %v591 = vrot.slane %v76, %v590
    %v592 = vadd.f32 %v584, %v591
    %v593 = vadd.f32 %v585, %v591
    %v594 = vadd.f32 %v586, %v591
    %v595 = vadd.f32 %v587, %v591
    %v596 = vmax.f32 %v592, 0.0
    %v597 = vmax.f32 %v593, 0.0
    %v598 = vmax.f32 %v594, 0.0
    %v599 = vmax.f32 %v595, 0.0
    %v600 = vsel %vm250, %v596, 0.0
    %v601 = vsel %vm250, %v597, 0.0
    %v602 = vadd.f32 %v600, %v601
    %v603 = vsel %vm250, %v598, 0.0
    %v604 = vadd.f32 %v602, %v603
    %v605 = vsel %vm250, %v599, 0.0
    %v606 = vadd.f32 %v604, %v605
    %v607 = vrot.slane %v606, 4
    %v608 = vadd.f32 %v606, %v607
    %v609 = vrot.slane %v608, 2
    %v610 = vadd.f32 %v608, %v609
    %v611 = vrot.slane %v610, 1
    %v612 = vadd.f32 %v610, %v611
    %v613 = vmul.f32 %v612, %v197
    %v614 = vmul.f32 %v596, %v596
    %v615 = vmul.f32 %v597, %v597
    %v616 = vmul.f32 %v598, %v598
    %v617 = vmul.f32 %v599, %v599
    %v618 = vsel %vm250, %v614, 0.0
    %v619 = vsel %vm250, %v615, 0.0
    %v620 = vadd.f32 %v618, %v619
    %v621 = vsel %vm250, %v616, 0.0
    %v622 = vadd.f32 %v620, %v621
    %v623 = vsel %vm250, %v617, 0.0
    %v624 = vadd.f32 %v622, %v623
    %v625 = vrot.slane %v624, 4
    %v626 = vadd.f32 %v624, %v625
    %v627 = vrot.slane %v626, 2
    %v628 = vadd.f32 %v626, %v627
    %v629 = vrot.slane %v628, 1
    %v630 = vadd.f32 %v628, %v629
    %v631 = vmul.f32 %v630, %v197
    %v632 = vmul.f32 %v613, %v613
    %v633 = vsub.f32 %v631, %v632
    %v634 = vadd.f32 %v633, 1e-05
    %v635 = vrsqrt.pop %v634
    %v636 = vmul.f32 %v77, %v635
    %v637 = vlaneseq
    %v638 = vshrl.u32 %v637, 7
    %v639 = vsub.s32 1, %v638
    %v640 = vrot.slane %v636, %v639
    %v641 = vmul.f32 %v596, %v640
    %v642 = vmul.f32 %v597, %v640
    %v643 = vmul.f32 %v598, %v640
    %v644 = vmul.f32 %v599, %v640
    %v645 = vmul.f32 %v613, %v636
    %v646 = vsub.f32 %v78, %v645
    %v647 = vlaneseq
    %v648 = vshrl.u32 %v647, 7
    %v649 = vsub.s32 1, %v648
    %v650 = vrot.slane %v646, %v649
    %v651 = vadd.f32 %v641, %v650
    %v652 = vadd.f32 %v642, %v650
    %v653 = vadd.f32 %v643, %v650
    %v654 = vadd.f32 %v644, %v650
    %v655 = vpack.c.bf16 %v652, %v651
    %v656 = vpack.c.bf16 %v654, %v653
    %v658 = vunpack.c.l.b16 %v79
    %v659 = vpack.c.b16 %v658, %v658
    %v660 = vrot.slane %v659, 2
    %v662 = vsel %vm250, %v655, 0
    %v665 = vsel %vm250, %v656, 0
    %v668 = vsel %vm257, %v660, 0
    %670 = vmatprep.subr.bf16.mxu0 0
    %671 = vmatpush1.bf16.msra.mxu0 %v668
    %672 = vmatprep.subr.bf16.mxu0 0
    %673 = vmatpush1.bf16.msra.mxu0 0
    %674 = vmatprep.subr.bf16.mxu0 0
    %675 = vmatpush1.bf16.msra.mxu0 0
    %676 = vmatprep.subr.bf16.mxu0 0
    %677 = vmatpush1.bf16.msra.mxu0 0
    %678 = vmatprep.subr.bf16.mxu0 0
    %679 = vmatpush1.bf16.msra.mxu0 0
    %680 = vmatprep.subr.bf16.mxu0 0
    %681 = vmatpush1.bf16.msra.mxu0 0
    %682 = vmatprep.subr.bf16.mxu0 0
    %683 = vmatpush1.bf16.msra.mxu0 0
    %684 = vmatprep.subr.bf16.mxu0 0
    %685 = vmatpush1.bf16.msra.mxu0 0
    %686 = vmatprep.subr.bf16.mxu0 0
    %687 = vmatpush1.bf16.msra.mxu0 0
    %688 = vmatprep.subr.bf16.mxu0 0
    %689 = vmatpush1.bf16.msra.mxu0 0
    %690 = vmatprep.subr.bf16.mxu0 0
    %691 = vmatpush1.bf16.msra.mxu0 0
    %692 = vmatprep.subr.bf16.mxu0 0
    %693 = vmatpush1.bf16.msra.mxu0 0
    %694 = vmatprep.subr.bf16.mxu0 0
    %695 = vmatpush1.bf16.msra.mxu0 0
    %696 = vmatprep.subr.bf16.mxu0 0
    %697 = vmatpush1.bf16.msra.mxu0 0
    %698 = vmatprep.subr.bf16.mxu0 0
    %699 = vmatpush1.bf16.msra.mxu0 0
    %700 = vmatprep.subr.bf16.mxu0 0
    %701 = vmatpush1.bf16.msra.mxu0 0
    %702 = vmatprep.mubr.bf16.mxu0 0
    %703 = vmatmul.mubr.bf16.gmra.mrb[0].mxu0 %v662
    %v704 = vpop.f32.mrb[0].mxu0
    %v705 = vadd.f32 0.0, %v704
    %v706 = vpop.f32.mrb[0].mxu0
    %v707 = vpop.f32.mrb[0].mxu0
    %v708 = vadd.f32 0.0, %v707
    %v709 = vpop.f32.mrb[0].mxu0
    %710 = vmatprep.mubr.bf16.mxu0 0
    %711 = vmatmul.mubr.bf16.gmra.mrb[0].mxu0 %v665
    %v712 = vpop.f32.mrb[0].mxu0
    %v713 = vadd.f32 0.0, %v712
    %v714 = vpop.f32.mrb[0].mxu0
    %v715 = vpop.f32.mrb[0].mxu0
    %v716 = vadd.f32 0.0, %v715
    %v717 = vpop.f32.mrb[0].mxu0
    %718 = vdwg.mxu0
    %v720 = vsel %vm250, %v442, 0
    %v723 = vsel %vm250, %v443, 0
    %v726 = vsel %vm257, %v79, 0
    %728 = vmatprep.subr.bf16.mxu0 0
    %729 = vmatpush1.bf16.msra.mxu0 %v726
    %730 = vmatprep.subr.bf16.mxu0 0
    %731 = vmatpush1.bf16.msra.mxu0 0
    %732 = vmatprep.subr.bf16.mxu0 0
    %733 = vmatpush1.bf16.msra.mxu0 0
    %734 = vmatprep.subr.bf16.mxu0 0
    %735 = vmatpush1.bf16.msra.mxu0 0
    %736 = vmatprep.subr.bf16.mxu0 0
    %737 = vmatpush1.bf16.msra.mxu0 0
    %738 = vmatprep.subr.bf16.mxu0 0
    %739 = vmatpush1.bf16.msra.mxu0 0
    %740 = vmatprep.subr.bf16.mxu0 0
    %741 = vmatpush1.bf16.msra.mxu0 0
    %742 = vmatprep.subr.bf16.mxu0 0
    %743 = vmatpush1.bf16.msra.mxu0 0
    %744 = vmatprep.subr.bf16.mxu0 0
    %745 = vmatpush1.bf16.msra.mxu0 0
    %746 = vmatprep.subr.bf16.mxu0 0
    %747 = vmatpush1.bf16.msra.mxu0 0
    %748 = vmatprep.subr.bf16.mxu0 0
    %749 = vmatpush1.bf16.msra.mxu0 0
    %750 = vmatprep.subr.bf16.mxu0 0
    %751 = vmatpush1.bf16.msra.mxu0 0
    %752 = vmatprep.subr.bf16.mxu0 0
    %753 = vmatpush1.bf16.msra.mxu0 0
    %754 = vmatprep.subr.bf16.mxu0 0
    %755 = vmatpush1.bf16.msra.mxu0 0
    %756 = vmatprep.subr.bf16.mxu0 0
    %757 = vmatpush1.bf16.msra.mxu0 0
    %758 = vmatprep.subr.bf16.mxu0 0
    %759 = vmatpush1.bf16.msra.mxu0 0
    %760 = vmatprep.mubr.bf16.mxu0 0
    %761 = vmatmul.mubr.bf16.gmra.mrb[0].mxu0 %v720
    %v762 = vpop.f32.mrb[0].mxu0
    %v763 = vadd.f32 %v705, %v762
    %v764 = vpop.f32.mrb[0].mxu0
    %v765 = vpop.f32.mrb[0].mxu0
    %v766 = vadd.f32 %v708, %v765
    %v767 = vpop.f32.mrb[0].mxu0
    %768 = vmatprep.mubr.bf16.mxu0 0
    %769 = vmatmul.mubr.bf16.gmra.mrb[0].mxu0 %v723
    %v770 = vpop.f32.mrb[0].mxu0
    %v771 = vadd.f32 %v713, %v770
    %v772 = vpop.f32.mrb[0].mxu0
    %v773 = vpop.f32.mrb[0].mxu0
    %v774 = vadd.f32 %v716, %v773
    %v775 = vpop.f32.mrb[0].mxu0
    %776 = vdwg.mxu0
    %777 = vrot.lane.b32.xlu0 %v244, 120
    %v778 = vpop.permute.xlu0 %777
    %779 = vrot.lane.b32.xlu0 %v245, 120
    %v780 = vpop.permute.xlu0 %779
    %781 = vrot.lane.b32.xlu0 %v246, 120
    %v782 = vpop.permute.xlu0 %781
    %783 = vrot.lane.b32.xlu0 %v247, 120
    %v784 = vpop.permute.xlu0 %783
    %v789 = vadd.f32 %v651, %v778
    %v790 = vadd.f32 %v652, %v780
    %v791 = vadd.f32 %v653, %v782
    %v792 = vadd.f32 %v654, %v784
    %v793 = vpack.c.bf16 %v790, %v789
    %v794 = vpack.c.bf16 %v792, %v791
    %v796 = vsel %vm250, %v793, 0
    %v799 = vsel %vm250, %v794, 0
    %v802 = vsel %vm257, %v71, 0
    %804 = vmatprep.subr.bf16.mxu0 0
    %805 = vmatpush1.bf16.msra.mxu0 %v802
    %806 = vmatprep.subr.bf16.mxu0 0
    %807 = vmatpush1.bf16.msra.mxu0 0
    %808 = vmatprep.subr.bf16.mxu0 0
    %809 = vmatpush1.bf16.msra.mxu0 0
    %810 = vmatprep.subr.bf16.mxu0 0
    %811 = vmatpush1.bf16.msra.mxu0 0
    %812 = vmatprep.subr.bf16.mxu0 0
    %813 = vmatpush1.bf16.msra.mxu0 0
    %814 = vmatprep.subr.bf16.mxu0 0
    %815 = vmatpush1.bf16.msra.mxu0 0
    %816 = vmatprep.subr.bf16.mxu0 0
    %817 = vmatpush1.bf16.msra.mxu0 0
    %818 = vmatprep.subr.bf16.mxu0 0
    %819 = vmatpush1.bf16.msra.mxu0 0
    %820 = vmatprep.subr.bf16.mxu0 0
    %821 = vmatpush1.bf16.msra.mxu0 0
    %822 = vmatprep.subr.bf16.mxu0 0
    %823 = vmatpush1.bf16.msra.mxu0 0
    %824 = vmatprep.subr.bf16.mxu0 0
    %825 = vmatpush1.bf16.msra.mxu0 0
    %826 = vmatprep.subr.bf16.mxu0 0
    %827 = vmatpush1.bf16.msra.mxu0 0
    %828 = vmatprep.subr.bf16.mxu0 0
    %829 = vmatpush1.bf16.msra.mxu0 0
    %830 = vmatprep.subr.bf16.mxu0 0
    %831 = vmatpush1.bf16.msra.mxu0 0
    %832 = vmatprep.subr.bf16.mxu0 0
    %833 = vmatpush1.bf16.msra.mxu0 0
    %834 = vmatprep.subr.bf16.mxu0 0
    %835 = vmatpush1.bf16.msra.mxu0 0
    %836 = vmatprep.mubr.bf16.mxu0 0
    %837 = vmatmul.mubr.bf16.gmra.mrb[0].mxu0 %v796
    %v838 = vpop.f32.mrb[0].mxu0
    %v839 = vadd.f32 0.0, %v838
    %v840 = vpop.f32.mrb[0].mxu0
    %v841 = vpop.f32.mrb[0].mxu0
    %v842 = vadd.f32 0.0, %v841
    %v843 = vpop.f32.mrb[0].mxu0
    %844 = vmatprep.mubr.bf16.mxu0 0
    %845 = vmatmul.mubr.bf16.gmra.mrb[0].mxu0 %v799
    %v846 = vpop.f32.mrb[0].mxu0
    %v847 = vadd.f32 0.0, %v846
    %v848 = vpop.f32.mrb[0].mxu0
    %v849 = vpop.f32.mrb[0].mxu0
    %v850 = vadd.f32 0.0, %v849
    %v851 = vpop.f32.mrb[0].mxu0
    %852 = vdwg.mxu0
    %v857 = vrot.slane %v839, 6
    %v858 = vrot.slane %v842, 6
    %v859 = vsel %vm257, %v857, %v858
    %v860 = vrot.slane %v847, 6
    %v861 = vrot.slane %v850, 6
    %v862 = vsel %vm257, %v860, %v861
    %v867 = vsel %vm257, 0.0, %v857
    %v868 = vsel %vm257, 0.0, %v860
    %v869 = vadd.f32 %v867, 0.0
    %v870 = vadd.f32 %v859, 0.0
    %v871 = vadd.f32 %v868, 0.0
    %v872 = vadd.f32 %v862, 0.0
    %873 = vrot.lane.b32.xlu0 %v839, 124
    %v874 = vpop.permute.xlu0 %873
    %875 = vrot.lane.b32.xlu0 %v842, 124
    %v876 = vpop.permute.xlu0 %875
    %877 = vrot.lane.b32.xlu0 %v847, 124
    %v878 = vpop.permute.xlu0 %877
    %879 = vrot.lane.b32.xlu0 %v850, 124
    %v880 = vpop.permute.xlu0 %879
    %v885 = vadd.f32 %v869, %v874
    %v886 = vadd.f32 %v870, %v876
    %v887 = vadd.f32 %v871, %v878
    %v888 = vadd.f32 %v872, %v880
    %v889 = vrot.slane %v839, 2
    %v890 = vrot.slane %v842, 2
    %v891 = vsel %vm346, %v889, %v890
    %v892 = vrot.slane %v847, 2
    %v893 = vrot.slane %v850, 2
    %v894 = vsel %vm346, %v892, %v893
    %v897 = vsel %vm346, %v890, 0.0
    %v898 = vsel %vm346, %v893, 0.0
    %901 = vrot.lane.b32.xlu0 %v891, 120
    %v902 = vpop.permute.xlu0 %901
    %903 = vrot.lane.b32.xlu0 %v897, 120
    %v904 = vpop.permute.xlu0 %903
    %905 = vrot.lane.b32.xlu0 %v894, 120
    %v906 = vpop.permute.xlu0 %905
    %907 = vrot.lane.b32.xlu0 %v898, 120
    %v908 = vpop.permute.xlu0 %907
    %v913 = vadd.f32 %v885, %v902
    %v914 = vadd.f32 %v886, %v904
    %v915 = vadd.f32 %v887, %v906
    %v916 = vadd.f32 %v888, %v908
    %v917 = vlaneseq
    %v918 = vshrl.u32 %v917, 7
    %v919 = vsub.s32 2, %v918
    %v920 = vrot.slane %v76, %v919
    %v921 = vadd.f32 %v913, %v920
    %v922 = vadd.f32 %v914, %v920
    %v923 = vadd.f32 %v915, %v920
    %v924 = vadd.f32 %v916, %v920
    %v925 = vmax.f32 %v921, 0.0
    %v926 = vmax.f32 %v922, 0.0
    %v927 = vmax.f32 %v923, 0.0
    %v928 = vmax.f32 %v924, 0.0
    %v929 = vsel %vm250, %v925, 0.0
    %v930 = vsel %vm250, %v926, 0.0
    %v931 = vadd.f32 %v929, %v930
    %v932 = vsel %vm250, %v927, 0.0
    %v933 = vadd.f32 %v931, %v932
    %v934 = vsel %vm250, %v928, 0.0
    %v935 = vadd.f32 %v933, %v934
    %v936 = vrot.slane %v935, 4
    %v937 = vadd.f32 %v935, %v936
    %v938 = vrot.slane %v937, 2
    %v939 = vadd.f32 %v937, %v938
    %v940 = vrot.slane %v939, 1
    %v941 = vadd.f32 %v939, %v940
    %v942 = vmul.f32 %v941, %v197
    %v943 = vmul.f32 %v925, %v925
    %v944 = vmul.f32 %v926, %v926
    %v945 = vmul.f32 %v927, %v927
    %v946 = vmul.f32 %v928, %v928
    %v947 = vsel %vm250, %v943, 0.0
    %v948 = vsel %vm250, %v944, 0.0
    %v949 = vadd.f32 %v947, %v948
    %v950 = vsel %vm250, %v945, 0.0
    %v951 = vadd.f32 %v949, %v950
    %v952 = vsel %vm250, %v946, 0.0
    %v953 = vadd.f32 %v951, %v952
    %v954 = vrot.slane %v953, 4
    %v955 = vadd.f32 %v953, %v954
    %v956 = vrot.slane %v955, 2
    %v957 = vadd.f32 %v955, %v956
    %v958 = vrot.slane %v957, 1
    %v959 = vadd.f32 %v957, %v958
    %v960 = vmul.f32 %v959, %v197
    %v961 = vmul.f32 %v942, %v942
    %v962 = vsub.f32 %v960, %v961
    %v963 = vadd.f32 %v962, 1e-05
    %v964 = vrsqrt.pop %v963
    %v965 = vmul.f32 %v77, %v964
    %v966 = vlaneseq
    %v967 = vshrl.u32 %v966, 7
    %v968 = vsub.s32 2, %v967
    %v969 = vrot.slane %v965, %v968
    %v970 = vmul.f32 %v925, %v969
    %v971 = vmul.f32 %v926, %v969
    %v972 = vmul.f32 %v927, %v969
    %v973 = vmul.f32 %v928, %v969
    %v974 = vmul.f32 %v942, %v965
    %v975 = vsub.f32 %v78, %v974
    %v976 = vlaneseq
    %v977 = vshrl.u32 %v976, 7
    %v978 = vsub.s32 2, %v977
    %v979 = vrot.slane %v975, %v978
    %v980 = vadd.f32 %v970, %v979
    %v981 = vadd.f32 %v971, %v979
    %v982 = vadd.f32 %v972, %v979
    %v983 = vadd.f32 %v973, %v979
    %v984 = vpack.c.bf16 %v981, %v980
    %v985 = vpack.c.bf16 %v983, %v982
    %v987 = vsel %vm250, %v984, 0
    %v990 = vsel %vm250, %v985, 0
    %v993 = vsel %vm257, %v80, 0
    %995 = vmatprep.subr.bf16.mxu0 0
    %996 = vmatpush1.bf16.msra.mxu0 %v993
    %997 = vmatprep.subr.bf16.mxu0 0
    %998 = vmatpush1.bf16.msra.mxu0 0
    %999 = vmatprep.subr.bf16.mxu0 0
    %1000 = vmatpush1.bf16.msra.mxu0 0
    %1001 = vmatprep.subr.bf16.mxu0 0
    %1002 = vmatpush1.bf16.msra.mxu0 0
    %1003 = vmatprep.subr.bf16.mxu0 0
    %1004 = vmatpush1.bf16.msra.mxu0 0
    %1005 = vmatprep.subr.bf16.mxu0 0
    %1006 = vmatpush1.bf16.msra.mxu0 0
    %1007 = vmatprep.subr.bf16.mxu0 0
    %1008 = vmatpush1.bf16.msra.mxu0 0
    %1009 = vmatprep.subr.bf16.mxu0 0
    %1010 = vmatpush1.bf16.msra.mxu0 0
    %1011 = vmatprep.subr.bf16.mxu0 0
    %1012 = vmatpush1.bf16.msra.mxu0 0
    %1013 = vmatprep.subr.bf16.mxu0 0
    %1014 = vmatpush1.bf16.msra.mxu0 0
    %1015 = vmatprep.subr.bf16.mxu0 0
    %1016 = vmatpush1.bf16.msra.mxu0 0
    %1017 = vmatprep.subr.bf16.mxu0 0
    %1018 = vmatpush1.bf16.msra.mxu0 0
    %1019 = vmatprep.subr.bf16.mxu0 0
    %1020 = vmatpush1.bf16.msra.mxu0 0
    %1021 = vmatprep.subr.bf16.mxu0 0
    %1022 = vmatpush1.bf16.msra.mxu0 0
    %1023 = vmatprep.subr.bf16.mxu0 0
    %1024 = vmatpush1.bf16.msra.mxu0 0
    %1025 = vmatprep.subr.bf16.mxu0 0
    %1026 = vmatpush1.bf16.msra.mxu0 0
    %1027 = vmatprep.mubr.bf16.mxu0 0
    %1028 = vmatmul.mubr.bf16.gmra.mrb[0].mxu0 %v987
    %v1029 = vpop.f32.mrb[0].mxu0
    %v1030 = vadd.f32 0.0, %v1029
    %v1031 = vpop.f32.mrb[0].mxu0
    %v1032 = vpop.f32.mrb[0].mxu0
    %v1033 = vadd.f32 0.0, %v1032
    %v1034 = vpop.f32.mrb[0].mxu0
    %1035 = vmatprep.mubr.bf16.mxu0 0
    %1036 = vmatmul.mubr.bf16.gmra.mrb[0].mxu0 %v990
    %v1037 = vpop.f32.mrb[0].mxu0
    %v1038 = vadd.f32 0.0, %v1037
    %v1039 = vpop.f32.mrb[0].mxu0
    %v1040 = vpop.f32.mrb[0].mxu0
    %v1041 = vadd.f32 0.0, %v1040
    %v1042 = vpop.f32.mrb[0].mxu0
    %1043 = vdwg.mxu0
    %v1044 = vadd.f32 %v763, %v1030
    %v1045 = vadd.f32 %v766, %v1033
    %v1046 = vadd.f32 %v771, %v1038
    %v1047 = vadd.f32 %v774, %v1041
    %1048 = vrot.lane.b32.xlu0 %v244, 116
    %v1049 = vpop.permute.xlu0 %1048
    %1050 = vrot.lane.b32.xlu0 %v245, 116
    %v1051 = vpop.permute.xlu0 %1050
    %1052 = vrot.lane.b32.xlu0 %v246, 116
    %v1053 = vpop.permute.xlu0 %1052
    %1054 = vrot.lane.b32.xlu0 %v247, 116
    %v1055 = vpop.permute.xlu0 %1054
    %v1060 = vadd.f32 %v980, %v1049
    %v1061 = vadd.f32 %v981, %v1051
    %v1062 = vadd.f32 %v982, %v1053
    %v1063 = vadd.f32 %v983, %v1055
    %v1064 = vpack.c.bf16 %v1061, %v1060
    %v1065 = vpack.c.bf16 %v1063, %v1062
    %v1067 = vsel %vm250, %v1064, 0
    %v1070 = vsel %vm250, %v1065, 0
    %v1073 = vsel %vm257, %v72, 0
    %1075 = vmatprep.subr.bf16.mxu0 0
    %1076 = vmatpush1.bf16.msra.mxu0 %v1073
    %1077 = vmatprep.subr.bf16.mxu0 0
    %1078 = vmatpush1.bf16.msra.mxu0 0
    %1079 = vmatprep.subr.bf16.mxu0 0
    %1080 = vmatpush1.bf16.msra.mxu0 0
    %1081 = vmatprep.subr.bf16.mxu0 0
    %1082 = vmatpush1.bf16.msra.mxu0 0
    %1083 = vmatprep.subr.bf16.mxu0 0
    %1084 = vmatpush1.bf16.msra.mxu0 0
    %1085 = vmatprep.subr.bf16.mxu0 0
    %1086 = vmatpush1.bf16.msra.mxu0 0
    %1087 = vmatprep.subr.bf16.mxu0 0
    %1088 = vmatpush1.bf16.msra.mxu0 0
    %1089 = vmatprep.subr.bf16.mxu0 0
    %1090 = vmatpush1.bf16.msra.mxu0 0
    %1091 = vmatprep.subr.bf16.mxu0 0
    %1092 = vmatpush1.bf16.msra.mxu0 0
    %1093 = vmatprep.subr.bf16.mxu0 0
    %1094 = vmatpush1.bf16.msra.mxu0 0
    %1095 = vmatprep.subr.bf16.mxu0 0
    %1096 = vmatpush1.bf16.msra.mxu0 0
    %1097 = vmatprep.subr.bf16.mxu0 0
    %1098 = vmatpush1.bf16.msra.mxu0 0
    %1099 = vmatprep.subr.bf16.mxu0 0
    %1100 = vmatpush1.bf16.msra.mxu0 0
    %1101 = vmatprep.subr.bf16.mxu0 0
    %1102 = vmatpush1.bf16.msra.mxu0 0
    %1103 = vmatprep.subr.bf16.mxu0 0
    %1104 = vmatpush1.bf16.msra.mxu0 0
    %1105 = vmatprep.subr.bf16.mxu0 0
    %1106 = vmatpush1.bf16.msra.mxu0 0
    %1107 = vmatprep.mubr.bf16.mxu0 0
    %1108 = vmatmul.mubr.bf16.gmra.mrb[0].mxu0 %v1067
    %v1109 = vpop.f32.mrb[0].mxu0
    %v1110 = vadd.f32 0.0, %v1109
    %v1111 = vpop.f32.mrb[0].mxu0
    %v1112 = vpop.f32.mrb[0].mxu0
    %v1113 = vadd.f32 0.0, %v1112
    %v1114 = vpop.f32.mrb[0].mxu0
    %1115 = vmatprep.mubr.bf16.mxu0 0
    %1116 = vmatmul.mubr.bf16.gmra.mrb[0].mxu0 %v1070
    %v1117 = vpop.f32.mrb[0].mxu0
    %v1118 = vadd.f32 0.0, %v1117
    %v1119 = vpop.f32.mrb[0].mxu0
    %v1120 = vpop.f32.mrb[0].mxu0
    %v1121 = vadd.f32 0.0, %v1120
    %v1122 = vpop.f32.mrb[0].mxu0
    %1123 = vdwg.mxu0
    %v1128 = vrot.slane %v1110, 6
    %v1129 = vrot.slane %v1113, 6
    %v1130 = vsel %vm257, %v1128, %v1129
    %v1131 = vrot.slane %v1118, 6
    %v1132 = vrot.slane %v1121, 6
    %v1133 = vsel %vm257, %v1131, %v1132
    %v1138 = vsel %vm257, 0.0, %v1128
    %v1139 = vsel %vm257, 0.0, %v1131
    %v1140 = vadd.f32 %v1138, 0.0
    %v1141 = vadd.f32 %v1130, 0.0
    %v1142 = vadd.f32 %v1139, 0.0
    %v1143 = vadd.f32 %v1133, 0.0
    %1144 = vrot.lane.b32.xlu0 %v1110, 124
    %v1145 = vpop.permute.xlu0 %1144
    %1146 = vrot.lane.b32.xlu0 %v1113, 124
    %v1147 = vpop.permute.xlu0 %1146
    %1148 = vrot.lane.b32.xlu0 %v1118, 124
    %v1149 = vpop.permute.xlu0 %1148
    %1150 = vrot.lane.b32.xlu0 %v1121, 124
    %v1151 = vpop.permute.xlu0 %1150
    %v1156 = vadd.f32 %v1140, %v1145
    %v1157 = vadd.f32 %v1141, %v1147
    %v1158 = vadd.f32 %v1142, %v1149
    %v1159 = vadd.f32 %v1143, %v1151
    %v1160 = vrot.slane %v1110, 2
    %v1161 = vrot.slane %v1113, 2
    %v1162 = vsel %vm346, %v1160, %v1161
    %v1163 = vrot.slane %v1118, 2
    %v1164 = vrot.slane %v1121, 2
    %v1165 = vsel %vm346, %v1163, %v1164
    %v1168 = vsel %vm346, %v1161, 0.0
    %v1169 = vsel %vm346, %v1164, 0.0
    %1172 = vrot.lane.b32.xlu0 %v1162, 120
    %v1173 = vpop.permute.xlu0 %1172
    %1174 = vrot.lane.b32.xlu0 %v1168, 120
    %v1175 = vpop.permute.xlu0 %1174
    %1176 = vrot.lane.b32.xlu0 %v1165, 120
    %v1177 = vpop.permute.xlu0 %1176
    %1178 = vrot.lane.b32.xlu0 %v1169, 120
    %v1179 = vpop.permute.xlu0 %1178
    %v1184 = vadd.f32 %v1156, %v1173
    %v1185 = vadd.f32 %v1157, %v1175
    %v1186 = vadd.f32 %v1158, %v1177
    %v1187 = vadd.f32 %v1159, %v1179
    %v1188 = vlaneseq
    %v1189 = vshrl.u32 %v1188, 7
    %v1190 = vsub.s32 3, %v1189
    %v1191 = vrot.slane %v76, %v1190
    %v1192 = vadd.f32 %v1184, %v1191
    %v1193 = vadd.f32 %v1185, %v1191
    %v1194 = vadd.f32 %v1186, %v1191
    %v1195 = vadd.f32 %v1187, %v1191
    %v1196 = vmax.f32 %v1192, 0.0
    %v1197 = vmax.f32 %v1193, 0.0
    %v1198 = vmax.f32 %v1194, 0.0
    %v1199 = vmax.f32 %v1195, 0.0
    %v1200 = vsel %vm250, %v1196, 0.0
    %v1201 = vsel %vm250, %v1197, 0.0
    %v1202 = vadd.f32 %v1200, %v1201
    %v1203 = vsel %vm250, %v1198, 0.0
    %v1204 = vadd.f32 %v1202, %v1203
    %v1205 = vsel %vm250, %v1199, 0.0
    %v1206 = vadd.f32 %v1204, %v1205
    %v1207 = vrot.slane %v1206, 4
    %v1208 = vadd.f32 %v1206, %v1207
    %v1209 = vrot.slane %v1208, 2
    %v1210 = vadd.f32 %v1208, %v1209
    %v1211 = vrot.slane %v1210, 1
    %v1212 = vadd.f32 %v1210, %v1211
    %v1213 = vmul.f32 %v1212, %v197
    %v1214 = vmul.f32 %v1196, %v1196
    %v1215 = vmul.f32 %v1197, %v1197
    %v1216 = vmul.f32 %v1198, %v1198
    %v1217 = vmul.f32 %v1199, %v1199
    %v1218 = vsel %vm250, %v1214, 0.0
    %v1219 = vsel %vm250, %v1215, 0.0
    %v1220 = vadd.f32 %v1218, %v1219
    %v1221 = vsel %vm250, %v1216, 0.0
    %v1222 = vadd.f32 %v1220, %v1221
    %v1223 = vsel %vm250, %v1217, 0.0
    %v1224 = vadd.f32 %v1222, %v1223
    %v1225 = vrot.slane %v1224, 4
    %v1226 = vadd.f32 %v1224, %v1225
    %v1227 = vrot.slane %v1226, 2
    %v1228 = vadd.f32 %v1226, %v1227
    %v1229 = vrot.slane %v1228, 1
    %v1230 = vadd.f32 %v1228, %v1229
    %v1231 = vmul.f32 %v1230, %v197
    %v1232 = vmul.f32 %v1213, %v1213
    %v1233 = vsub.f32 %v1231, %v1232
    %v1234 = vadd.f32 %v1233, 1e-05
    %v1235 = vrsqrt.pop %v1234
    %v1236 = vmul.f32 %v77, %v1235
    %v1237 = vlaneseq
    %v1238 = vshrl.u32 %v1237, 7
    %v1239 = vsub.s32 3, %v1238
    %v1240 = vrot.slane %v1236, %v1239
    %v1241 = vmul.f32 %v1196, %v1240
    %v1242 = vmul.f32 %v1197, %v1240
    %v1243 = vmul.f32 %v1198, %v1240
    %v1244 = vmul.f32 %v1199, %v1240
    %v1245 = vmul.f32 %v1213, %v1236
    %v1246 = vsub.f32 %v78, %v1245
    %v1247 = vlaneseq
    %v1248 = vshrl.u32 %v1247, 7
    %v1249 = vsub.s32 3, %v1248
    %v1250 = vrot.slane %v1246, %v1249
    %v1251 = vadd.f32 %v1241, %v1250
    %v1252 = vadd.f32 %v1242, %v1250
    %v1253 = vadd.f32 %v1243, %v1250
    %v1254 = vadd.f32 %v1244, %v1250
    %v1255 = vpack.c.bf16 %v1252, %v1251
    %v1256 = vpack.c.bf16 %v1254, %v1253
    %v1258 = vunpack.c.l.b16 %v80
    %v1259 = vpack.c.b16 %v1258, %v1258
    %v1260 = vrot.slane %v1259, 2
    %v1262 = vsel %vm250, %v1255, 0
    %v1265 = vsel %vm250, %v1256, 0
    %v1268 = vsel %vm257, %v1260, 0
    %1270 = vmatprep.subr.bf16.mxu0 0
    %1271 = vmatpush1.bf16.msra.mxu0 %v1268
    %1272 = vmatprep.subr.bf16.mxu0 0
    %1273 = vmatpush1.bf16.msra.mxu0 0
    %1274 = vmatprep.subr.bf16.mxu0 0
    %1275 = vmatpush1.bf16.msra.mxu0 0
    %1276 = vmatprep.subr.bf16.mxu0 0
    %1277 = vmatpush1.bf16.msra.mxu0 0
    %1278 = vmatprep.subr.bf16.mxu0 0
    %1279 = vmatpush1.bf16.msra.mxu0 0
    %1280 = vmatprep.subr.bf16.mxu0 0
    %1281 = vmatpush1.bf16.msra.mxu0 0
    %1282 = vmatprep.subr.bf16.mxu0 0
    %1283 = vmatpush1.bf16.msra.mxu0 0
    %1284 = vmatprep.subr.bf16.mxu0 0
    %1285 = vmatpush1.bf16.msra.mxu0 0
    %1286 = vmatprep.subr.bf16.mxu0 0
    %1287 = vmatpush1.bf16.msra.mxu0 0
    %1288 = vmatprep.subr.bf16.mxu0 0
    %1289 = vmatpush1.bf16.msra.mxu0 0
    %1290 = vmatprep.subr.bf16.mxu0 0
    %1291 = vmatpush1.bf16.msra.mxu0 0
    %1292 = vmatprep.subr.bf16.mxu0 0
    %1293 = vmatpush1.bf16.msra.mxu0 0
    %1294 = vmatprep.subr.bf16.mxu0 0
    %1295 = vmatpush1.bf16.msra.mxu0 0
    %1296 = vmatprep.subr.bf16.mxu0 0
    %1297 = vmatpush1.bf16.msra.mxu0 0
    %1298 = vmatprep.subr.bf16.mxu0 0
    %1299 = vmatpush1.bf16.msra.mxu0 0
    %1300 = vmatprep.subr.bf16.mxu0 0
    %1301 = vmatpush1.bf16.msra.mxu0 0
    %1302 = vmatprep.mubr.bf16.mxu0 0
    %1303 = vmatmul.mubr.bf16.gmra.mrb[0].mxu0 %v1262
    %v1304 = vpop.f32.mrb[0].mxu0
    %v1305 = vadd.f32 0.0, %v1304
    %v1306 = vpop.f32.mrb[0].mxu0
    %v1307 = vpop.f32.mrb[0].mxu0
    %v1308 = vadd.f32 0.0, %v1307
    %v1309 = vpop.f32.mrb[0].mxu0
    %1310 = vmatprep.mubr.bf16.mxu0 0
    %1311 = vmatmul.mubr.bf16.gmra.mrb[0].mxu0 %v1265
    %v1312 = vpop.f32.mrb[0].mxu0
    %v1313 = vadd.f32 0.0, %v1312
    %v1314 = vpop.f32.mrb[0].mxu0
    %v1315 = vpop.f32.mrb[0].mxu0
    %v1316 = vadd.f32 0.0, %v1315
    %v1317 = vpop.f32.mrb[0].mxu0
    %1318 = vdwg.mxu0
    %v1319 = vadd.f32 %v1044, %v1305
    %v1320 = vadd.f32 %v1045, %v1308
    %v1321 = vadd.f32 %v1046, %v1313
    %v1322 = vadd.f32 %v1047, %v1316
    %1323 = vrot.lane.b32.xlu0 %v244, 112
    %v1324 = vpop.permute.xlu0 %1323
    %1325 = vrot.lane.b32.xlu0 %v245, 112
    %v1326 = vpop.permute.xlu0 %1325
    %1327 = vrot.lane.b32.xlu0 %v246, 112
    %v1328 = vpop.permute.xlu0 %1327
    %1329 = vrot.lane.b32.xlu0 %v247, 112
    %v1330 = vpop.permute.xlu0 %1329
    %v1335 = vadd.f32 %v1251, %v1324
    %v1336 = vadd.f32 %v1252, %v1326
    %v1337 = vadd.f32 %v1253, %v1328
    %v1338 = vadd.f32 %v1254, %v1330
    %v1339 = vpack.c.bf16 %v1336, %v1335
    %v1340 = vpack.c.bf16 %v1338, %v1337
    %v1342 = vsel %vm250, %v1339, 0
    %v1345 = vsel %vm250, %v1340, 0
    %v1348 = vsel %vm257, %v73, 0
    %1350 = vmatprep.subr.bf16.mxu0 0
    %1351 = vmatpush1.bf16.msra.mxu0 %v1348
    %1352 = vmatprep.subr.bf16.mxu0 0
    %1353 = vmatpush1.bf16.msra.mxu0 0
    %1354 = vmatprep.subr.bf16.mxu0 0
    %1355 = vmatpush1.bf16.msra.mxu0 0
    %1356 = vmatprep.subr.bf16.mxu0 0
    %1357 = vmatpush1.bf16.msra.mxu0 0
    %1358 = vmatprep.subr.bf16.mxu0 0
    %1359 = vmatpush1.bf16.msra.mxu0 0
    %1360 = vmatprep.subr.bf16.mxu0 0
    %1361 = vmatpush1.bf16.msra.mxu0 0
    %1362 = vmatprep.subr.bf16.mxu0 0
    %1363 = vmatpush1.bf16.msra.mxu0 0
    %1364 = vmatprep.subr.bf16.mxu0 0
    %1365 = vmatpush1.bf16.msra.mxu0 0
    %1366 = vmatprep.subr.bf16.mxu0 0
    %1367 = vmatpush1.bf16.msra.mxu0 0
    %1368 = vmatprep.subr.bf16.mxu0 0
    %1369 = vmatpush1.bf16.msra.mxu0 0
    %1370 = vmatprep.subr.bf16.mxu0 0
    %1371 = vmatpush1.bf16.msra.mxu0 0
    %1372 = vmatprep.subr.bf16.mxu0 0
    %1373 = vmatpush1.bf16.msra.mxu0 0
    %1374 = vmatprep.subr.bf16.mxu0 0
    %1375 = vmatpush1.bf16.msra.mxu0 0
    %1376 = vmatprep.subr.bf16.mxu0 0
    %1377 = vmatpush1.bf16.msra.mxu0 0
    %1378 = vmatprep.subr.bf16.mxu0 0
    %1379 = vmatpush1.bf16.msra.mxu0 0
    %1380 = vmatprep.subr.bf16.mxu0 0
    %1381 = vmatpush1.bf16.msra.mxu0 0
    %1382 = vmatprep.mubr.bf16.mxu0 0
    %1383 = vmatmul.mubr.bf16.gmra.mrb[0].mxu0 %v1342
    %v1384 = vpop.f32.mrb[0].mxu0
    %v1385 = vadd.f32 0.0, %v1384
    %v1386 = vpop.f32.mrb[0].mxu0
    %v1387 = vpop.f32.mrb[0].mxu0
    %v1388 = vadd.f32 0.0, %v1387
    %v1389 = vpop.f32.mrb[0].mxu0
    %1390 = vmatprep.mubr.bf16.mxu0 0
    %1391 = vmatmul.mubr.bf16.gmra.mrb[0].mxu0 %v1345
    %v1392 = vpop.f32.mrb[0].mxu0
    %v1393 = vadd.f32 0.0, %v1392
    %v1394 = vpop.f32.mrb[0].mxu0
    %v1395 = vpop.f32.mrb[0].mxu0
    %v1396 = vadd.f32 0.0, %v1395
    %v1397 = vpop.f32.mrb[0].mxu0
    %1398 = vdwg.mxu0
    %v1403 = vrot.slane %v1385, 6
    %v1404 = vrot.slane %v1388, 6
    %v1405 = vsel %vm257, %v1403, %v1404
    %v1406 = vrot.slane %v1393, 6
    %v1407 = vrot.slane %v1396, 6
    %v1408 = vsel %vm257, %v1406, %v1407
    %v1413 = vsel %vm257, 0.0, %v1403
    %v1414 = vsel %vm257, 0.0, %v1406
    %v1415 = vadd.f32 %v1413, 0.0
    %v1416 = vadd.f32 %v1405, 0.0
    %v1417 = vadd.f32 %v1414, 0.0
    %v1418 = vadd.f32 %v1408, 0.0
    %1419 = vrot.lane.b32.xlu0 %v1385, 124
    %v1420 = vpop.permute.xlu0 %1419
    %1421 = vrot.lane.b32.xlu0 %v1388, 124
    %v1422 = vpop.permute.xlu0 %1421
    %1423 = vrot.lane.b32.xlu0 %v1393, 124
    %v1424 = vpop.permute.xlu0 %1423
    %1425 = vrot.lane.b32.xlu0 %v1396, 124
    %v1426 = vpop.permute.xlu0 %1425
    %v1431 = vadd.f32 %v1415, %v1420
    %v1432 = vadd.f32 %v1416, %v1422
    %v1433 = vadd.f32 %v1417, %v1424
    %v1434 = vadd.f32 %v1418, %v1426
    %v1435 = vrot.slane %v1385, 2
    %v1436 = vrot.slane %v1388, 2
    %v1437 = vsel %vm346, %v1435, %v1436
    %v1438 = vrot.slane %v1393, 2
    %v1439 = vrot.slane %v1396, 2
    %v1440 = vsel %vm346, %v1438, %v1439
    %v1443 = vsel %vm346, %v1436, 0.0
    %v1444 = vsel %vm346, %v1439, 0.0
    %1447 = vrot.lane.b32.xlu0 %v1437, 120
    %v1448 = vpop.permute.xlu0 %1447
    %1449 = vrot.lane.b32.xlu0 %v1443, 120
    %v1450 = vpop.permute.xlu0 %1449
    %1451 = vrot.lane.b32.xlu0 %v1440, 120
    %v1452 = vpop.permute.xlu0 %1451
    %1453 = vrot.lane.b32.xlu0 %v1444, 120
    %v1454 = vpop.permute.xlu0 %1453
    %v1459 = vadd.f32 %v1431, %v1448
    %v1460 = vadd.f32 %v1432, %v1450
    %v1461 = vadd.f32 %v1433, %v1452
    %v1462 = vadd.f32 %v1434, %v1454
    %v1463 = vlaneseq
    %v1464 = vshrl.u32 %v1463, 7
    %v1465 = vsub.s32 4, %v1464
    %v1466 = vrot.slane %v76, %v1465
    %v1467 = vadd.f32 %v1459, %v1466
    %v1468 = vadd.f32 %v1460, %v1466
    %v1469 = vadd.f32 %v1461, %v1466
    %v1470 = vadd.f32 %v1462, %v1466
    %v1471 = vmax.f32 %v1467, 0.0
    %v1472 = vmax.f32 %v1468, 0.0
    %v1473 = vmax.f32 %v1469, 0.0
    %v1474 = vmax.f32 %v1470, 0.0
    %v1475 = vsel %vm250, %v1471, 0.0
    %v1476 = vsel %vm250, %v1472, 0.0
    %v1477 = vadd.f32 %v1475, %v1476
    %v1478 = vsel %vm250, %v1473, 0.0
    %v1479 = vadd.f32 %v1477, %v1478
    %v1480 = vsel %vm250, %v1474, 0.0
    %v1481 = vadd.f32 %v1479, %v1480
    %v1482 = vrot.slane %v1481, 4
    %v1483 = vadd.f32 %v1481, %v1482
    %v1484 = vrot.slane %v1483, 2
    %v1485 = vadd.f32 %v1483, %v1484
    %v1486 = vrot.slane %v1485, 1
    %v1487 = vadd.f32 %v1485, %v1486
    %v1488 = vmul.f32 %v1487, %v197
    %v1489 = vmul.f32 %v1471, %v1471
    %v1490 = vmul.f32 %v1472, %v1472
    %v1491 = vmul.f32 %v1473, %v1473
    %v1492 = vmul.f32 %v1474, %v1474
    %v1493 = vsel %vm250, %v1489, 0.0
    %v1494 = vsel %vm250, %v1490, 0.0
    %v1495 = vadd.f32 %v1493, %v1494
    %v1496 = vsel %vm250, %v1491, 0.0
    %v1497 = vadd.f32 %v1495, %v1496
    %v1498 = vsel %vm250, %v1492, 0.0
    %v1499 = vadd.f32 %v1497, %v1498
    %v1500 = vrot.slane %v1499, 4
    %v1501 = vadd.f32 %v1499, %v1500
    %v1502 = vrot.slane %v1501, 2
    %v1503 = vadd.f32 %v1501, %v1502
    %v1504 = vrot.slane %v1503, 1
    %v1505 = vadd.f32 %v1503, %v1504
    %v1506 = vmul.f32 %v1505, %v197
    %v1507 = vmul.f32 %v1488, %v1488
    %v1508 = vsub.f32 %v1506, %v1507
    %v1509 = vadd.f32 %v1508, 1e-05
    %v1510 = vrsqrt.pop %v1509
    %v1511 = vmul.f32 %v77, %v1510
    %v1512 = vlaneseq
    %v1513 = vshrl.u32 %v1512, 7
    %v1514 = vsub.s32 4, %v1513
    %v1515 = vrot.slane %v1511, %v1514
    %v1516 = vmul.f32 %v1471, %v1515
    %v1517 = vmul.f32 %v1472, %v1515
    %v1518 = vmul.f32 %v1473, %v1515
    %v1519 = vmul.f32 %v1474, %v1515
    %v1520 = vmul.f32 %v1488, %v1511
    %v1521 = vsub.f32 %v78, %v1520
    %v1522 = vlaneseq
    %v1523 = vshrl.u32 %v1522, 7
    %v1524 = vsub.s32 4, %v1523
    %v1525 = vrot.slane %v1521, %v1524
    %v1526 = vadd.f32 %v1516, %v1525
    %v1527 = vadd.f32 %v1517, %v1525
    %v1528 = vadd.f32 %v1518, %v1525
    %v1529 = vadd.f32 %v1519, %v1525
    %v1530 = vpack.c.bf16 %v1527, %v1526
    %v1531 = vpack.c.bf16 %v1529, %v1528
    %v1533 = vsel %vm250, %v1530, 0
    %v1536 = vsel %vm250, %v1531, 0
    %v1539 = vsel %vm257, %v81, 0
    %1541 = vmatprep.subr.bf16.mxu0 0
    %1542 = vmatpush1.bf16.msra.mxu0 %v1539
    %1543 = vmatprep.subr.bf16.mxu0 0
    %1544 = vmatpush1.bf16.msra.mxu0 0
    %1545 = vmatprep.subr.bf16.mxu0 0
    %1546 = vmatpush1.bf16.msra.mxu0 0
    %1547 = vmatprep.subr.bf16.mxu0 0
    %1548 = vmatpush1.bf16.msra.mxu0 0
    %1549 = vmatprep.subr.bf16.mxu0 0
    %1550 = vmatpush1.bf16.msra.mxu0 0
    %1551 = vmatprep.subr.bf16.mxu0 0
    %1552 = vmatpush1.bf16.msra.mxu0 0
    %1553 = vmatprep.subr.bf16.mxu0 0
    %1554 = vmatpush1.bf16.msra.mxu0 0
    %1555 = vmatprep.subr.bf16.mxu0 0
    %1556 = vmatpush1.bf16.msra.mxu0 0
    %1557 = vmatprep.subr.bf16.mxu0 0
    %1558 = vmatpush1.bf16.msra.mxu0 0
    %1559 = vmatprep.subr.bf16.mxu0 0
    %1560 = vmatpush1.bf16.msra.mxu0 0
    %1561 = vmatprep.subr.bf16.mxu0 0
    %1562 = vmatpush1.bf16.msra.mxu0 0
    %1563 = vmatprep.subr.bf16.mxu0 0
    %1564 = vmatpush1.bf16.msra.mxu0 0
    %1565 = vmatprep.subr.bf16.mxu0 0
    %1566 = vmatpush1.bf16.msra.mxu0 0
    %1567 = vmatprep.subr.bf16.mxu0 0
    %1568 = vmatpush1.bf16.msra.mxu0 0
    %1569 = vmatprep.subr.bf16.mxu0 0
    %1570 = vmatpush1.bf16.msra.mxu0 0
    %1571 = vmatprep.subr.bf16.mxu0 0
    %1572 = vmatpush1.bf16.msra.mxu0 0
    %1573 = vmatprep.mubr.bf16.mxu0 0
    %1574 = vmatmul.mubr.bf16.gmra.mrb[0].mxu0 %v1533
    %v1575 = vpop.f32.mrb[0].mxu0
    %v1576 = vadd.f32 0.0, %v1575
    %v1577 = vpop.f32.mrb[0].mxu0
    %v1578 = vpop.f32.mrb[0].mxu0
    %v1579 = vadd.f32 0.0, %v1578
    %v1580 = vpop.f32.mrb[0].mxu0
    %1581 = vmatprep.mubr.bf16.mxu0 0
    %1582 = vmatmul.mubr.bf16.gmra.mrb[0].mxu0 %v1536
    %v1583 = vpop.f32.mrb[0].mxu0
    %v1584 = vadd.f32 0.0, %v1583
    %v1585 = vpop.f32.mrb[0].mxu0
    %v1586 = vpop.f32.mrb[0].mxu0
    %v1587 = vadd.f32 0.0, %v1586
    %v1588 = vpop.f32.mrb[0].mxu0
    %1589 = vdwg.mxu0
    %v1590 = vadd.f32 %v1319, %v1576
    %v1591 = vadd.f32 %v1320, %v1579
    %v1592 = vadd.f32 %v1321, %v1584
    %v1593 = vadd.f32 %v1322, %v1587
    %1594 = vrot.lane.b32.xlu0 %v244, 108
    %v1595 = vpop.permute.xlu0 %1594
    %1596 = vrot.lane.b32.xlu0 %v245, 108
    %v1597 = vpop.permute.xlu0 %1596
    %1598 = vrot.lane.b32.xlu0 %v246, 108
    %v1599 = vpop.permute.xlu0 %1598
    %1600 = vrot.lane.b32.xlu0 %v247, 108
    %v1601 = vpop.permute.xlu0 %1600
    %v1606 = vadd.f32 %v1526, %v1595
    %v1607 = vadd.f32 %v1527, %v1597
    %v1608 = vadd.f32 %v1528, %v1599
    %v1609 = vadd.f32 %v1529, %v1601
    %v1610 = vpack.c.bf16 %v1607, %v1606
    %v1611 = vpack.c.bf16 %v1609, %v1608
    %v1613 = vsel %vm250, %v1610, 0
    %v1616 = vsel %vm250, %v1611, 0
    %v1619 = vsel %vm257, %v74, 0
    %1621 = vmatprep.subr.bf16.mxu0 0
    %1622 = vmatpush1.bf16.msra.mxu0 %v1619
    %1623 = vmatprep.subr.bf16.mxu0 0
    %1624 = vmatpush1.bf16.msra.mxu0 0
    %1625 = vmatprep.subr.bf16.mxu0 0
    %1626 = vmatpush1.bf16.msra.mxu0 0
    %1627 = vmatprep.subr.bf16.mxu0 0
    %1628 = vmatpush1.bf16.msra.mxu0 0
    %1629 = vmatprep.subr.bf16.mxu0 0
    %1630 = vmatpush1.bf16.msra.mxu0 0
    %1631 = vmatprep.subr.bf16.mxu0 0
    %1632 = vmatpush1.bf16.msra.mxu0 0
    %1633 = vmatprep.subr.bf16.mxu0 0
    %1634 = vmatpush1.bf16.msra.mxu0 0
    %1635 = vmatprep.subr.bf16.mxu0 0
    %1636 = vmatpush1.bf16.msra.mxu0 0
    %1637 = vmatprep.subr.bf16.mxu0 0
    %1638 = vmatpush1.bf16.msra.mxu0 0
    %1639 = vmatprep.subr.bf16.mxu0 0
    %1640 = vmatpush1.bf16.msra.mxu0 0
    %1641 = vmatprep.subr.bf16.mxu0 0
    %1642 = vmatpush1.bf16.msra.mxu0 0
    %1643 = vmatprep.subr.bf16.mxu0 0
    %1644 = vmatpush1.bf16.msra.mxu0 0
    %1645 = vmatprep.subr.bf16.mxu0 0
    %1646 = vmatpush1.bf16.msra.mxu0 0
    %1647 = vmatprep.subr.bf16.mxu0 0
    %1648 = vmatpush1.bf16.msra.mxu0 0
    %1649 = vmatprep.subr.bf16.mxu0 0
    %1650 = vmatpush1.bf16.msra.mxu0 0
    %1651 = vmatprep.subr.bf16.mxu0 0
    %1652 = vmatpush1.bf16.msra.mxu0 0
    %1653 = vmatprep.mubr.bf16.mxu0 0
    %1654 = vmatmul.mubr.bf16.gmra.mrb[0].mxu0 %v1613
    %v1655 = vpop.f32.mrb[0].mxu0
    %v1656 = vadd.f32 0.0, %v1655
    %v1657 = vpop.f32.mrb[0].mxu0
    %v1658 = vpop.f32.mrb[0].mxu0
    %v1659 = vadd.f32 0.0, %v1658
    %v1660 = vpop.f32.mrb[0].mxu0
    %1661 = vmatprep.mubr.bf16.mxu0 0
    %1662 = vmatmul.mubr.bf16.gmra.mrb[0].mxu0 %v1616
    %v1663 = vpop.f32.mrb[0].mxu0
    %v1664 = vadd.f32 0.0, %v1663
    %v1665 = vpop.f32.mrb[0].mxu0
    %v1666 = vpop.f32.mrb[0].mxu0
    %v1667 = vadd.f32 0.0, %v1666
    %v1668 = vpop.f32.mrb[0].mxu0
    %1669 = vdwg.mxu0
    %v1674 = vrot.slane %v1656, 6
    %v1675 = vrot.slane %v1659, 6
    %v1676 = vsel %vm257, %v1674, %v1675
    %v1677 = vrot.slane %v1664, 6
    %v1678 = vrot.slane %v1667, 6
    %v1679 = vsel %vm257, %v1677, %v1678
    %v1684 = vsel %vm257, 0.0, %v1674
    %v1685 = vsel %vm257, 0.0, %v1677
    %v1686 = vadd.f32 %v1684, 0.0
    %v1687 = vadd.f32 %v1676, 0.0
    %v1688 = vadd.f32 %v1685, 0.0
    %v1689 = vadd.f32 %v1679, 0.0
    %1690 = vrot.lane.b32.xlu0 %v1656, 124
    %v1691 = vpop.permute.xlu0 %1690
    %1692 = vrot.lane.b32.xlu0 %v1659, 124
    %v1693 = vpop.permute.xlu0 %1692
    %1694 = vrot.lane.b32.xlu0 %v1664, 124
    %v1695 = vpop.permute.xlu0 %1694
    %1696 = vrot.lane.b32.xlu0 %v1667, 124
    %v1697 = vpop.permute.xlu0 %1696
    %v1702 = vadd.f32 %v1686, %v1691
    %v1703 = vadd.f32 %v1687, %v1693
    %v1704 = vadd.f32 %v1688, %v1695
    %v1705 = vadd.f32 %v1689, %v1697
    %v1706 = vrot.slane %v1656, 2
    %v1707 = vrot.slane %v1659, 2
    %v1708 = vsel %vm346, %v1706, %v1707
    %v1709 = vrot.slane %v1664, 2
    %v1710 = vrot.slane %v1667, 2
    %v1711 = vsel %vm346, %v1709, %v1710
    %v1714 = vsel %vm346, %v1707, 0.0
    %v1715 = vsel %vm346, %v1710, 0.0
    %1718 = vrot.lane.b32.xlu0 %v1708, 120
    %v1719 = vpop.permute.xlu0 %1718
    %1720 = vrot.lane.b32.xlu0 %v1714, 120
    %v1721 = vpop.permute.xlu0 %1720
    %1722 = vrot.lane.b32.xlu0 %v1711, 120
    %v1723 = vpop.permute.xlu0 %1722
    %1724 = vrot.lane.b32.xlu0 %v1715, 120
    %v1725 = vpop.permute.xlu0 %1724
    %v1730 = vadd.f32 %v1702, %v1719
    %v1731 = vadd.f32 %v1703, %v1721
    %v1732 = vadd.f32 %v1704, %v1723
    %v1733 = vadd.f32 %v1705, %v1725
    %v1734 = vlaneseq
    %v1735 = vshrl.u32 %v1734, 7
    %v1736 = vsub.s32 5, %v1735
    %v1737 = vrot.slane %v76, %v1736
    %v1738 = vadd.f32 %v1730, %v1737
    %v1739 = vadd.f32 %v1731, %v1737
    %v1740 = vadd.f32 %v1732, %v1737
    %v1741 = vadd.f32 %v1733, %v1737
    %v1742 = vmax.f32 %v1738, 0.0
    %v1743 = vmax.f32 %v1739, 0.0
    %v1744 = vmax.f32 %v1740, 0.0
    %v1745 = vmax.f32 %v1741, 0.0
    %v1746 = vsel %vm250, %v1742, 0.0
    %v1747 = vsel %vm250, %v1743, 0.0
    %v1748 = vadd.f32 %v1746, %v1747
    %v1749 = vsel %vm250, %v1744, 0.0
    %v1750 = vadd.f32 %v1748, %v1749
    %v1751 = vsel %vm250, %v1745, 0.0
    %v1752 = vadd.f32 %v1750, %v1751
    %v1753 = vrot.slane %v1752, 4
    %v1754 = vadd.f32 %v1752, %v1753
    %v1755 = vrot.slane %v1754, 2
    %v1756 = vadd.f32 %v1754, %v1755
    %v1757 = vrot.slane %v1756, 1
    %v1758 = vadd.f32 %v1756, %v1757
    %v1759 = vmul.f32 %v1758, %v197
    %v1760 = vmul.f32 %v1742, %v1742
    %v1761 = vmul.f32 %v1743, %v1743
    %v1762 = vmul.f32 %v1744, %v1744
    %v1763 = vmul.f32 %v1745, %v1745
    %v1764 = vsel %vm250, %v1760, 0.0
    %v1765 = vsel %vm250, %v1761, 0.0
    %v1766 = vadd.f32 %v1764, %v1765
    %v1767 = vsel %vm250, %v1762, 0.0
    %v1768 = vadd.f32 %v1766, %v1767
    %v1769 = vsel %vm250, %v1763, 0.0
    %v1770 = vadd.f32 %v1768, %v1769
    %v1771 = vrot.slane %v1770, 4
    %v1772 = vadd.f32 %v1770, %v1771
    %v1773 = vrot.slane %v1772, 2
    %v1774 = vadd.f32 %v1772, %v1773
    %v1775 = vrot.slane %v1774, 1
    %v1776 = vadd.f32 %v1774, %v1775
    %v1777 = vmul.f32 %v1776, %v197
    %v1778 = vmul.f32 %v1759, %v1759
    %v1779 = vsub.f32 %v1777, %v1778
    %v1780 = vadd.f32 %v1779, 1e-05
    %v1781 = vrsqrt.pop %v1780
    %v1782 = vmul.f32 %v77, %v1781
    %v1783 = vlaneseq
    %v1784 = vshrl.u32 %v1783, 7
    %v1785 = vsub.s32 5, %v1784
    %v1786 = vrot.slane %v1782, %v1785
    %v1787 = vmul.f32 %v1742, %v1786
    %v1788 = vmul.f32 %v1743, %v1786
    %v1789 = vmul.f32 %v1744, %v1786
    %v1790 = vmul.f32 %v1745, %v1786
    %v1791 = vmul.f32 %v1759, %v1782
    %v1792 = vsub.f32 %v78, %v1791
    %v1793 = vlaneseq
    %v1794 = vshrl.u32 %v1793, 7
    %v1795 = vsub.s32 5, %v1794
    %v1796 = vrot.slane %v1792, %v1795
    %v1797 = vadd.f32 %v1787, %v1796
    %v1798 = vadd.f32 %v1788, %v1796
    %v1799 = vadd.f32 %v1789, %v1796
    %v1800 = vadd.f32 %v1790, %v1796
    %v1801 = vpack.c.bf16 %v1798, %v1797
    %v1802 = vpack.c.bf16 %v1800, %v1799
    %v1804 = vunpack.c.l.b16 %v81
    %v1805 = vpack.c.b16 %v1804, %v1804
    %v1806 = vrot.slane %v1805, 2
    %v1808 = vsel %vm250, %v1801, 0
    %v1811 = vsel %vm250, %v1802, 0
    %v1814 = vsel %vm257, %v1806, 0
    %1816 = vmatprep.subr.bf16.mxu0 0
    %1817 = vmatpush1.bf16.msra.mxu0 %v1814
    %1818 = vmatprep.subr.bf16.mxu0 0
    %1819 = vmatpush1.bf16.msra.mxu0 0
    %1820 = vmatprep.subr.bf16.mxu0 0
    %1821 = vmatpush1.bf16.msra.mxu0 0
    %1822 = vmatprep.subr.bf16.mxu0 0
    %1823 = vmatpush1.bf16.msra.mxu0 0
    %1824 = vmatprep.subr.bf16.mxu0 0
    %1825 = vmatpush1.bf16.msra.mxu0 0
    %1826 = vmatprep.subr.bf16.mxu0 0
    %1827 = vmatpush1.bf16.msra.mxu0 0
    %1828 = vmatprep.subr.bf16.mxu0 0
    %1829 = vmatpush1.bf16.msra.mxu0 0
    %1830 = vmatprep.subr.bf16.mxu0 0
    %1831 = vmatpush1.bf16.msra.mxu0 0
    %1832 = vmatprep.subr.bf16.mxu0 0
    %1833 = vmatpush1.bf16.msra.mxu0 0
    %1834 = vmatprep.subr.bf16.mxu0 0
    %1835 = vmatpush1.bf16.msra.mxu0 0
    %1836 = vmatprep.subr.bf16.mxu0 0
    %1837 = vmatpush1.bf16.msra.mxu0 0
    %1838 = vmatprep.subr.bf16.mxu0 0
    %1839 = vmatpush1.bf16.msra.mxu0 0
    %1840 = vmatprep.subr.bf16.mxu0 0
    %1841 = vmatpush1.bf16.msra.mxu0 0
    %1842 = vmatprep.subr.bf16.mxu0 0
    %1843 = vmatpush1.bf16.msra.mxu0 0
    %1844 = vmatprep.subr.bf16.mxu0 0
    %1845 = vmatpush1.bf16.msra.mxu0 0
    %1846 = vmatprep.subr.bf16.mxu0 0
    %1847 = vmatpush1.bf16.msra.mxu0 0
    %1848 = vmatprep.mubr.bf16.mxu0 0
    %1849 = vmatmul.mubr.bf16.gmra.mrb[0].mxu0 %v1808
    %v1850 = vpop.f32.mrb[0].mxu0
    %v1851 = vadd.f32 0.0, %v1850
    %v1852 = vpop.f32.mrb[0].mxu0
    %v1853 = vpop.f32.mrb[0].mxu0
    %v1854 = vadd.f32 0.0, %v1853
    %v1855 = vpop.f32.mrb[0].mxu0
    %1856 = vmatprep.mubr.bf16.mxu0 0
    %1857 = vmatmul.mubr.bf16.gmra.mrb[0].mxu0 %v1811
    %v1858 = vpop.f32.mrb[0].mxu0
    %v1859 = vadd.f32 0.0, %v1858
    %v1860 = vpop.f32.mrb[0].mxu0
    %v1861 = vpop.f32.mrb[0].mxu0
    %v1862 = vadd.f32 0.0, %v1861
    %v1863 = vpop.f32.mrb[0].mxu0
    %1864 = vdwg.mxu0
    %v1865 = vadd.f32 %v1590, %v1851
    %v1866 = vadd.f32 %v1591, %v1854
    %v1867 = vadd.f32 %v1592, %v1859
    %v1868 = vadd.f32 %v1593, %v1862
    %1869 = vrot.lane.b32.xlu0 %v244, 104
    %v1870 = vpop.permute.xlu0 %1869
    %1871 = vrot.lane.b32.xlu0 %v245, 104
    %v1872 = vpop.permute.xlu0 %1871
    %1873 = vrot.lane.b32.xlu0 %v246, 104
    %v1874 = vpop.permute.xlu0 %1873
    %1875 = vrot.lane.b32.xlu0 %v247, 104
    %v1876 = vpop.permute.xlu0 %1875
    %v1881 = vadd.f32 %v1797, %v1870
    %v1882 = vadd.f32 %v1798, %v1872
    %v1883 = vadd.f32 %v1799, %v1874
    %v1884 = vadd.f32 %v1800, %v1876
    %v1885 = vpack.c.bf16 %v1882, %v1881
    %v1886 = vpack.c.bf16 %v1884, %v1883
    %v1888 = vsel %vm250, %v1885, 0
    %v1891 = vsel %vm250, %v1886, 0
    %v1894 = vsel %vm257, %v75, 0
    %1896 = vmatprep.subr.bf16.mxu0 0
    %1897 = vmatpush1.bf16.msra.mxu0 %v1894
    %1898 = vmatprep.subr.bf16.mxu0 0
    %1899 = vmatpush1.bf16.msra.mxu0 0
    %1900 = vmatprep.subr.bf16.mxu0 0
    %1901 = vmatpush1.bf16.msra.mxu0 0
    %1902 = vmatprep.subr.bf16.mxu0 0
    %1903 = vmatpush1.bf16.msra.mxu0 0
    %1904 = vmatprep.subr.bf16.mxu0 0
    %1905 = vmatpush1.bf16.msra.mxu0 0
    %1906 = vmatprep.subr.bf16.mxu0 0
    %1907 = vmatpush1.bf16.msra.mxu0 0
    %1908 = vmatprep.subr.bf16.mxu0 0
    %1909 = vmatpush1.bf16.msra.mxu0 0
    %1910 = vmatprep.subr.bf16.mxu0 0
    %1911 = vmatpush1.bf16.msra.mxu0 0
    %1912 = vmatprep.subr.bf16.mxu0 0
    %1913 = vmatpush1.bf16.msra.mxu0 0
    %1914 = vmatprep.subr.bf16.mxu0 0
    %1915 = vmatpush1.bf16.msra.mxu0 0
    %1916 = vmatprep.subr.bf16.mxu0 0
    %1917 = vmatpush1.bf16.msra.mxu0 0
    %1918 = vmatprep.subr.bf16.mxu0 0
    %1919 = vmatpush1.bf16.msra.mxu0 0
    %1920 = vmatprep.subr.bf16.mxu0 0
    %1921 = vmatpush1.bf16.msra.mxu0 0
    %1922 = vmatprep.subr.bf16.mxu0 0
    %1923 = vmatpush1.bf16.msra.mxu0 0
    %1924 = vmatprep.subr.bf16.mxu0 0
    %1925 = vmatpush1.bf16.msra.mxu0 0
    %1926 = vmatprep.subr.bf16.mxu0 0
    %1927 = vmatpush1.bf16.msra.mxu0 0
    %1928 = vmatprep.mubr.bf16.mxu0 0
    %1929 = vmatmul.mubr.bf16.gmra.mrb[0].mxu0 %v1888
    %v1930 = vpop.f32.mrb[0].mxu0
    %v1931 = vadd.f32 0.0, %v1930
    %v1932 = vpop.f32.mrb[0].mxu0
    %v1933 = vpop.f32.mrb[0].mxu0
    %v1934 = vadd.f32 0.0, %v1933
    %v1935 = vpop.f32.mrb[0].mxu0
    %1936 = vmatprep.mubr.bf16.mxu0 0
    %1937 = vmatmul.mubr.bf16.gmra.mrb[0].mxu0 %v1891
    %v1938 = vpop.f32.mrb[0].mxu0
    %v1939 = vadd.f32 0.0, %v1938
    %v1940 = vpop.f32.mrb[0].mxu0
    %v1941 = vpop.f32.mrb[0].mxu0
    %v1942 = vadd.f32 0.0, %v1941
    %v1943 = vpop.f32.mrb[0].mxu0
    %1944 = vdwg.mxu0
    %v1949 = vrot.slane %v1931, 6
    %v1950 = vrot.slane %v1934, 6
    %v1951 = vsel %vm257, %v1949, %v1950
    %v1952 = vrot.slane %v1939, 6
    %v1953 = vrot.slane %v1942, 6
    %v1954 = vsel %vm257, %v1952, %v1953
    %v1959 = vsel %vm257, 0.0, %v1949
    %v1960 = vsel %vm257, 0.0, %v1952
    %v1961 = vadd.f32 %v1959, 0.0
    %v1962 = vadd.f32 %v1951, 0.0
    %v1963 = vadd.f32 %v1960, 0.0
    %v1964 = vadd.f32 %v1954, 0.0
    %1965 = vrot.lane.b32.xlu0 %v1931, 124
    %v1966 = vpop.permute.xlu0 %1965
    %1967 = vrot.lane.b32.xlu0 %v1934, 124
    %v1968 = vpop.permute.xlu0 %1967
    %1969 = vrot.lane.b32.xlu0 %v1939, 124
    %v1970 = vpop.permute.xlu0 %1969
    %1971 = vrot.lane.b32.xlu0 %v1942, 124
    %v1972 = vpop.permute.xlu0 %1971
    %v1977 = vadd.f32 %v1961, %v1966
    %v1978 = vadd.f32 %v1962, %v1968
    %v1979 = vadd.f32 %v1963, %v1970
    %v1980 = vadd.f32 %v1964, %v1972
    %v1981 = vrot.slane %v1931, 2
    %v1982 = vrot.slane %v1934, 2
    %v1983 = vsel %vm346, %v1981, %v1982
    %v1984 = vrot.slane %v1939, 2
    %v1985 = vrot.slane %v1942, 2
    %v1986 = vsel %vm346, %v1984, %v1985
    %v1989 = vsel %vm346, %v1982, 0.0
    %v1990 = vsel %vm346, %v1985, 0.0
    %1993 = vrot.lane.b32.xlu0 %v1983, 120
    %v1994 = vpop.permute.xlu0 %1993
    %1995 = vrot.lane.b32.xlu0 %v1989, 120
    %v1996 = vpop.permute.xlu0 %1995
    %1997 = vrot.lane.b32.xlu0 %v1986, 120
    %v1998 = vpop.permute.xlu0 %1997
    %1999 = vrot.lane.b32.xlu0 %v1990, 120
    %v2000 = vpop.permute.xlu0 %1999
    %v2005 = vadd.f32 %v1977, %v1994
    %v2006 = vadd.f32 %v1978, %v1996
    %v2007 = vadd.f32 %v1979, %v1998
    %v2008 = vadd.f32 %v1980, %v2000
    %v2009 = vlaneseq
    %v2010 = vshrl.u32 %v2009, 7
    %v2011 = vsub.s32 6, %v2010
    %v2012 = vrot.slane %v76, %v2011
    %v2013 = vadd.f32 %v2005, %v2012
    %v2014 = vadd.f32 %v2006, %v2012
    %v2015 = vadd.f32 %v2007, %v2012
    %v2016 = vadd.f32 %v2008, %v2012
    %v2017 = vmax.f32 %v2013, 0.0
    %v2018 = vmax.f32 %v2014, 0.0
    %v2019 = vmax.f32 %v2015, 0.0
    %v2020 = vmax.f32 %v2016, 0.0
    %v2021 = vsel %vm250, %v2017, 0.0
    %v2022 = vsel %vm250, %v2018, 0.0
    %v2023 = vadd.f32 %v2021, %v2022
    %v2024 = vsel %vm250, %v2019, 0.0
    %v2025 = vadd.f32 %v2023, %v2024
    %v2026 = vsel %vm250, %v2020, 0.0
    %v2027 = vadd.f32 %v2025, %v2026
    %v2028 = vrot.slane %v2027, 4
    %v2029 = vadd.f32 %v2027, %v2028
    %v2030 = vrot.slane %v2029, 2
    %v2031 = vadd.f32 %v2029, %v2030
    %v2032 = vrot.slane %v2031, 1
    %v2033 = vadd.f32 %v2031, %v2032
    %v2034 = vmul.f32 %v2033, %v197
    %v2035 = vmul.f32 %v2017, %v2017
    %v2036 = vmul.f32 %v2018, %v2018
    %v2037 = vmul.f32 %v2019, %v2019
    %v2038 = vmul.f32 %v2020, %v2020
    %v2039 = vsel %vm250, %v2035, 0.0
    %v2040 = vsel %vm250, %v2036, 0.0
    %v2041 = vadd.f32 %v2039, %v2040
    %v2042 = vsel %vm250, %v2037, 0.0
    %v2043 = vadd.f32 %v2041, %v2042
    %v2044 = vsel %vm250, %v2038, 0.0
    %v2045 = vadd.f32 %v2043, %v2044
    %v2046 = vrot.slane %v2045, 4
    %v2047 = vadd.f32 %v2045, %v2046
    %v2048 = vrot.slane %v2047, 2
    %v2049 = vadd.f32 %v2047, %v2048
    %v2050 = vrot.slane %v2049, 1
    %v2051 = vadd.f32 %v2049, %v2050
    %v2052 = vmul.f32 %v2051, %v197
    %v2053 = vmul.f32 %v2034, %v2034
    %v2054 = vsub.f32 %v2052, %v2053
    %v2055 = vadd.f32 %v2054, 1e-05
    %v2056 = vrsqrt.pop %v2055
    %v2057 = vmul.f32 %v77, %v2056
    %v2058 = vlaneseq
    %v2059 = vshrl.u32 %v2058, 7
    %v2060 = vsub.s32 6, %v2059
    %v2061 = vrot.slane %v2057, %v2060
    %v2062 = vmul.f32 %v2017, %v2061
    %v2063 = vmul.f32 %v2018, %v2061
    %v2064 = vmul.f32 %v2019, %v2061
    %v2065 = vmul.f32 %v2020, %v2061
    %v2066 = vmul.f32 %v2034, %v2057
    %v2067 = vsub.f32 %v78, %v2066
    %v2068 = vlaneseq
    %v2069 = vshrl.u32 %v2068, 7
    %v2070 = vsub.s32 6, %v2069
    %v2071 = vrot.slane %v2067, %v2070
    %v2072 = vadd.f32 %v2062, %v2071
    %v2073 = vadd.f32 %v2063, %v2071
    %v2074 = vadd.f32 %v2064, %v2071
    %v2075 = vadd.f32 %v2065, %v2071
    %v2076 = vpack.c.bf16 %v2073, %v2072
    %v2077 = vpack.c.bf16 %v2075, %v2074
    %v2079 = vsel %vm250, %v2076, 0
    %v2082 = vsel %vm250, %v2077, 0
    %v2085 = vsel %vm257, %v82, 0
    %2087 = vmatprep.subr.bf16.mxu0 0
    %2088 = vmatpush1.bf16.msra.mxu0 %v2085
    %2089 = vmatprep.subr.bf16.mxu0 0
    %2090 = vmatpush1.bf16.msra.mxu0 0
    %2091 = vmatprep.subr.bf16.mxu0 0
    %2092 = vmatpush1.bf16.msra.mxu0 0
    %2093 = vmatprep.subr.bf16.mxu0 0
    %2094 = vmatpush1.bf16.msra.mxu0 0
    %2095 = vmatprep.subr.bf16.mxu0 0
    %2096 = vmatpush1.bf16.msra.mxu0 0
    %2097 = vmatprep.subr.bf16.mxu0 0
    %2098 = vmatpush1.bf16.msra.mxu0 0
    %2099 = vmatprep.subr.bf16.mxu0 0
    %2100 = vmatpush1.bf16.msra.mxu0 0
    %2101 = vmatprep.subr.bf16.mxu0 0
    %2102 = vmatpush1.bf16.msra.mxu0 0
    %2103 = vmatprep.subr.bf16.mxu0 0
    %2104 = vmatpush1.bf16.msra.mxu0 0
    %2105 = vmatprep.subr.bf16.mxu0 0
    %2106 = vmatpush1.bf16.msra.mxu0 0
    %2107 = vmatprep.subr.bf16.mxu0 0
    %2108 = vmatpush1.bf16.msra.mxu0 0
    %2109 = vmatprep.subr.bf16.mxu0 0
    %2110 = vmatpush1.bf16.msra.mxu0 0
    %2111 = vmatprep.subr.bf16.mxu0 0
    %2112 = vmatpush1.bf16.msra.mxu0 0
    %2113 = vmatprep.subr.bf16.mxu0 0
    %2114 = vmatpush1.bf16.msra.mxu0 0
    %2115 = vmatprep.subr.bf16.mxu0 0
    %2116 = vmatpush1.bf16.msra.mxu0 0
    %2117 = vmatprep.subr.bf16.mxu0 0
    %2118 = vmatpush1.bf16.msra.mxu0 0
    %2119 = vmatprep.mubr.bf16.mxu0 0
    %2120 = vmatmul.mubr.bf16.gmra.mrb[0].mxu0 %v2079
    %v2121 = vpop.f32.mrb[0].mxu0
    %v2122 = vadd.f32 0.0, %v2121
    %v2123 = vpop.f32.mrb[0].mxu0
    %v2124 = vpop.f32.mrb[0].mxu0
    %v2125 = vadd.f32 0.0, %v2124
    %v2126 = vpop.f32.mrb[0].mxu0
    %2127 = vmatprep.mubr.bf16.mxu0 0
    %2128 = vmatmul.mubr.bf16.gmra.mrb[0].mxu0 %v2082
    %v2129 = vpop.f32.mrb[0].mxu0
    %v2130 = vadd.f32 0.0, %v2129
    %v2131 = vpop.f32.mrb[0].mxu0
    %v2132 = vpop.f32.mrb[0].mxu0
    %v2133 = vadd.f32 0.0, %v2132
    %v2134 = vpop.f32.mrb[0].mxu0
    %2135 = vdwg.mxu0
    %v2136 = vadd.f32 %v1865, %v2122
    %v2137 = vadd.f32 %v1866, %v2125
    %v2138 = vadd.f32 %v1867, %v2130
    %v2139 = vadd.f32 %v1868, %v2133
    %2142 = vrot.lane.b32.xlu0 %v248, 100
    %v2143 = vpop.permute.xlu0 %2142
    %2144 = vrot.lane.b32.xlu0 %v249, 100
    %v2145 = vpop.permute.xlu0 %2144
    %v2147 = vunpack.c.l.b16 %v82
    %v2148 = vpack.c.b16 %v2147, %v2147
    %v2149 = vrot.slane %v2148, 2
    %v2151 = vsel %vm250, %v2143, 0
    %v2154 = vsel %vm250, %v2145, 0
    %v2157 = vsel %vm257, %v2149, 0
    %2159 = vmatprep.subr.bf16.mxu0 0
    %2160 = vmatpush1.bf16.msra.mxu0 %v2157
    %2161 = vmatprep.subr.bf16.mxu0 0
    %2162 = vmatpush1.bf16.msra.mxu0 0
    %2163 = vmatprep.subr.bf16.mxu0 0
    %2164 = vmatpush1.bf16.msra.mxu0 0
    %2165 = vmatprep.subr.bf16.mxu0 0
    %2166 = vmatpush1.bf16.msra.mxu0 0
    %2167 = vmatprep.subr.bf16.mxu0 0
    %2168 = vmatpush1.bf16.msra.mxu0 0
    %2169 = vmatprep.subr.bf16.mxu0 0
    %2170 = vmatpush1.bf16.msra.mxu0 0
    %2171 = vmatprep.subr.bf16.mxu0 0
    %2172 = vmatpush1.bf16.msra.mxu0 0
    %2173 = vmatprep.subr.bf16.mxu0 0
    %2174 = vmatpush1.bf16.msra.mxu0 0
    %2175 = vmatprep.subr.bf16.mxu0 0
    %2176 = vmatpush1.bf16.msra.mxu0 0
    %2177 = vmatprep.subr.bf16.mxu0 0
    %2178 = vmatpush1.bf16.msra.mxu0 0
    %2179 = vmatprep.subr.bf16.mxu0 0
    %2180 = vmatpush1.bf16.msra.mxu0 0
    %2181 = vmatprep.subr.bf16.mxu0 0
    %2182 = vmatpush1.bf16.msra.mxu0 0
    %2183 = vmatprep.subr.bf16.mxu0 0
    %2184 = vmatpush1.bf16.msra.mxu0 0
    %2185 = vmatprep.subr.bf16.mxu0 0
    %2186 = vmatpush1.bf16.msra.mxu0 0
    %2187 = vmatprep.subr.bf16.mxu0 0
    %2188 = vmatpush1.bf16.msra.mxu0 0
    %2189 = vmatprep.subr.bf16.mxu0 0
    %2190 = vmatpush1.bf16.msra.mxu0 0
    %2191 = vmatprep.mubr.bf16.mxu0 0
    %2192 = vmatmul.mubr.bf16.gmra.mrb[0].mxu0 %v2151
    %v2193 = vpop.f32.mrb[0].mxu0
    %v2194 = vadd.f32 0.0, %v2193
    %v2195 = vpop.f32.mrb[0].mxu0
    %v2196 = vpop.f32.mrb[0].mxu0
    %v2197 = vadd.f32 0.0, %v2196
    %v2198 = vpop.f32.mrb[0].mxu0
    %2199 = vmatprep.mubr.bf16.mxu0 0
    %2200 = vmatmul.mubr.bf16.gmra.mrb[0].mxu0 %v2154
    %v2201 = vpop.f32.mrb[0].mxu0
    %v2202 = vadd.f32 0.0, %v2201
    %v2203 = vpop.f32.mrb[0].mxu0
    %v2204 = vpop.f32.mrb[0].mxu0
    %v2205 = vadd.f32 0.0, %v2204
    %v2206 = vpop.f32.mrb[0].mxu0
    %2207 = vdwg.mxu0
    %v2208 = vadd.f32 %v2136, %v2194
    %v2209 = vadd.f32 %v2137, %v2197
    %v2210 = vadd.f32 %v2138, %v2202
    %v2211 = vadd.f32 %v2139, %v2205
    %v2213 = vlaneseq
    %v2214 = vshrl.u32 %v2213, 7
    %v2215 = vsub.s32 0, %v2214
    %v2216 = vrot.slane %v83, %v2215
    %v2218 = vadd.f32 %v2208, %v2216
    %v2219 = vadd.f32 %v2209, %v2216
    %v2220 = vadd.f32 %v2210, %v2216
    %v2221 = vadd.f32 %v2211, %v2216
    %v2222 = vmax.f32 %v2218, 0.0
    %v2223 = vmax.f32 %v2219, 0.0
    %v2224 = vmax.f32 %v2220, 0.0
    %v2225 = vmax.f32 %v2221, 0.0
    %v2226 = vsel %vm128, %v2222, 0.0
    %v2227 = vsel %vm128, %v2223, 0.0
    %v2228 = vadd.f32 %v2226, %v2227
    %v2229 = vsel %vm128, %v2224, 0.0
    %v2230 = vadd.f32 %v2228, %v2229
    %v2231 = vsel %vm128, %v2225, 0.0
    %v2232 = vadd.f32 %v2230, %v2231
    %v2233 = vrot.slane %v2232, 4
    %v2234 = vadd.f32 %v2232, %v2233
    %v2235 = vrot.slane %v2234, 2
    %v2236 = vadd.f32 %v2234, %v2235
    %v2237 = vrot.slane %v2236, 1
    %v2238 = vadd.f32 %v2236, %v2237
    %v2239 = vmul.f32 %v2238, %v197
    %v2240 = vmul.f32 %v2222, %v2222
    %v2241 = vmul.f32 %v2223, %v2223
    %v2242 = vmul.f32 %v2224, %v2224
    %v2243 = vmul.f32 %v2225, %v2225
    %v2244 = vsel %vm128, %v2240, 0.0
    %v2245 = vsel %vm128, %v2241, 0.0
    %v2246 = vadd.f32 %v2244, %v2245
    %v2247 = vsel %vm128, %v2242, 0.0
    %v2248 = vadd.f32 %v2246, %v2247
    %v2249 = vsel %vm128, %v2243, 0.0
    %v2250 = vadd.f32 %v2248, %v2249
    %v2251 = vrot.slane %v2250, 4
    %v2252 = vadd.f32 %v2250, %v2251
    %v2253 = vrot.slane %v2252, 2
    %v2254 = vadd.f32 %v2252, %v2253
    %v2255 = vrot.slane %v2254, 1
    %v2256 = vadd.f32 %v2254, %v2255
    %v2257 = vmul.f32 %v2256, %v197
    %v2258 = vmul.f32 %v2239, %v2239
    %v2259 = vsub.f32 %v2257, %v2258
    %v2260 = vadd.f32 %v2259, 1e-05
    %v2261 = vrsqrt.pop %v2260
    %v2262 = vmul.f32 %v84, %v2261
    %v2264 = vlaneseq
    %v2265 = vshrl.u32 %v2264, 7
    %v2266 = vsub.s32 0, %v2265
    %v2267 = vrot.slane %v2262, %v2266
    %v2269 = vmul.f32 %v2222, %v2267
    %v2270 = vmul.f32 %v2223, %v2267
    %v2271 = vmul.f32 %v2224, %v2267
    %v2272 = vmul.f32 %v2225, %v2267
    %v2273 = vmul.f32 %v2239, %v2262
    %v2274 = vsub.f32 %v85, %v2273
    %v2276 = vlaneseq
    %v2277 = vshrl.u32 %v2276, 7
    %v2278 = vsub.s32 0, %v2277
    %v2279 = vrot.slane %v2274, %v2278
    %v2281 = vadd.f32 %v2269, %v2279
    %v2282 = vadd.f32 %v2270, %v2279
    %v2283 = vadd.f32 %v2271, %v2279
    %v2284 = vadd.f32 %v2272, %v2279
    %v2285 = vsel %vm128, %v2281, 0.0
    %v2286 = vsel %vm128, %v2282, 0.0
    %v2287 = vadd.f32 %v2285, %v2286
    %v2288 = vrot.slane %v2287, 4
    %v2289 = vadd.f32 %v2287, %v2288
    %v2290 = vrot.slane %v2289, 2
    %v2291 = vadd.f32 %v2289, %v2290
    %v2292 = vrot.slane %v2291, 1
    %v2293 = vadd.f32 %v2291, %v2292
    %v2294 = vsel %vm128, %v2283, 0.0
    %v2295 = vsel %vm128, %v2284, 0.0
    %v2296 = vadd.f32 %v2294, %v2295
    %v2297 = vrot.slane %v2296, 4
    %v2298 = vadd.f32 %v2296, %v2297
    %v2299 = vrot.slane %v2298, 2
    %v2300 = vadd.f32 %v2298, %v2299
    %v2301 = vrot.slane %v2300, 1
    %v2302 = vadd.f32 %v2300, %v2301
    %v2303 = vrcp.pop 16.0
    %v2304 = vmul.f32 %v2293, %v2303
    %v2305 = vmul.f32 %v2302, %v2303
    %v2306 = vpack.c.bf16 %v2304, %v2304
    %v2307 = vpack.c.bf16 %v2305, %v2305
    %v2309 = vlaneseq
    %v2310 = vshrl.u32 %v2309, 7
    %v2311 = vsub.s32 0, %v2310
    %v2312 = vrot.slane %v90, %v2311
    %v2316 = vunpack.c.l.b16 %v2306
    %v2317 = vunpack.c.l.b16 %v2307
    %vm2318 = vcmask 1041409
    %v2319 = vsel %vm2318, %v2317, %v2316
    %v2320 = vpack.c.b16 %v2319, %v2319
    %v2325 = vunpack.c.l.b16 %v86
    %v2326 = vunpack.c.l.b16 %v87
    %v2327 = vunpack.c.l.b16 %v88
    %v2328 = vunpack.c.l.b16 %v89
    %v2329 = vpack.c.b16 %v2326, %v2325
    %v2330 = vpack.c.b16 %v2328, %v2327
    %v2334 = vsel %vm128, %v2320, 0
    %2336 = vmatprep.subr.bf16.mxu0 0
    %2337 = vmatpush1.bf16.msra.mxu0 %v2329
    %2338 = vmatprep.subr.bf16.mxu0 0
    %2339 = vmatpush1.bf16.msra.mxu0 %v2330
    %2340 = vmatprep.subr.bf16.mxu0 0
    %2341 = vmatpush1.bf16.msra.mxu0 0
    %2342 = vmatprep.subr.bf16.mxu0 0
    %2343 = vmatpush1.bf16.msra.mxu0 0
    %2344 = vmatprep.subr.bf16.mxu0 0
    %2345 = vmatpush1.bf16.msra.mxu0 0
    %2346 = vmatprep.subr.bf16.mxu0 0
    %2347 = vmatpush1.bf16.msra.mxu0 0
    %2348 = vmatprep.subr.bf16.mxu0 0
    %2349 = vmatpush1.bf16.msra.mxu0 0
    %2350 = vmatprep.subr.bf16.mxu0 0
    %2351 = vmatpush1.bf16.msra.mxu0 0
    %2352 = vmatprep.subr.bf16.mxu0 0
    %2353 = vmatpush1.bf16.msra.mxu0 0
    %2354 = vmatprep.subr.bf16.mxu0 0
    %2355 = vmatpush1.bf16.msra.mxu0 0
    %2356 = vmatprep.subr.bf16.mxu0 0
    %2357 = vmatpush1.bf16.msra.mxu0 0
    %2358 = vmatprep.subr.bf16.mxu0 0
    %2359 = vmatpush1.bf16.msra.mxu0 0
    %2360 = vmatprep.subr.bf16.mxu0 0
    %2361 = vmatpush1.bf16.msra.mxu0 0
    %2362 = vmatprep.subr.bf16.mxu0 0
    %2363 = vmatpush1.bf16.msra.mxu0 0
    %2364 = vmatprep.subr.bf16.mxu0 0
    %2365 = vmatpush1.bf16.msra.mxu0 0
    %2366 = vmatprep.subr.bf16.mxu0 0
    %2367 = vmatpush1.bf16.msra.mxu0 0
    %2368 = vmatprep.mubr.bf16.mxu0 0
    %2369 = vmatmul.mubr.bf16.gmra.mrb[0].mxu0 %v2334
    %v2370 = vpop.f32.mrb[0].mxu0
    %v2371 = vadd.f32 %v2312, %v2370
    %v2372 = vpop.f32.mrb[0].mxu0
    %v2373 = vpop.f32.mrb[0].mxu0
    %v2374 = vpop.f32.mrb[0].mxu0
    %2375 = vdwg.mxu0
    %v2376 = vmax.f32 %v2371, 0.0
    %v2377 = vpack.c.bf16 %v2376, %v2376
    %v2379 = vlaneseq
    %v2380 = vshrl.u32 %v2379, 7
    %v2381 = vsub.s32 0, %v2380
    %v2382 = vrot.slane %v107, %v2381
    %v2400 = vunpack.c.l.b16 %v91
    %v2401 = vunpack.c.l.b16 %v92
    %v2402 = vunpack.c.l.b16 %v93
    %v2403 = vunpack.c.l.b16 %v94
    %v2404 = vunpack.c.l.b16 %v95
    %v2405 = vunpack.c.l.b16 %v96
    %v2406 = vunpack.c.l.b16 %v97
    %v2407 = vunpack.c.l.b16 %v98
    %v2408 = vunpack.c.l.b16 %v99
    %v2409 = vunpack.c.l.b16 %v100
    %v2410 = vunpack.c.l.b16 %v101
    %v2411 = vunpack.c.l.b16 %v102
    %v2412 = vunpack.c.l.b16 %v103
    %v2413 = vunpack.c.l.b16 %v104
    %v2414 = vunpack.c.l.b16 %v105
    %v2415 = vunpack.c.l.b16 %v106
    %v2416 = vpack.c.b16 %v2401, %v2400
    %v2417 = vpack.c.b16 %v2403, %v2402
    %v2418 = vpack.c.b16 %v2405, %v2404
    %v2419 = vpack.c.b16 %v2407, %v2406
    %v2420 = vpack.c.b16 %v2409, %v2408
    %v2421 = vpack.c.b16 %v2411, %v2410
    %v2422 = vpack.c.b16 %v2413, %v2412
    %v2423 = vpack.c.b16 %v2415, %v2414
    %2432 = vmatprep.subr.bf16.mxu0 0
    %2433 = vmatpush1.bf16.msra.mxu0 %v2416
    %2434 = vmatprep.subr.bf16.mxu0 0
    %2435 = vmatpush1.bf16.msra.mxu0 %v2417
    %2436 = vmatprep.subr.bf16.mxu0 0
    %2437 = vmatpush1.bf16.msra.mxu0 %v2418
    %2438 = vmatprep.subr.bf16.mxu0 0
    %2439 = vmatpush1.bf16.msra.mxu0 %v2419
    %2440 = vmatprep.subr.bf16.mxu0 0
    %2441 = vmatpush1.bf16.msra.mxu0 %v2420
    %2442 = vmatprep.subr.bf16.mxu0 0
    %2443 = vmatpush1.bf16.msra.mxu0 %v2421
    %2444 = vmatprep.subr.bf16.mxu0 0
    %2445 = vmatpush1.bf16.msra.mxu0 %v2422
    %2446 = vmatprep.subr.bf16.mxu0 0
    %2447 = vmatpush1.bf16.msra.mxu0 %v2423
    %2448 = vmatprep.subr.bf16.mxu0 0
    %2449 = vmatpush1.bf16.msra.mxu0 0
    %2450 = vmatprep.subr.bf16.mxu0 0
    %2451 = vmatpush1.bf16.msra.mxu0 0
    %2452 = vmatprep.subr.bf16.mxu0 0
    %2453 = vmatpush1.bf16.msra.mxu0 0
    %2454 = vmatprep.subr.bf16.mxu0 0
    %2455 = vmatpush1.bf16.msra.mxu0 0
    %2456 = vmatprep.subr.bf16.mxu0 0
    %2457 = vmatpush1.bf16.msra.mxu0 0
    %2458 = vmatprep.subr.bf16.mxu0 0
    %2459 = vmatpush1.bf16.msra.mxu0 0
    %2460 = vmatprep.subr.bf16.mxu0 0
    %2461 = vmatpush1.bf16.msra.mxu0 0
    %2462 = vmatprep.subr.bf16.mxu0 0
    %2463 = vmatpush1.bf16.msra.mxu0 0
    %2464 = vmatprep.mubr.bf16.mxu0 0
    %2465 = vmatmul.mubr.bf16.gmra.mrb[0].mxu0 %v2377
    %v2466 = vpop.f32.mrb[0].mxu0
    %v2467 = vadd.f32 %v2382, %v2466
    %v2468 = vpop.f32.mrb[0].mxu0
    %v2469 = vpop.f32.mrb[0].mxu0
    %v2470 = vpop.f32.mrb[0].mxu0
    %2471 = vdwg.mxu0
    %v2472 = vxor.u32 %v2467, 2147483648
    %v2473 = vmul.f32 %v2472, 1.442695
    %v2474 = vpow.pop %v2473
    %v2475 = vadd.f32 %v2474, 1.0
    %v2476 = vrcp.pop %v2475
    %v2477 = vmul.f32 1.0, %v2476
    %v2480 = vunpack.c.l.s4 1966171168
    %v2481 = vunpack.c.0.s8 %v2480
    %v2482 = vlaneseq
    %v2483 = vshrl.u32 %v2482, 7
    %v2484 = vsub.s32 %v2481, %v2483
    %v2485 = vrot.slane %v2477, %v2484
    %v2486 = vcombine.high %v2485, %v2485
    %v2488 = vunpack.c.l.s4 1966171168
    %v2489 = vunpack.c.0.s8 %v2488
    %v2490 = vlaneseq
    %v2491 = vshrl.u32 %v2490, 7
    %v2492 = vsub.s32 %v2489, %v2491
    %v2493 = vrot.slane %v2485, %v2492
    %v2495 = vunpack.c.l.s4 1966171168
    %v2496 = vunpack.c.0.s8 %v2495
    %v2497 = vlaneseq
    %v2498 = vshrl.u32 %v2497, 7
    %v2499 = vsub.s32 %v2496, %v2498
    %v2500 = vrot.slane %v2486, %v2499
    %v2501 = vlaneseq
    %v2502 = vshrl.u32 %v2501, 7
    %v2503 = vsub.s32 0, %v2502
    %v2504 = vrot.slane %v2493, %v2503
    %v2505 = vlaneseq
    %v2506 = vshrl.u32 %v2505, 7
    %v2507 = vsub.s32 0, %v2506
    %v2508 = vrot.slane %v2500, %v2507
    %v2511 = vmul.f32 %v2281, %v2504
    %v2512 = vmul.f32 %v2282, %v2504
    %v2513 = vmul.f32 %v2283, %v2508
    %v2514 = vmul.f32 %v2284, %v2508
    %v2515 = vadd.f32 %v2511, %v58
    %v2516 = vadd.f32 %v2512, %v59
    %v2517 = vadd.f32 %v2513, %v60
    %v2518 = vadd.f32 %v2514, %v61
    %2519 = vst.msk [vmem:[#allocation2] sm:$0xff] %vm128, %v2515
    %2520 = vst.msk [vmem:[#allocation2 + $0x8] sm:$0xff] %vm128, %v2516
    %2521 = vst.msk [vmem:[#allocation2 + $0x10] sm:$0xff] %vm128, %v2517
    %2522 = vst.msk [vmem:[#allocation2 + $0x18] sm:$0xff] %vm128, %v2518
    // Predicated region
    $region70: #{tpu_custom_call.1} parent=1 // pred_check
      _
    $region71: #{tpu_custom_call.1} parent=1 // pred_check_branch
      %2524 = sbr.rel (0) target = $region73
    $region72: #{tpu_custom_call.1} parent=1 // pred_region
      %s2526 = ssub.s32 512, 512
      %2527 = vsyncadd [#allocation3], %s2526
      %s2528 = sshll.u32 [#allocation2], 4
      %s2529 = int_to_ptr.vmem [resolvable:$true] %s2528
      %2534 = dma.vmem_to_hbm [thread:$0]  %s2529, 512, %s17, [#allocation3], 128, 128, 8
    $region73: #{tpu_custom_call.1} parent=1 // pred_fallthru
      _
    // Predicated region
    $region74: #{tpu_custom_call.1} parent=1 // pred_check
      _
    $region75: #{tpu_custom_call.1} parent=1 // pred_check_branch
      %2536 = sbr.rel (0) target = $region77
    $region76: #{tpu_custom_call.1} parent=1 // pred_region
      %2537 = dma.done [#allocation3], 512
    $region77: #{tpu_custom_call.1} parent=1 // pred_fallthru
      _
    %2538 = vsyncpa [#allocation3], 1

</llo_original>
